<compile_context>
chip_gen: v6e
topology: v6e:2x2x1
jax: 0.10.0
libtpu: 0.0.40
codegen_flags: <defaults>
</compile_context>

<pallas_src>
import math

import jax
import jax.numpy as jnp
from jax.experimental import pallas as pl
from jax.experimental.pallas import tpu as pltpu

# ---- small problem sizes consistent with the module ----
B, T, S, D, H, DFF = 2, 8, 8, 32, 4, 64
DK = D // H
N = B * T          # flattened target rows
M = B * S          # flattened source rows
EPS = 1e-6
NEG = -1e9
SCALE = 1.0 / math.sqrt(DK)


# ---------------- in-kernel helpers (traced inside the Pallas body) ----------------
def _layernorm(x, alpha, bias):
    # matches LayerNormalization: unbiased std (ddof=1), eps added to std;
    # alpha/bias are SMEM scalars (VPU splat).
    mean = jnp.mean(x, axis=-1, keepdims=True)
    var = jnp.sum((x - mean) ** 2, axis=-1, keepdims=True) * (1.0 / (D - 1))
    inv = pl.reciprocal(jnp.sqrt(var) + EPS)          # exact reciprocal (EUP)
    return alpha * (x - mean) * inv + bias


def _split_heads(x2d):
    # (L, D) -> (H, L, DK) via H static lane slices + stack (no broadcast, no
    # 3-D transpose); only used to feed the head-batched score/PV einsums.
    return jnp.stack([x2d[:, h * DK:(h + 1) * DK] for h in range(H)], axis=0)


def _mha(q, k, v, wo, bias):
    # q: (N, D); k, v: (M, D); wo: (D, D) full output projection; bias: (N, M)
    qh = _split_heads(q)
    kh = _split_heads(k)
    vh = _split_heads(v)
    s = jnp.einsum('hqd,hkd->hqk', qh, kh,
                   preferred_element_type=jnp.float32) * SCALE
    s = s + bias[None, :, :]                       # additive mask bias, built once
    s = s - jnp.max(s, axis=-1, keepdims=True)
    p = jnp.exp(s)
    p = p * pl.reciprocal(jnp.sum(p, axis=-1, keepdims=True), approx=True)
    ctx = jnp.einsum('hqk,hkd->hqd', p, vh, preferred_element_type=jnp.float32)
    # head-concat back to (N, D), then ONE lane-dense matmul with the full W_o
    # (replaces 4 tiny per-head matmuls + a cross-sublane sum).
    ctx2 = jnp.concatenate([ctx[h] for h in range(H)], axis=-1)   # (N, D)
    return jnp.dot(ctx2, wo, preferred_element_type=jnp.float32)


# ---------------- Pallas kernel: whole decoder block, one invocation ----------------
def decoder_block_kernel(x_ref, enc_ref, tb_ref, sb_ref,
                         wqkv_ref, bqkv_ref, wcq_ref, bcq_ref,
                         wckv_ref, bckv_ref, wout_ref, bout_ref,
                         wff1_ref, bff1_ref, ln_ref, o_ref):
    x = x_ref[...]            # (N, D) = (B*T, D)
    enc = enc_ref[...]        # (M, D) = (B*S, D)
    wout = wout_ref[...]      # (2D+DFF, D): rows [W_o_self | W_o_cross | W2^T]
    bout = bout_ref[...]      # (3, D):      rows [b_o_self | b_o_cross | b2]

    # residual 1: self-attention (pre-norm), fused QKV projection
    xn = _layernorm(x, ln_ref[0], ln_ref[1])
    qkv = jnp.dot(xn, wqkv_ref[...],
                  preferred_element_type=jnp.float32) + bqkv_ref[0]      # (N, 3D)
    sa = _mha(qkv[:, 0:D], qkv[:, D:2 * D], qkv[:, 2 * D:3 * D],
              wout[0:D], tb_ref[...])
    x = x + sa + bout[0]

    # residual 2: cross-attention (pre-norm); K/V projection fused
    xn = _layernorm(x, ln_ref[2], ln_ref[3])
    qc = jnp.dot(xn, wcq_ref[...],
                 preferred_element_type=jnp.float32) + bcq_ref[0]        # (N, D)
    kv = jnp.dot(enc, wckv_ref[...],
                 preferred_element_type=jnp.float32) + bckv_ref[0]       # (M, 2D)
    ca = _mha(qc, kv[:, 0:D], kv[:, D:2 * D], wout[D:2 * D], sb_ref[...])
    x = x + ca + bout[1]

    # residual 3: feed-forward (pre-norm); dropout = identity in eval
    xn = _layernorm(x, ln_ref[4], ln_ref[5])
    h1 = jnp.maximum(
        jnp.dot(xn, wff1_ref[...], preferred_element_type=jnp.float32) + bff1_ref[0],
        0.0)
    ff = jnp.dot(h1, wout[2 * D:2 * D + DFF],
                 preferred_element_type=jnp.float32) + bout[2]
    x = x + ff

    o_ref[...] = x.astype(o_ref.dtype)


# ---------------- wrapper-side packing (pure JAX, hoisted out of per-call path) ----
def _mask_biases(tgt_mask, src_mask):
    # Convert int masks into additive f32 biases with block-diagonal structure
    # so attention over the batch-flattened axis never mixes batches.
    tblk = jnp.where(tgt_mask[:, 0] == 0, NEG, 0.0).astype(jnp.float32)     # (B, T, T)
    sblk = jnp.where(src_mask[:, 0, 0] == 0, NEG, 0.0).astype(jnp.float32)  # (B, S)
    eye = jnp.eye(B, dtype=jnp.float32)[:, None, :, None]                   # (B, 1, B, 1)
    off = (1.0 - eye) * NEG
    tgt_bias = (eye * tblk[:, :, None, :] + off).reshape(N, N)
    src_bias = jnp.broadcast_to(eye * sblk[:, None, None, :] + off,
                                (B, T, B, S)).reshape(N, M)
    return tgt_bias, src_bias


def pack_inputs(params, tgt_mask, src_mask):
    """Pack weights into lane-dense slabs + SMEM scalars. Call ONCE and reuse."""
    sw, sb, cw, cb, w1, b1, w2, b2, ln = params
    w_self_qkv = jnp.concatenate([sw[0].T, sw[1].T, sw[2].T], axis=1)   # (D, 3D)
    b_self_qkv = jnp.concatenate([sb[0], sb[1], sb[2]])[None, :]        # (1, 3D)
    w_cross_q = cw[0].T                                                 # (D, D)
    b_cross_q = cb[0][None, :]                                          # (1, D)
    w_cross_kv = jnp.concatenate([cw[1].T, cw[2].T], axis=1)            # (D, 2D)
    b_cross_kv = jnp.concatenate([cb[1], cb[2]])[None, :]               # (1, 2D)
    # output-side weights stacked along the sublane axis (row slices are cheap)
    w_out = jnp.concatenate([sw[3].T, cw[3].T, w2.T], axis=0)           # (2D+DFF, D)
    b_out = jnp.stack([sb[3], cb[3], b2[0]])                            # (3, D)
    w_ffn1 = w1.T                                                       # (D, DFF)
    b_ffn1 = b1                                                         # (1, DFF)
    ln_flat = ln.reshape(-1).astype(jnp.float32)                        # (6,) SMEM scalars
    tgt_bias, src_bias = _mask_biases(tgt_mask, src_mask)
    return (tgt_bias, src_bias, w_self_qkv, b_self_qkv, w_cross_q, b_cross_q,
            w_cross_kv, b_cross_kv, w_out, b_out, w_ffn1, b_ffn1, ln_flat)


def decoder_block(x, enc, packed):
    (tgt_bias, src_bias, w_self_qkv, b_self_qkv, w_cross_q, b_cross_q,
     w_cross_kv, b_cross_kv, w_out, b_out, w_ffn1, b_ffn1, ln_flat) = packed

    x2 = x.reshape(N, D)
    enc2 = enc.reshape(M, D)

    vmem_inputs = (x2, enc2, tgt_bias, src_bias,
                   w_self_qkv, b_self_qkv, w_cross_q, b_cross_q,
                   w_cross_kv, b_cross_kv, w_out, b_out, w_ffn1, b_ffn1)

    full = lambda a: pl.BlockSpec(a.shape, lambda i: (0,) * a.ndim)
    in_specs = [full(a) for a in vmem_inputs] + [
        pl.BlockSpec(memory_space=pltpu.MemorySpace.SMEM)]   # LN scalars in SMEM

    out = pl.pallas_call(
        decoder_block_kernel,
        out_shape=jax.ShapeDtypeStruct((N, D), jnp.float32),
        grid_spec=pltpu.PrefetchScalarGridSpec(
            num_scalar_prefetch=0,
            grid=(1,),                                   # single step at toy size
            in_specs=in_specs,
            out_specs=pl.BlockSpec((N, D), lambda i: (0, 0)),
        ),
        compiler_params=pltpu.CompilerParams(
            dimension_semantics=("arbitrary",)),         # one step -> no megacore split
    )(*vmem_inputs, ln_flat)
    return out.reshape(B, T, D)


# ---------------- plain-JAX reference (mirrors the PyTorch forward) ----------------
def reference(x, enc, tgt_mask, src_mask, params):
    sw, sb, cw, cb, w1, b1, w2, b2, ln = params

    def ln_fn(x, a, b):
        mean = x.mean(-1, keepdims=True)
        std = jnp.sqrt(((x - mean) ** 2).sum(-1, keepdims=True) / (x.shape[-1] - 1))
        return a * (x - mean) / (std + EPS) + b

    def mha(q_in, kv_in, w, b, mask):
        q = q_in @ w[0].T + b[0]
        k = kv_in @ w[1].T + b[1]
        v = kv_in @ w[2].T + b[2]
        Bn, Tq, _ = q.shape
        Tk = k.shape[1]
        qh = q.reshape(Bn, Tq, H, DK).transpose(0, 2, 1, 3)
        kh = k.reshape(Bn, Tk, H, DK).transpose(0, 2, 1, 3)
        vh = v.reshape(Bn, Tk, H, DK).transpose(0, 2, 1, 3)
        s = qh @ kh.transpose(0, 1, 3, 2) / math.sqrt(DK)
        s = jnp.where(mask == 0, NEG, s)
        p = jax.nn.softmax(s, axis=-1)
        o = (p @ vh).transpose(0, 2, 1, 3).reshape(Bn, Tq, D)
        return o @ w[3].T + b[3]

    x = x + mha(ln_fn(x, ln[0, 0], ln[0, 1]), ln_fn(x, ln[0, 0], ln[0, 1]), sw, sb, tgt_mask)
    x = x + mha(ln_fn(x, ln[1, 0], ln[1, 1]), enc, cw, cb, src_mask)
    xn = ln_fn(x, ln[2, 0], ln[2, 1])
    x = x + (jnp.maximum(xn @ w1.T + b1[0], 0.0) @ w2.T + b2[0])
    return x


if __name__ == "__main__":
    key = jax.random.PRNGKey(0)
    ks = jax.random.split(key, 16)

    x = jax.random.normal(ks[0], (B, T, D), jnp.float32)
    enc = jax.random.normal(ks[1], (B, S, D), jnp.float32)

    # causal target mask; source mask hides the last 2 positions for batch 1
    tgt_mask = jnp.broadcast_to(jnp.tril(jnp.ones((T, T), jnp.int32)), (B, 1, T, T))
    src_mask = jnp.ones((B, 1, 1, S), jnp.int32).at[1, :, :, S - 2:].set(0)

    scale = 0.05
    sw = scale * jax.random.normal(ks[2], (4, D, D), jnp.float32)   # self-attn q,k,v,o
    sb = scale * jax.random.normal(ks[3], (4, D), jnp.float32)
    cw = scale * jax.random.normal(ks[4], (4, D, D), jnp.float32)   # cross-attn q,k,v,o
    cb = scale * jax.random.normal(ks[5], (4, D), jnp.float32)
    w1 = scale * jax.random.normal(ks[6], (DFF, D), jnp.float32)    # linear_1 (out, in)
    b1 = scale * jax.random.normal(ks[7], (1, DFF), jnp.float32)
    w2 = scale * jax.random.normal(ks[8], (D, DFF), jnp.float32)    # linear_2 (out, in)
    b2 = scale * jax.random.normal(ks[9], (1, D), jnp.float32)
    # LayerNormalization params per residual connection: [alpha, bias]
    ln = jnp.array([[1.10, 0.05], [0.90, -0.03], [1.05, 0.02]], jnp.float32)

    params = (sw, sb, cw, cb, w1, b1, w2, b2, ln)

    # Pack weights / mask biases ONCE (hoisted out of the per-call path).
    packed = jax.block_until_ready(pack_inputs(params, tgt_mask, src_mask))

    out = jax.block_until_ready(decoder_block(x, enc, packed))
    ref = reference(x, enc, tgt_mask, src_mask, params)

    assert out.shape == (B, T, D)
    # tolerance loosened deliberately: approx reciprocal in the softmax denom
    # trades low-order bits; error stays well below 2e-3.
    assert jnp.allclose(out, ref, atol=2e-3, rtol=2e-3), "mismatch vs reference"

    # TODO(synk): dropout is treated as identity (eval mode); stochastic dropout
    # would use pltpu.prng_seed/prng_random_bits if training semantics are needed.
    print("KERNEL_OK")
</pallas_src>

<mosaic_0001>
module attributes {stable_mosaic.version = 11 : i64} {
  func.func @decoder_block_kernel(%arg0: i32, %arg1: memref<16x32xf32, #tpu.memory_space<vmem>>, %arg2: memref<16x32xf32, #tpu.memory_space<vmem>>, %arg3: memref<16x16xf32, #tpu.memory_space<vmem>>, %arg4: memref<16x16xf32, #tpu.memory_space<vmem>>, %arg5: memref<32x96xf32, #tpu.memory_space<vmem>>, %arg6: memref<1x96xf32, #tpu.memory_space<vmem>>, %arg7: memref<32x32xf32, #tpu.memory_space<vmem>>, %arg8: memref<1x32xf32, #tpu.memory_space<vmem>>, %arg9: memref<32x64xf32, #tpu.memory_space<vmem>>, %arg10: memref<1x64xf32, #tpu.memory_space<vmem>>, %arg11: memref<128x32xf32, #tpu.memory_space<vmem>>, %arg12: memref<3x32xf32, #tpu.memory_space<vmem>>, %arg13: memref<32x64xf32, #tpu.memory_space<vmem>>, %arg14: memref<1x64xf32, #tpu.memory_space<vmem>>, %arg15: memref<6xf32, #tpu.memory_space<smem>>, %arg16: memref<16x32xf32, #tpu.memory_space<vmem>>) attributes {dimension_semantics = [#tpu.dimension_semantics<arbitrary>], iteration_bounds = array<i64: 1>, scalar_prefetch = 0 : i64, scratch_operands = 0 : i64, tpu.core_type = #tpu.core_type<tc>, window_params = [{pipeline_mode = #tpu.pipeline_mode<synchronous>, transform_indices = @transform_0, window_bounds = array<i64: 16, 32>}, {pipeline_mode = #tpu.pipeline_mode<synchronous>, transform_indices = @transform_1, window_bounds = array<i64: 16, 32>}, {pipeline_mode = #tpu.pipeline_mode<synchronous>, transform_indices = @transform_2, window_bounds = array<i64: 16, 16>}, {pipeline_mode = #tpu.pipeline_mode<synchronous>, transform_indices = @transform_3, window_bounds = array<i64: 16, 16>}, {pipeline_mode = #tpu.pipeline_mode<synchronous>, transform_indices = @transform_4, window_bounds = array<i64: 32, 96>}, {pipeline_mode = #tpu.pipeline_mode<synchronous>, transform_indices = @transform_5, window_bounds = array<i64: 1, 96>}, {pipeline_mode = #tpu.pipeline_mode<synchronous>, transform_indices = @transform_6, window_bounds = array<i64: 32, 32>}, {pipeline_mode = #tpu.pipeline_mode<synchronous>, transform_indices = @transform_7, window_bounds = array<i64: 1, 32>}, {pipeline_mode = #tpu.pipeline_mode<synchronous>, transform_indices = @transform_8, window_bounds = array<i64: 32, 64>}, {pipeline_mode = #tpu.pipeline_mode<synchronous>, transform_indices = @transform_9, window_bounds = array<i64: 1, 64>}, {pipeline_mode = #tpu.pipeline_mode<synchronous>, transform_indices = @transform_10, window_bounds = array<i64: 128, 32>}, {pipeline_mode = #tpu.pipeline_mode<synchronous>, transform_indices = @transform_11, window_bounds = array<i64: 3, 32>}, {pipeline_mode = #tpu.pipeline_mode<synchronous>, transform_indices = @transform_12, window_bounds = array<i64: 32, 64>}, {pipeline_mode = #tpu.pipeline_mode<synchronous>, transform_indices = @transform_13, window_bounds = array<i64: 1, 64>}, {transform_indices = @transform_14, window_bounds = array<i64: 6>}, {pipeline_mode = #tpu.pipeline_mode<synchronous>, transform_indices = @transform_15, window_bounds = array<i64: 16, 32>}]} {
    %c0 = arith.constant 0 : index
    %c0_0 = arith.constant 0 : index
    %0 = vector.load %arg1[%c0, %c0_0] : memref<16x32xf32, #tpu.memory_space<vmem>>, vector<16x32xf32>
    %c0_1 = arith.constant 0 : index
    %c0_2 = arith.constant 0 : index
    %1 = vector.load %arg2[%c0_1, %c0_2] : memref<16x32xf32, #tpu.memory_space<vmem>>, vector<16x32xf32>
    %c0_3 = arith.constant 0 : index
    %c0_4 = arith.constant 0 : index
    %2 = vector.load %arg11[%c0_3, %c0_4] : memref<128x32xf32, #tpu.memory_space<vmem>>, vector<128x32xf32>
    %c0_5 = arith.constant 0 : index
    %c0_6 = arith.constant 0 : index
    %3 = vector.load %arg12[%c0_5, %c0_6] : memref<3x32xf32, #tpu.memory_space<vmem>>, vector<3x32xf32>
    %c0_7 = arith.constant 0 : index
    %4 = memref.load %arg15[%c0_7] : memref<6xf32, #tpu.memory_space<smem>>
    %c1 = arith.constant 1 : index
    %5 = memref.load %arg15[%c1] : memref<6xf32, #tpu.memory_space<smem>>
    %cst = arith.constant dense<0.000000e+00> : vector<16xf32>
    %6 = vector.multi_reduction <add>, %0, %cst [1] : vector<16x32xf32> to vector<16xf32>
    %7 = vector.shape_cast %6 : vector<16xf32> to vector<16x1xf32>
    %cst_8 = arith.constant 3.200000e+01 : f32
    %8 = vector.broadcast %cst_8 : f32 to vector<16x1xf32>
    %9 = arith.divf %7, %8 : vector<16x1xf32>
    %10 = vector.broadcast %9 : vector<16x1xf32> to vector<16x32xf32>
    %11 = arith.subf %0, %10 : vector<16x32xf32>
    %12 = arith.mulf %11, %11 : vector<16x32xf32>
    %cst_9 = arith.constant dense<0.000000e+00> : vector<16xf32>
    %13 = vector.multi_reduction <add>, %12, %cst_9 [1] : vector<16x32xf32> to vector<16xf32>
    %14 = vector.shape_cast %13 : vector<16xf32> to vector<16x1xf32>
    %cst_10 = arith.constant 0.0322580636 : f32
    %15 = vector.broadcast %cst_10 : f32 to vector<16x1xf32>
    %16 = arith.mulf %14, %15 : vector<16x1xf32>
    %17 = math.sqrt %16 : vector<16x1xf32>
    %cst_11 = arith.constant 9.99999997E-7 : f32
    %18 = vector.broadcast %cst_11 : f32 to vector<16x1xf32>
    %19 = arith.addf %17, %18 : vector<16x1xf32>
    %20 = tpu.reciprocal %19 : vector<16x1xf32> -> vector<16x1xf32>
    %21 = vector.broadcast %9 : vector<16x1xf32> to vector<16x32xf32>
    %22 = arith.subf %0, %21 : vector<16x32xf32>
    %23 = vector.broadcast %4 : f32 to vector<16x32xf32>
    %24 = arith.mulf %23, %22 : vector<16x32xf32>
    %25 = vector.broadcast %20 : vector<16x1xf32> to vector<16x32xf32>
    %26 = arith.mulf %24, %25 : vector<16x32xf32>
    %27 = vector.broadcast %5 : f32 to vector<16x32xf32>
    %28 = arith.addf %26, %27 : vector<16x32xf32>
    %c0_12 = arith.constant 0 : index
    %c0_13 = arith.constant 0 : index
    %29 = vector.load %arg5[%c0_12, %c0_13] : memref<32x96xf32, #tpu.memory_space<vmem>>, vector<32x96xf32>
    %cst_14 = arith.constant dense<0.000000e+00> : vector<16x96xf32>
    %30 = tpu.matmul %28, %29, %cst_14 {dimension_numbers = #tpu.dot_dimension_numbers<[1], [0], [0], [1], [0, 0, 1, 1], [], []>} : vector<16x32xf32>, vector<32x96xf32>, vector<16x96xf32> -> vector<16x96xf32>
    %c0_15 = arith.constant 0 : index
    %c0_16 = arith.constant 0 : index
    %31 = vector.load %arg6[%c0_15, %c0_16] : memref<1x96xf32, #tpu.memory_space<vmem>>, vector<1x96xf32>
    %32 = vector.shape_cast %31 : vector<1x96xf32> to vector<96xf32>
    %33 = vector.shape_cast %32 : vector<96xf32> to vector<1x96xf32>
    %34 = vector.broadcast %33 : vector<1x96xf32> to vector<16x96xf32>
    %35 = arith.addf %30, %34 : vector<16x96xf32>
    %36 = vector.extract_strided_slice %35 {offsets = [0, 0], sizes = [16, 32], strides = [1, 1]} : vector<16x96xf32> to vector<16x32xf32>
    %37 = vector.extract_strided_slice %35 {offsets = [0, 32], sizes = [16, 32], strides = [1, 1]} : vector<16x96xf32> to vector<16x32xf32>
    %38 = vector.extract_strided_slice %35 {offsets = [0, 64], sizes = [16, 32], strides = [1, 1]} : vector<16x96xf32> to vector<16x32xf32>
    %39 = vector.extract_strided_slice %2 {offsets = [0, 0], sizes = [32, 32], strides = [1, 1]} : vector<128x32xf32> to vector<32x32xf32>
    %c0_17 = arith.constant 0 : index
    %c0_18 = arith.constant 0 : index
    %40 = vector.load %arg3[%c0_17, %c0_18] : memref<16x16xf32, #tpu.memory_space<vmem>>, vector<16x16xf32>
    %41 = vector.extract_strided_slice %36 {offsets = [0, 0], sizes = [16, 8], strides = [1, 1]} : vector<16x32xf32> to vector<16x8xf32>
    %42 = vector.extract_strided_slice %36 {offsets = [0, 8], sizes = [16, 8], strides = [1, 1]} : vector<16x32xf32> to vector<16x8xf32>
    %43 = vector.extract_strided_slice %36 {offsets = [0, 16], sizes = [16, 8], strides = [1, 1]} : vector<16x32xf32> to vector<16x8xf32>
    %44 = vector.extract_strided_slice %36 {offsets = [0, 24], sizes = [16, 8], strides = [1, 1]} : vector<16x32xf32> to vector<16x8xf32>
    %45 = vector.shape_cast %41 : vector<16x8xf32> to vector<1x16x8xf32>
    %46 = vector.shape_cast %42 : vector<16x8xf32> to vector<1x16x8xf32>
    %47 = vector.shape_cast %43 : vector<16x8xf32> to vector<1x16x8xf32>
    %48 = vector.shape_cast %44 : vector<16x8xf32> to vector<1x16x8xf32>
    %49 = tpu.concatenate %45, %46, %47, %48 in 0 : vector<1x16x8xf32>, vector<1x16x8xf32>, vector<1x16x8xf32>, vector<1x16x8xf32> -> vector<4x16x8xf32>
    %50 = vector.extract_strided_slice %37 {offsets = [0, 0], sizes = [16, 8], strides = [1, 1]} : vector<16x32xf32> to vector<16x8xf32>
    %51 = vector.extract_strided_slice %37 {offsets = [0, 8], sizes = [16, 8], strides = [1, 1]} : vector<16x32xf32> to vector<16x8xf32>
    %52 = vector.extract_strided_slice %37 {offsets = [0, 16], sizes = [16, 8], strides = [1, 1]} : vector<16x32xf32> to vector<16x8xf32>
    %53 = vector.extract_strided_slice %37 {offsets = [0, 24], sizes = [16, 8], strides = [1, 1]} : vector<16x32xf32> to vector<16x8xf32>
    %54 = vector.shape_cast %50 : vector<16x8xf32> to vector<1x16x8xf32>
    %55 = vector.shape_cast %51 : vector<16x8xf32> to vector<1x16x8xf32>
    %56 = vector.shape_cast %52 : vector<16x8xf32> to vector<1x16x8xf32>
    %57 = vector.shape_cast %53 : vector<16x8xf32> to vector<1x16x8xf32>
    %58 = tpu.concatenate %54, %55, %56, %57 in 0 : vector<1x16x8xf32>, vector<1x16x8xf32>, vector<1x16x8xf32>, vector<1x16x8xf32> -> vector<4x16x8xf32>
    %59 = vector.extract_strided_slice %38 {offsets = [0, 0], sizes = [16, 8], strides = [1, 1]} : vector<16x32xf32> to vector<16x8xf32>
    %60 = vector.extract_strided_slice %38 {offsets = [0, 8], sizes = [16, 8], strides = [1, 1]} : vector<16x32xf32> to vector<16x8xf32>
    %61 = vector.extract_strided_slice %38 {offsets = [0, 16], sizes = [16, 8], strides = [1, 1]} : vector<16x32xf32> to vector<16x8xf32>
    %62 = vector.extract_strided_slice %38 {offsets = [0, 24], sizes = [16, 8], strides = [1, 1]} : vector<16x32xf32> to vector<16x8xf32>
    %63 = vector.shape_cast %59 : vector<16x8xf32> to vector<1x16x8xf32>
    %64 = vector.shape_cast %60 : vector<16x8xf32> to vector<1x16x8xf32>
    %65 = vector.shape_cast %61 : vector<16x8xf32> to vector<1x16x8xf32>
    %66 = vector.shape_cast %62 : vector<16x8xf32> to vector<1x16x8xf32>
    %67 = tpu.concatenate %63, %64, %65, %66 in 0 : vector<1x16x8xf32>, vector<1x16x8xf32>, vector<1x16x8xf32>, vector<1x16x8xf32> -> vector<4x16x8xf32>
    "tpu.trace_start"() <{level = 10 : i32, message = "hqd,hkd->hqk"}> : () -> ()
    %cst_19 = arith.constant dense<0.000000e+00> : vector<4x16x16xf32>
    %68 = tpu.matmul %49, %58, %cst_19 {dimension_numbers = #tpu.dot_dimension_numbers<[2], [2], [1], [1], [0, 0, 0, 1, 1, 1], [0], [0]>} : vector<4x16x8xf32>, vector<4x16x8xf32>, vector<4x16x16xf32> -> vector<4x16x16xf32>
    "tpu.trace_stop"() : () -> ()
    %cst_20 = arith.constant 0.353553385 : f32
    %69 = vector.broadcast %cst_20 : f32 to vector<4x16x16xf32>
    %70 = arith.mulf %68, %69 : vector<4x16x16xf32>
    %71 = vector.shape_cast %40 : vector<16x16xf32> to vector<1x16x16xf32>
    %72 = vector.broadcast %71 : vector<1x16x16xf32> to vector<4x16x16xf32>
    %73 = arith.addf %70, %72 : vector<4x16x16xf32>
    %cst_21 = arith.constant dense<0xFF800000> : vector<4x16xf32>
    %74 = vector.multi_reduction <maximumf>, %73, %cst_21 [2] : vector<4x16x16xf32> to vector<4x16xf32>
    %75 = vector.shape_cast %74 : vector<4x16xf32> to vector<4x16x1xf32>
    %76 = vector.broadcast %75 : vector<4x16x1xf32> to vector<4x16x16xf32>
    %77 = arith.subf %73, %76 : vector<4x16x16xf32>
    %78 = math.exp %77 : vector<4x16x16xf32>
    %cst_22 = arith.constant dense<0.000000e+00> : vector<4x16xf32>
    %79 = vector.multi_reduction <add>, %78, %cst_22 [2] : vector<4x16x16xf32> to vector<4x16xf32>
    %80 = vector.shape_cast %79 : vector<4x16xf32> to vector<4x16x1xf32>
    %81 = tpu.reciprocal %80 {approx = true} : vector<4x16x1xf32> -> vector<4x16x1xf32>
    %82 = vector.broadcast %81 : vector<4x16x1xf32> to vector<4x16x16xf32>
    %83 = arith.mulf %78, %82 : vector<4x16x16xf32>
    "tpu.trace_start"() <{level = 10 : i32, message = "hqk,hkd->hqd"}> : () -> ()
    %cst_23 = arith.constant dense<0.000000e+00> : vector<4x16x8xf32>
    %84 = tpu.matmul %83, %67, %cst_23 {dimension_numbers = #tpu.dot_dimension_numbers<[2], [1], [1], [2], [0, 0, 0, 1, 1, 2], [0], [0]>} : vector<4x16x16xf32>, vector<4x16x8xf32>, vector<4x16x8xf32> -> vector<4x16x8xf32>
    "tpu.trace_stop"() : () -> ()
    %85 = vector.extract_strided_slice %84 {offsets = [0, 0, 0], sizes = [1, 16, 8], strides = [1, 1, 1]} : vector<4x16x8xf32> to vector<1x16x8xf32>
    %86 = vector.shape_cast %85 : vector<1x16x8xf32> to vector<16x8xf32>
    %87 = vector.extract_strided_slice %84 {offsets = [1, 0, 0], sizes = [1, 16, 8], strides = [1, 1, 1]} : vector<4x16x8xf32> to vector<1x16x8xf32>
    %88 = vector.shape_cast %87 : vector<1x16x8xf32> to vector<16x8xf32>
    %89 = vector.extract_strided_slice %84 {offsets = [2, 0, 0], sizes = [1, 16, 8], strides = [1, 1, 1]} : vector<4x16x8xf32> to vector<1x16x8xf32>
    %90 = vector.shape_cast %89 : vector<1x16x8xf32> to vector<16x8xf32>
    %91 = vector.extract_strided_slice %84 {offsets = [3, 0, 0], sizes = [1, 16, 8], strides = [1, 1, 1]} : vector<4x16x8xf32> to vector<1x16x8xf32>
    %92 = vector.shape_cast %91 : vector<1x16x8xf32> to vector<16x8xf32>
    %93 = tpu.concatenate %86, %88, %90, %92 in 1 : vector<16x8xf32>, vector<16x8xf32>, vector<16x8xf32>, vector<16x8xf32> -> vector<16x32xf32>
    %cst_24 = arith.constant dense<0.000000e+00> : vector<16x32xf32>
    %94 = tpu.matmul %93, %39, %cst_24 {dimension_numbers = #tpu.dot_dimension_numbers<[1], [0], [0], [1], [0, 0, 1, 1], [], []>} : vector<16x32xf32>, vector<32x32xf32>, vector<16x32xf32> -> vector<16x32xf32>
    %95 = arith.addf %0, %94 : vector<16x32xf32>
    %96 = vector.extract_strided_slice %3 {offsets = [0, 0], sizes = [1, 32], strides = [1, 1]} : vector<3x32xf32> to vector<1x32xf32>
    %97 = vector.shape_cast %96 : vector<1x32xf32> to vector<32xf32>
    %98 = vector.shape_cast %97 : vector<32xf32> to vector<1x32xf32>
    %99 = vector.broadcast %98 : vector<1x32xf32> to vector<16x32xf32>
    %100 = arith.addf %95, %99 : vector<16x32xf32>
    %c2 = arith.constant 2 : index
    %101 = memref.load %arg15[%c2] : memref<6xf32, #tpu.memory_space<smem>>
    %c3 = arith.constant 3 : index
    %102 = memref.load %arg15[%c3] : memref<6xf32, #tpu.memory_space<smem>>
    %cst_25 = arith.constant dense<0.000000e+00> : vector<16xf32>
    %103 = vector.multi_reduction <add>, %100, %cst_25 [1] : vector<16x32xf32> to vector<16xf32>
    %104 = vector.shape_cast %103 : vector<16xf32> to vector<16x1xf32>
    %cst_26 = arith.constant 3.200000e+01 : f32
    %105 = vector.broadcast %cst_26 : f32 to vector<16x1xf32>
    %106 = arith.divf %104, %105 : vector<16x1xf32>
    %107 = vector.broadcast %106 : vector<16x1xf32> to vector<16x32xf32>
    %108 = arith.subf %100, %107 : vector<16x32xf32>
    %109 = arith.mulf %108, %108 : vector<16x32xf32>
    %cst_27 = arith.constant dense<0.000000e+00> : vector<16xf32>
    %110 = vector.multi_reduction <add>, %109, %cst_27 [1] : vector<16x32xf32> to vector<16xf32>
    %111 = vector.shape_cast %110 : vector<16xf32> to vector<16x1xf32>
    %cst_28 = arith.constant 0.0322580636 : f32
    %112 = vector.broadcast %cst_28 : f32 to vector<16x1xf32>
    %113 = arith.mulf %111, %112 : vector<16x1xf32>
    %114 = math.sqrt %113 : vector<16x1xf32>
    %cst_29 = arith.constant 9.99999997E-7 : f32
    %115 = vector.broadcast %cst_29 : f32 to vector<16x1xf32>
    %116 = arith.addf %114, %115 : vector<16x1xf32>
    %117 = tpu.reciprocal %116 : vector<16x1xf32> -> vector<16x1xf32>
    %118 = vector.broadcast %106 : vector<16x1xf32> to vector<16x32xf32>
    %119 = arith.subf %100, %118 : vector<16x32xf32>
    %120 = vector.broadcast %101 : f32 to vector<16x32xf32>
    %121 = arith.mulf %120, %119 : vector<16x32xf32>
    %122 = vector.broadcast %117 : vector<16x1xf32> to vector<16x32xf32>
    %123 = arith.mulf %121, %122 : vector<16x32xf32>
    %124 = vector.broadcast %102 : f32 to vector<16x32xf32>
    %125 = arith.addf %123, %124 : vector<16x32xf32>
    %c0_30 = arith.constant 0 : index
    %c0_31 = arith.constant 0 : index
    %126 = vector.load %arg7[%c0_30, %c0_31] : memref<32x32xf32, #tpu.memory_space<vmem>>, vector<32x32xf32>
    %cst_32 = arith.constant dense<0.000000e+00> : vector<16x32xf32>
    %127 = tpu.matmul %125, %126, %cst_32 {dimension_numbers = #tpu.dot_dimension_numbers<[1], [0], [0], [1], [0, 0, 1, 1], [], []>} : vector<16x32xf32>, vector<32x32xf32>, vector<16x32xf32> -> vector<16x32xf32>
    %c0_33 = arith.constant 0 : index
    %c0_34 = arith.constant 0 : index
    %128 = vector.load %arg8[%c0_33, %c0_34] : memref<1x32xf32, #tpu.memory_space<vmem>>, vector<1x32xf32>
    %129 = vector.shape_cast %128 : vector<1x32xf32> to vector<32xf32>
    %130 = vector.shape_cast %129 : vector<32xf32> to vector<1x32xf32>
    %131 = vector.broadcast %130 : vector<1x32xf32> to vector<16x32xf32>
    %132 = arith.addf %127, %131 : vector<16x32xf32>
    %c0_35 = arith.constant 0 : index
    %c0_36 = arith.constant 0 : index
    %133 = vector.load %arg9[%c0_35, %c0_36] : memref<32x64xf32, #tpu.memory_space<vmem>>, vector<32x64xf32>
    %cst_37 = arith.constant dense<0.000000e+00> : vector<16x64xf32>
    %134 = tpu.matmul %1, %133, %cst_37 {dimension_numbers = #tpu.dot_dimension_numbers<[1], [0], [0], [1], [0, 0, 1, 1], [], []>} : vector<16x32xf32>, vector<32x64xf32>, vector<16x64xf32> -> vector<16x64xf32>
    %c0_38 = arith.constant 0 : index
    %c0_39 = arith.constant 0 : index
    %135 = vector.load %arg10[%c0_38, %c0_39] : memref<1x64xf32, #tpu.memory_space<vmem>>, vector<1x64xf32>
    %136 = vector.shape_cast %135 : vector<1x64xf32> to vector<64xf32>
    %137 = vector.shape_cast %136 : vector<64xf32> to vector<1x64xf32>
    %138 = vector.broadcast %137 : vector<1x64xf32> to vector<16x64xf32>
    %139 = arith.addf %134, %138 : vector<16x64xf32>
    %140 = vector.extract_strided_slice %139 {offsets = [0, 0], sizes = [16, 32], strides = [1, 1]} : vector<16x64xf32> to vector<16x32xf32>
    %141 = vector.extract_strided_slice %139 {offsets = [0, 32], sizes = [16, 32], strides = [1, 1]} : vector<16x64xf32> to vector<16x32xf32>
    %142 = vector.extract_strided_slice %2 {offsets = [32, 0], sizes = [32, 32], strides = [1, 1]} : vector<128x32xf32> to vector<32x32xf32>
    %c0_40 = arith.constant 0 : index
    %c0_41 = arith.constant 0 : index
    %143 = vector.load %arg4[%c0_40, %c0_41] : memref<16x16xf32, #tpu.memory_space<vmem>>, vector<16x16xf32>
    %144 = vector.extract_strided_slice %132 {offsets = [0, 0], sizes = [16, 8], strides = [1, 1]} : vector<16x32xf32> to vector<16x8xf32>
    %145 = vector.extract_strided_slice %132 {offsets = [0, 8], sizes = [16, 8], strides = [1, 1]} : vector<16x32xf32> to vector<16x8xf32>
    %146 = vector.extract_strided_slice %132 {offsets = [0, 16], sizes = [16, 8], strides = [1, 1]} : vector<16x32xf32> to vector<16x8xf32>
    %147 = vector.extract_strided_slice %132 {offsets = [0, 24], sizes = [16, 8], strides = [1, 1]} : vector<16x32xf32> to vector<16x8xf32>
    %148 = vector.shape_cast %144 : vector<16x8xf32> to vector<1x16x8xf32>
    %149 = vector.shape_cast %145 : vector<16x8xf32> to vector<1x16x8xf32>
    %150 = vector.shape_cast %146 : vector<16x8xf32> to vector<1x16x8xf32>
    %151 = vector.shape_cast %147 : vector<16x8xf32> to vector<1x16x8xf32>
    %152 = tpu.concatenate %148, %149, %150, %151 in 0 : vector<1x16x8xf32>, vector<1x16x8xf32>, vector<1x16x8xf32>, vector<1x16x8xf32> -> vector<4x16x8xf32>
    %153 = vector.extract_strided_slice %140 {offsets = [0, 0], sizes = [16, 8], strides = [1, 1]} : vector<16x32xf32> to vector<16x8xf32>
    %154 = vector.extract_strided_slice %140 {offsets = [0, 8], sizes = [16, 8], strides = [1, 1]} : vector<16x32xf32> to vector<16x8xf32>
    %155 = vector.extract_strided_slice %140 {offsets = [0, 16], sizes = [16, 8], strides = [1, 1]} : vector<16x32xf32> to vector<16x8xf32>
    %156 = vector.extract_strided_slice %140 {offsets = [0, 24], sizes = [16, 8], strides = [1, 1]} : vector<16x32xf32> to vector<16x8xf32>
    %157 = vector.shape_cast %153 : vector<16x8xf32> to vector<1x16x8xf32>
    %158 = vector.shape_cast %154 : vector<16x8xf32> to vector<1x16x8xf32>
    %159 = vector.shape_cast %155 : vector<16x8xf32> to vector<1x16x8xf32>
    %160 = vector.shape_cast %156 : vector<16x8xf32> to vector<1x16x8xf32>
    %161 = tpu.concatenate %157, %158, %159, %160 in 0 : vector<1x16x8xf32>, vector<1x16x8xf32>, vector<1x16x8xf32>, vector<1x16x8xf32> -> vector<4x16x8xf32>
    %162 = vector.extract_strided_slice %141 {offsets = [0, 0], sizes = [16, 8], strides = [1, 1]} : vector<16x32xf32> to vector<16x8xf32>
    %163 = vector.extract_strided_slice %141 {offsets = [0, 8], sizes = [16, 8], strides = [1, 1]} : vector<16x32xf32> to vector<16x8xf32>
    %164 = vector.extract_strided_slice %141 {offsets = [0, 16], sizes = [16, 8], strides = [1, 1]} : vector<16x32xf32> to vector<16x8xf32>
    %165 = vector.extract_strided_slice %141 {offsets = [0, 24], sizes = [16, 8], strides = [1, 1]} : vector<16x32xf32> to vector<16x8xf32>
    %166 = vector.shape_cast %162 : vector<16x8xf32> to vector<1x16x8xf32>
    %167 = vector.shape_cast %163 : vector<16x8xf32> to vector<1x16x8xf32>
    %168 = vector.shape_cast %164 : vector<16x8xf32> to vector<1x16x8xf32>
    %169 = vector.shape_cast %165 : vector<16x8xf32> to vector<1x16x8xf32>
    %170 = tpu.concatenate %166, %167, %168, %169 in 0 : vector<1x16x8xf32>, vector<1x16x8xf32>, vector<1x16x8xf32>, vector<1x16x8xf32> -> vector<4x16x8xf32>
    "tpu.trace_start"() <{level = 10 : i32, message = "hqd,hkd->hqk"}> : () -> ()
    %cst_42 = arith.constant dense<0.000000e+00> : vector<4x16x16xf32>
    %171 = tpu.matmul %152, %161, %cst_42 {dimension_numbers = #tpu.dot_dimension_numbers<[2], [2], [1], [1], [0, 0, 0, 1, 1, 1], [0], [0]>} : vector<4x16x8xf32>, vector<4x16x8xf32>, vector<4x16x16xf32> -> vector<4x16x16xf32>
    "tpu.trace_stop"() : () -> ()
    %cst_43 = arith.constant 0.353553385 : f32
    %172 = vector.broadcast %cst_43 : f32 to vector<4x16x16xf32>
    %173 = arith.mulf %171, %172 : vector<4x16x16xf32>
    %174 = vector.shape_cast %143 : vector<16x16xf32> to vector<1x16x16xf32>
    %175 = vector.broadcast %174 : vector<1x16x16xf32> to vector<4x16x16xf32>
    %176 = arith.addf %173, %175 : vector<4x16x16xf32>
    %cst_44 = arith.constant dense<0xFF800000> : vector<4x16xf32>
    %177 = vector.multi_reduction <maximumf>, %176, %cst_44 [2] : vector<4x16x16xf32> to vector<4x16xf32>
    %178 = vector.shape_cast %177 : vector<4x16xf32> to vector<4x16x1xf32>
    %179 = vector.broadcast %178 : vector<4x16x1xf32> to vector<4x16x16xf32>
    %180 = arith.subf %176, %179 : vector<4x16x16xf32>
    %181 = math.exp %180 : vector<4x16x16xf32>
    %cst_45 = arith.constant dense<0.000000e+00> : vector<4x16xf32>
    %182 = vector.multi_reduction <add>, %181, %cst_45 [2] : vector<4x16x16xf32> to vector<4x16xf32>
    %183 = vector.shape_cast %182 : vector<4x16xf32> to vector<4x16x1xf32>
    %184 = tpu.reciprocal %183 {approx = true} : vector<4x16x1xf32> -> vector<4x16x1xf32>
    %185 = vector.broadcast %184 : vector<4x16x1xf32> to vector<4x16x16xf32>
    %186 = arith.mulf %181, %185 : vector<4x16x16xf32>
    "tpu.trace_start"() <{level = 10 : i32, message = "hqk,hkd->hqd"}> : () -> ()
    %cst_46 = arith.constant dense<0.000000e+00> : vector<4x16x8xf32>
    %187 = tpu.matmul %186, %170, %cst_46 {dimension_numbers = #tpu.dot_dimension_numbers<[2], [1], [1], [2], [0, 0, 0, 1, 1, 2], [0], [0]>} : vector<4x16x16xf32>, vector<4x16x8xf32>, vector<4x16x8xf32> -> vector<4x16x8xf32>
    "tpu.trace_stop"() : () -> ()
    %188 = vector.extract_strided_slice %187 {offsets = [0, 0, 0], sizes = [1, 16, 8], strides = [1, 1, 1]} : vector<4x16x8xf32> to vector<1x16x8xf32>
    %189 = vector.shape_cast %188 : vector<1x16x8xf32> to vector<16x8xf32>
    %190 = vector.extract_strided_slice %187 {offsets = [1, 0, 0], sizes = [1, 16, 8], strides = [1, 1, 1]} : vector<4x16x8xf32> to vector<1x16x8xf32>
    %191 = vector.shape_cast %190 : vector<1x16x8xf32> to vector<16x8xf32>
    %192 = vector.extract_strided_slice %187 {offsets = [2, 0, 0], sizes = [1, 16, 8], strides = [1, 1, 1]} : vector<4x16x8xf32> to vector<1x16x8xf32>
    %193 = vector.shape_cast %192 : vector<1x16x8xf32> to vector<16x8xf32>
    %194 = vector.extract_strided_slice %187 {offsets = [3, 0, 0], sizes = [1, 16, 8], strides = [1, 1, 1]} : vector<4x16x8xf32> to vector<1x16x8xf32>
    %195 = vector.shape_cast %194 : vector<1x16x8xf32> to vector<16x8xf32>
    %196 = tpu.concatenate %189, %191, %193, %195 in 1 : vector<16x8xf32>, vector<16x8xf32>, vector<16x8xf32>, vector<16x8xf32> -> vector<16x32xf32>
    %cst_47 = arith.constant dense<0.000000e+00> : vector<16x32xf32>
    %197 = tpu.matmul %196, %142, %cst_47 {dimension_numbers = #tpu.dot_dimension_numbers<[1], [0], [0], [1], [0, 0, 1, 1], [], []>} : vector<16x32xf32>, vector<32x32xf32>, vector<16x32xf32> -> vector<16x32xf32>
    %198 = arith.addf %100, %197 : vector<16x32xf32>
    %199 = vector.extract_strided_slice %3 {offsets = [1, 0], sizes = [1, 32], strides = [1, 1]} : vector<3x32xf32> to vector<1x32xf32>
    %200 = vector.shape_cast %199 : vector<1x32xf32> to vector<32xf32>
    %201 = vector.shape_cast %200 : vector<32xf32> to vector<1x32xf32>
    %202 = vector.broadcast %201 : vector<1x32xf32> to vector<16x32xf32>
    %203 = arith.addf %198, %202 : vector<16x32xf32>
    %c4 = arith.constant 4 : index
    %204 = memref.load %arg15[%c4] : memref<6xf32, #tpu.memory_space<smem>>
    %c5 = arith.constant 5 : index
    %205 = memref.load %arg15[%c5] : memref<6xf32, #tpu.memory_space<smem>>
    %cst_48 = arith.constant dense<0.000000e+00> : vector<16xf32>
    %206 = vector.multi_reduction <add>, %203, %cst_48 [1] : vector<16x32xf32> to vector<16xf32>
    %207 = vector.shape_cast %206 : vector<16xf32> to vector<16x1xf32>
    %cst_49 = arith.constant 3.200000e+01 : f32
    %208 = vector.broadcast %cst_49 : f32 to vector<16x1xf32>
    %209 = arith.divf %207, %208 : vector<16x1xf32>
    %210 = vector.broadcast %209 : vector<16x1xf32> to vector<16x32xf32>
    %211 = arith.subf %203, %210 : vector<16x32xf32>
    %212 = arith.mulf %211, %211 : vector<16x32xf32>
    %cst_50 = arith.constant dense<0.000000e+00> : vector<16xf32>
    %213 = vector.multi_reduction <add>, %212, %cst_50 [1] : vector<16x32xf32> to vector<16xf32>
    %214 = vector.shape_cast %213 : vector<16xf32> to vector<16x1xf32>
    %cst_51 = arith.constant 0.0322580636 : f32
    %215 = vector.broadcast %cst_51 : f32 to vector<16x1xf32>
    %216 = arith.mulf %214, %215 : vector<16x1xf32>
    %217 = math.sqrt %216 : vector<16x1xf32>
    %cst_52 = arith.constant 9.99999997E-7 : f32
    %218 = vector.broadcast %cst_52 : f32 to vector<16x1xf32>
    %219 = arith.addf %217, %218 : vector<16x1xf32>
    %220 = tpu.reciprocal %219 : vector<16x1xf32> -> vector<16x1xf32>
    %221 = vector.broadcast %209 : vector<16x1xf32> to vector<16x32xf32>
    %222 = arith.subf %203, %221 : vector<16x32xf32>
    %223 = vector.broadcast %204 : f32 to vector<16x32xf32>
    %224 = arith.mulf %223, %222 : vector<16x32xf32>
    %225 = vector.broadcast %220 : vector<16x1xf32> to vector<16x32xf32>
    %226 = arith.mulf %224, %225 : vector<16x32xf32>
    %227 = vector.broadcast %205 : f32 to vector<16x32xf32>
    %228 = arith.addf %226, %227 : vector<16x32xf32>
    %c0_53 = arith.constant 0 : index
    %c0_54 = arith.constant 0 : index
    %229 = vector.load %arg13[%c0_53, %c0_54] : memref<32x64xf32, #tpu.memory_space<vmem>>, vector<32x64xf32>
    %cst_55 = arith.constant dense<0.000000e+00> : vector<16x64xf32>
    %230 = tpu.matmul %228, %229, %cst_55 {dimension_numbers = #tpu.dot_dimension_numbers<[1], [0], [0], [1], [0, 0, 1, 1], [], []>} : vector<16x32xf32>, vector<32x64xf32>, vector<16x64xf32> -> vector<16x64xf32>
    %c0_56 = arith.constant 0 : index
    %c0_57 = arith.constant 0 : index
    %231 = vector.load %arg14[%c0_56, %c0_57] : memref<1x64xf32, #tpu.memory_space<vmem>>, vector<1x64xf32>
    %232 = vector.shape_cast %231 : vector<1x64xf32> to vector<64xf32>
    %233 = vector.shape_cast %232 : vector<64xf32> to vector<1x64xf32>
    %234 = vector.broadcast %233 : vector<1x64xf32> to vector<16x64xf32>
    %235 = arith.addf %230, %234 : vector<16x64xf32>
    %cst_58 = arith.constant 0.000000e+00 : f32
    %236 = vector.broadcast %cst_58 : f32 to vector<16x64xf32>
    %237 = arith.maximumf %235, %236 : vector<16x64xf32>
    %238 = vector.extract_strided_slice %2 {offsets = [64, 0], sizes = [64, 32], strides = [1, 1]} : vector<128x32xf32> to vector<64x32xf32>
    %cst_59 = arith.constant dense<0.000000e+00> : vector<16x32xf32>
    %239 = tpu.matmul %237, %238, %cst_59 {dimension_numbers = #tpu.dot_dimension_numbers<[1], [0], [0], [1], [0, 0, 1, 1], [], []>} : vector<16x64xf32>, vector<64x32xf32>, vector<16x32xf32> -> vector<16x32xf32>
    %240 = vector.extract_strided_slice %3 {offsets = [2, 0], sizes = [1, 32], strides = [1, 1]} : vector<3x32xf32> to vector<1x32xf32>
    %241 = vector.shape_cast %240 : vector<1x32xf32> to vector<32xf32>
    %242 = vector.shape_cast %241 : vector<32xf32> to vector<1x32xf32>
    %243 = vector.broadcast %242 : vector<1x32xf32> to vector<16x32xf32>
    %244 = arith.addf %239, %243 : vector<16x32xf32>
    %245 = arith.addf %203, %244 : vector<16x32xf32>
    %c0_60 = arith.constant 0 : index
    %c0_61 = arith.constant 0 : index
    %246 = vector.load %arg16[%c0_60, %c0_61] : memref<16x32xf32, #tpu.memory_space<vmem>>, vector<16x32xf32>
    tpu.vector_store %arg16[%c0_60, %c0_61], %245 {strides = array<i32>} : memref<16x32xf32, #tpu.memory_space<vmem>>, vector<16x32xf32>,
    return
  }
  func.func @transform_0(%arg0: i32) -> (i32, i32) {
    %c0_i32 = arith.constant 0 : i32
    %c0_i32_0 = arith.constant 0 : i32
    %c0_i32_1 = arith.constant 0 : i32
    return %c0_i32, %c0_i32_0 : i32, i32
  }
  func.func @transform_1(%arg0: i32) -> (i32, i32) {
    %c0_i32 = arith.constant 0 : i32
    %c0_i32_0 = arith.constant 0 : i32
    %c0_i32_1 = arith.constant 0 : i32
    return %c0_i32, %c0_i32_0 : i32, i32
  }
  func.func @transform_2(%arg0: i32) -> (i32, i32) {
    %c0_i32 = arith.constant 0 : i32
    %c0_i32_0 = arith.constant 0 : i32
    %c0_i32_1 = arith.constant 0 : i32
    return %c0_i32, %c0_i32_0 : i32, i32
  }
  func.func @transform_3(%arg0: i32) -> (i32, i32) {
    %c0_i32 = arith.constant 0 : i32
    %c0_i32_0 = arith.constant 0 : i32
    %c0_i32_1 = arith.constant 0 : i32
    return %c0_i32, %c0_i32_0 : i32, i32
  }
  func.func @transform_4(%arg0: i32) -> (i32, i32) {
    %c0_i32 = arith.constant 0 : i32
    %c0_i32_0 = arith.constant 0 : i32
    %c0_i32_1 = arith.constant 0 : i32
    return %c0_i32, %c0_i32_0 : i32, i32
  }
  func.func @transform_5(%arg0: i32) -> (i32, i32) {
    %c0_i32 = arith.constant 0 : i32
    %c0_i32_0 = arith.constant 0 : i32
    %c0_i32_1 = arith.constant 0 : i32
    return %c0_i32, %c0_i32_0 : i32, i32
  }
  func.func @transform_6(%arg0: i32) -> (i32, i32) {
    %c0_i32 = arith.constant 0 : i32
    %c0_i32_0 = arith.constant 0 : i32
    %c0_i32_1 = arith.constant 0 : i32
    return %c0_i32, %c0_i32_0 : i32, i32
  }
  func.func @transform_7(%arg0: i32) -> (i32, i32) {
    %c0_i32 = arith.constant 0 : i32
    %c0_i32_0 = arith.constant 0 : i32
    %c0_i32_1 = arith.constant 0 : i32
    return %c0_i32, %c0_i32_0 : i32, i32
  }
  func.func @transform_8(%arg0: i32) -> (i32, i32) {
    %c0_i32 = arith.constant 0 : i32
    %c0_i32_0 = arith.constant 0 : i32
    %c0_i32_1 = arith.constant 0 : i32
    return %c0_i32, %c0_i32_0 : i32, i32
  }
  func.func @transform_9(%arg0: i32) -> (i32, i32) {
    %c0_i32 = arith.constant 0 : i32
    %c0_i32_0 = arith.constant 0 : i32
    %c0_i32_1 = arith.constant 0 : i32
    return %c0_i32, %c0_i32_0 : i32, i32
  }
  func.func @transform_10(%arg0: i32) -> (i32, i32) {
    %c0_i32 = arith.constant 0 : i32
    %c0_i32_0 = arith.constant 0 : i32
    %c0_i32_1 = arith.constant 0 : i32
    return %c0_i32, %c0_i32_0 : i32, i32
  }
  func.func @transform_11(%arg0: i32) -> (i32, i32) {
    %c0_i32 = arith.constant 0 : i32
    %c0_i32_0 = arith.constant 0 : i32
    %c0_i32_1 = arith.constant 0 : i32
    return %c0_i32, %c0_i32_0 : i32, i32
  }
  func.func @transform_12(%arg0: i32) -> (i32, i32) {
    %c0_i32 = arith.constant 0 : i32
    %c0_i32_0 = arith.constant 0 : i32
    %c0_i32_1 = arith.constant 0 : i32
    return %c0_i32, %c0_i32_0 : i32, i32
  }
  func.func @transform_13(%arg0: i32) -> (i32, i32) {
    %c0_i32 = arith.constant 0 : i32
    %c0_i32_0 = arith.constant 0 : i32
    %c0_i32_1 = arith.constant 0 : i32
    return %c0_i32, %c0_i32_0 : i32, i32
  }
  func.func @transform_14(%arg0: i32) -> i32 {
    %c0_i32 = arith.constant 0 : i32
    %c0_i32_0 = arith.constant 0 : i32
    return %c0_i32 : i32
  }
  func.func @transform_15(%arg0: i32) -> (i32, i32) {
    %c0_i32 = arith.constant 0 : i32
    %c0_i32_0 = arith.constant 0 : i32
    %c0_i32_1 = arith.constant 0 : i32
    return %c0_i32, %c0_i32_0 : i32, i32
  }
}

</mosaic_0001>

<llo_original>
// kernel: tpu_custom_call.1
$region0: #{tpu_custom_call.1}
  #allocation0 [shape = 'u32[]', space=smem, size = 0x4, offset = 0x4, fixed_abs, tag = 'smem constant byte address 0x4 - core index']
  #allocation1 [shape = 'u32[144,128]{1,0:T(1,128)}', space=vmem, size = 0x12000, scoped, tag = 'internal scratch']
  %s0 = inlined_call_operand.vmem [shape: f32[16,32], index: 0, kind: input, shape index: {}]
  %s1 = inlined_call_operand.vmem [shape: f32[16,32], index: 1, kind: input, shape index: {}]
  %s2 = inlined_call_operand.hbm [shape: f32[16,16], index: 2, kind: input, shape index: {}]
  %s3 = inlined_call_operand.hbm [shape: f32[16,16], index: 3, kind: input, shape index: {}]
  %s4 = inlined_call_operand.vmem [shape: f32[32,96], index: 4, kind: input, shape index: {}]
  %s5 = inlined_call_operand.vmem [shape: f32[1,96], index: 5, kind: input, shape index: {}]
  %s6 = inlined_call_operand.vmem [shape: f32[32,32], index: 6, kind: input, shape index: {}]
  %s7 = inlined_call_operand.vmem [shape: f32[1,32], index: 7, kind: input, shape index: {}]
  %s8 = inlined_call_operand.vmem [shape: f32[32,64], index: 8, kind: input, shape index: {}]
  %s9 = inlined_call_operand.vmem [shape: f32[1,64], index: 9, kind: input, shape index: {}]
  %s10 = inlined_call_operand.vmem [shape: f32[128,32], index: 10, kind: input, shape index: {}]
  %s11 = inlined_call_operand.vmem [shape: f32[3,32], index: 11, kind: input, shape index: {}]
  %s12 = inlined_call_operand.vmem [shape: f32[32,64], index: 12, kind: input, shape index: {}]
  %s13 = inlined_call_operand.vmem [shape: f32[1,64], index: 13, kind: input, shape index: {}]
  %s14 = inlined_call_operand.vmem [shape: f32[6], index: 14, kind: input, shape index: {}]
  %s15 = inlined_call_operand.hbm [shape: f32[16,32], index: 15, kind: output, shape index: {}]
  %s16 = sld [smem:[#allocation0]]
  $region82: #{tpu_custom_call.1} parent=0
    _
  %s18 = ssub.s32 1, %s16
  %s19 = scalar_select 0, %s18, %s16
  $region1: #{tpu_custom_call.1} parent=0
    #allocation2 [shape = 'u8[8192]{0}', space=vmem, size = 0x2000, scoped, tag = 'input window, operand 2, single buffered']
    #allocation3 [shape = 's32[1]{0}', space=sflag, size = 0x4, scoped, tag = 'scoped memory for tpu_custom_call.1']
    #allocation4 [shape = 's32[1]{0}', space=sflag, size = 0x4, scoped, tag = 'scoped memory for tpu_custom_call.1']
    #allocation5 [shape = 's32[1]{0}', space=sflag, size = 0x4, scoped, tag = 'scoped memory for tpu_custom_call.1']
    #allocation6 [shape = 'u8[8192]{0}', space=vmem, size = 0x2000, scoped, tag = 'input window, operand 3, single buffered']
    #allocation7 [shape = 's32[1]{0}', space=sflag, size = 0x4, scoped, tag = 'scoped memory for tpu_custom_call.1']
    #allocation8 [shape = 'u8[512]{0}', space=smem, size = 0x200, scoped, tag = 'input window, operand 14, single buffered']
    #allocation9 [shape = 'u8[8192]{0}', space=vmem, size = 0x2000, scoped, tag = 'output window, operand 0, single buffered']
    %20 = vsyncpa [#allocation3], 0
    %21 = vsyncpa [#allocation7], 0
    %22 = vsyncpa [#allocation5], 0
    %23 = vsyncpa [#allocation4], 0
    // Predicated region
    $region2: #{tpu_custom_call.1} parent=1 // pred_check
      _
    $region3: #{tpu_custom_call.1} parent=1 // pred_check_branch
      %25 = sbr.rel (0) target = $region5
    $region4: #{tpu_custom_call.1} parent=1 // pred_region
      _
    $region5: #{tpu_custom_call.1} parent=1 // pred_fallthru
      _
    // Predicated region
    $region6: #{tpu_custom_call.1} parent=1 // pred_check
      _
    $region7: #{tpu_custom_call.1} parent=1 // pred_check_branch
      %27 = sbr.rel (0) target = $region9
    $region8: #{tpu_custom_call.1} parent=1 // pred_region
      _
    $region9: #{tpu_custom_call.1} parent=1 // pred_fallthru
      _
    // Predicated region
    $region10: #{tpu_custom_call.1} parent=1 // pred_check
      _
    $region11: #{tpu_custom_call.1} parent=1 // pred_check_branch
      %29 = sbr.rel (0) target = $region13
    $region12: #{tpu_custom_call.1} parent=1 // pred_region
      %s31 = ssub.s32 256, 256
      %32 = vsyncadd [#allocation3], %s31
      %s33 = sshll.u32 [#allocation2], 4
      %s34 = int_to_ptr.vmem [resolvable:$true] %s33
      %39 = dma.hbm_to_vmem [thread:$0]  %s2, 256, %s34, [#allocation3], 128, 128, 8
    $region13: #{tpu_custom_call.1} parent=1 // pred_fallthru
      _
    // Predicated region
    $region14: #{tpu_custom_call.1} parent=1 // pred_check
      _
    $region15: #{tpu_custom_call.1} parent=1 // pred_check_branch
      %41 = sbr.rel (0) target = $region17
    $region16: #{tpu_custom_call.1} parent=1 // pred_region
      %s43 = ssub.s32 256, 256
      %44 = vsyncadd [#allocation7], %s43
      %s45 = sshll.u32 [#allocation6], 4
      %s46 = int_to_ptr.vmem [resolvable:$true] %s45
      %51 = dma.hbm_to_vmem [thread:$0]  %s3, 256, %s46, [#allocation7], 128, 128, 8
    $region17: #{tpu_custom_call.1} parent=1 // pred_fallthru
      _
    // Predicated region
    $region18: #{tpu_custom_call.1} parent=1 // pred_check
      _
    $region19: #{tpu_custom_call.1} parent=1 // pred_check_branch
      %53 = sbr.rel (0) target = $region21
    $region20: #{tpu_custom_call.1} parent=1 // pred_region
      _
    $region21: #{tpu_custom_call.1} parent=1 // pred_fallthru
      _
    // Predicated region
    $region22: #{tpu_custom_call.1} parent=1 // pred_check
      _
    $region23: #{tpu_custom_call.1} parent=1 // pred_check_branch
      %55 = sbr.rel (0) target = $region25
    $region24: #{tpu_custom_call.1} parent=1 // pred_region
      _
    $region25: #{tpu_custom_call.1} parent=1 // pred_fallthru
      _
    // Predicated region
    $region26: #{tpu_custom_call.1} parent=1 // pred_check
      _
    $region27: #{tpu_custom_call.1} parent=1 // pred_check_branch
      %57 = sbr.rel (0) target = $region29
    $region28: #{tpu_custom_call.1} parent=1 // pred_region
      _
    $region29: #{tpu_custom_call.1} parent=1 // pred_fallthru
      _
    // Predicated region
    $region30: #{tpu_custom_call.1} parent=1 // pred_check
      _
    $region31: #{tpu_custom_call.1} parent=1 // pred_check_branch
      %59 = sbr.rel (0) target = $region33
    $region32: #{tpu_custom_call.1} parent=1 // pred_region
      _
    $region33: #{tpu_custom_call.1} parent=1 // pred_fallthru
      _
    // Predicated region
    $region34: #{tpu_custom_call.1} parent=1 // pred_check
      _
    $region35: #{tpu_custom_call.1} parent=1 // pred_check_branch
      %61 = sbr.rel (0) target = $region37
    $region36: #{tpu_custom_call.1} parent=1 // pred_region
      _
    $region37: #{tpu_custom_call.1} parent=1 // pred_fallthru
      _
    // Predicated region
    $region38: #{tpu_custom_call.1} parent=1 // pred_check
      _
    $region39: #{tpu_custom_call.1} parent=1 // pred_check_branch
      %63 = sbr.rel (0) target = $region41
    $region40: #{tpu_custom_call.1} parent=1 // pred_region
      _
    $region41: #{tpu_custom_call.1} parent=1 // pred_fallthru
      _
    // Predicated region
    $region42: #{tpu_custom_call.1} parent=1 // pred_check
      _
    $region43: #{tpu_custom_call.1} parent=1 // pred_check_branch
      %65 = sbr.rel (0) target = $region45
    $region44: #{tpu_custom_call.1} parent=1 // pred_region
      _
    $region45: #{tpu_custom_call.1} parent=1 // pred_fallthru
      _
    // Predicated region
    $region46: #{tpu_custom_call.1} parent=1 // pred_check
      _
    $region47: #{tpu_custom_call.1} parent=1 // pred_check_branch
      %67 = sbr.rel (0) target = $region49
    $region48: #{tpu_custom_call.1} parent=1 // pred_region
      _
    $region49: #{tpu_custom_call.1} parent=1 // pred_fallthru
      _
    // Predicated region
    $region50: #{tpu_custom_call.1} parent=1 // pred_check
      _
    $region51: #{tpu_custom_call.1} parent=1 // pred_check_branch
      %69 = sbr.rel (0) target = $region53
    $region52: #{tpu_custom_call.1} parent=1 // pred_region
      _
    $region53: #{tpu_custom_call.1} parent=1 // pred_fallthru
      _
    // Predicated region
    $region54: #{tpu_custom_call.1} parent=1 // pred_check
      _
    $region55: #{tpu_custom_call.1} parent=1 // pred_check_branch
      %71 = sbr.rel (0) target = $region57
    $region56: #{tpu_custom_call.1} parent=1 // pred_region
      _
    $region57: #{tpu_custom_call.1} parent=1 // pred_fallthru
      _
    // Predicated region
    $region58: #{tpu_custom_call.1} parent=1 // pred_check
      _
    $region59: #{tpu_custom_call.1} parent=1 // pred_check_branch
      %73 = sbr.rel (0) target = $region61
    $region60: #{tpu_custom_call.1} parent=1 // pred_region
      %s75 = ssub.s32 16, 16
      %76 = vsyncadd [#allocation5], %s75
      %s78 = sshll.u32 %s14, 4
      %s79 = int_to_ptr.vmem [resolvable:$true] %s78
      %81 = dma.vmem_to_smem %s79, 16, [#allocation8], [#allocation5]
    $region61: #{tpu_custom_call.1} parent=1 // pred_fallthru
      _
    // Predicated region
    $region62: #{tpu_custom_call.1} parent=1 // pred_check
      _
    $region63: #{tpu_custom_call.1} parent=1 // pred_check_branch
      %83 = sbr.rel (0) target = $region65
    $region64: #{tpu_custom_call.1} parent=1 // pred_region
      %84 = dma.done [#allocation3], 256
    $region65: #{tpu_custom_call.1} parent=1 // pred_fallthru
      _
    // Predicated region
    $region66: #{tpu_custom_call.1} parent=1 // pred_check
      _
    $region67: #{tpu_custom_call.1} parent=1 // pred_check_branch
      %86 = sbr.rel (0) target = $region69
    $region68: #{tpu_custom_call.1} parent=1 // pred_region
      %87 = dma.done [#allocation7], 256
    $region69: #{tpu_custom_call.1} parent=1 // pred_fallthru
      _
    // Predicated region
    $region70: #{tpu_custom_call.1} parent=1 // pred_check
      _
    $region71: #{tpu_custom_call.1} parent=1 // pred_check_branch
      %89 = sbr.rel (0) target = $region73
    $region72: #{tpu_custom_call.1} parent=1 // pred_region
      %90 = dma.done [#allocation5], 16
    $region73: #{tpu_custom_call.1} parent=1 // pred_fallthru
      _
    %91 = sfence
    %v92 = vld [vmem:[%s0] sm:$0xff]
    %v93 = vld [vmem:[%s0 + $0x8] sm:$0xff]
    %v94 = vld [vmem:[%s1] sm:$0xff]
    %v95 = vld [vmem:[%s1 + $0x8] sm:$0xff]
    %v96 = vld [vmem:[%s10] sm:$0xff]
    %v97 = vld [vmem:[%s10 + $0x8] sm:$0xff]
    %v98 = vld [vmem:[%s10 + $0x10] sm:$0xff]
    %v99 = vld [vmem:[%s10 + $0x18] sm:$0xff]
    %v100 = vld [vmem:[%s10 + $0x20] sm:$0xff]
    %v101 = vld [vmem:[%s10 + $0x28] sm:$0xff]
    %v102 = vld [vmem:[%s10 + $0x30] sm:$0xff]
    %v103 = vld [vmem:[%s10 + $0x38] sm:$0xff]
    %v104 = vld [vmem:[%s10 + $0x40] sm:$0xff]
    %v105 = vld [vmem:[%s10 + $0x48] sm:$0xff]
    %v106 = vld [vmem:[%s10 + $0x50] sm:$0xff]
    %v107 = vld [vmem:[%s10 + $0x58] sm:$0xff]
    %v108 = vld [vmem:[%s10 + $0x60] sm:$0xff]
    %v109 = vld [vmem:[%s10 + $0x68] sm:$0xff]
    %v110 = vld [vmem:[%s10 + $0x70] sm:$0xff]
    %v111 = vld [vmem:[%s10 + $0x78] sm:$0xff]
    %v112 = vld [vmem:[%s11] sm:$0x7]
    %s113 = sld [smem:[#allocation8]]
    %s114 = sld [smem:[#allocation8 + $0x1]]
    %vm115 = vcmask 261120
    %v116 = vsel %vm115, %v92, 0.0
    %117 = vadd.xlane.f32.xlu0 %v116
    %v118 = vpop.xlane.xlu0 %117
    %v119 = vsel %vm115, %v93, 0.0
    %120 = vadd.xlane.f32.xlu0 %v119
    %v121 = vpop.xlane.xlu0 %120
    %v122 = vrcp.pop 32.0
    %v123 = vmul.f32 %v118, %v122
    %v124 = vmul.f32 %v121, %v122
    %v125 = vsub.f32 %v92, %v123
    %v126 = vsub.f32 %v93, %v124
    %v127 = vmul.f32 %v125, %v125
    %v128 = vmul.f32 %v126, %v126
    %v129 = vsel %vm115, %v127, 0.0
    %130 = vadd.xlane.f32.xlu0 %v129
    %v131 = vpop.xlane.xlu0 %130
    %v132 = vsel %vm115, %v128, 0.0
    %133 = vadd.xlane.f32.xlu0 %v132
    %v134 = vpop.xlane.xlu0 %133
    %v135 = vmul.f32 %v131, 0.032258064
    %v136 = vmul.f32 %v134, 0.032258064
    %v137 = vrsqrt.pop %v135
    %v138 = vmul.f32 %v135, %v137
    %vm139 = vcmp.eq.f32.partialorder %v135, inf
    %v140 = vsel %vm139, %v135, %v138
    %vm141 = vcmp.eq.f32.partialorder %v135, 0.0
    %v142 = vand.u32 %v135, 2147483648
    %v143 = vsel %vm141, %v142, %v140
    %v144 = vrsqrt.pop %v136
    %v145 = vmul.f32 %v136, %v144
    %vm146 = vcmp.eq.f32.partialorder %v136, inf
    %v147 = vsel %vm146, %v136, %v145
    %vm148 = vcmp.eq.f32.partialorder %v136, 0.0
    %v149 = vand.u32 %v136, 2147483648
    %v150 = vsel %vm148, %v149, %v147
    %v151 = vadd.f32 %v143, 1e-06
    %v152 = vadd.f32 %v150, 1e-06
    %v153 = vrcp.pop %v151
    %v154 = vrcp.pop %v152
    %v155 = vstv %s113
    %v156 = vmul.f32 %v155, %v125
    %v157 = vmul.f32 %v155, %v126
    %v158 = vmul.f32 %v156, %v153
    %v159 = vmul.f32 %v157, %v154
    %v160 = vstv %s114
    %v161 = vadd.f32 %v158, %v160
    %v162 = vadd.f32 %v159, %v160
    %v163 = vld [vmem:[%s4] sm:$0xff]
    %v164 = vld [vmem:[%s4 + $0x8] sm:$0xff]
    %v165 = vld [vmem:[%s4 + $0x10] sm:$0xff]
    %v166 = vld [vmem:[%s4 + $0x18] sm:$0xff]
    %v167 = vld [vmem:[%s5] sm:$0x1]
    %v169 = vlaneseq
    %v170 = vshrl.u32 %v169, 7
    %v171 = vsub.s32 0, %v170
    %v172 = vrot.slane %v167, %v171
    %v175 = vsel %vm115, %v161, 0
    %v178 = vsel %vm115, %v162, 0
    %180 = vmatprep.subr.mxu0 0.0
    %181 = vmatpush1.msra.mxu0 0.0
    %182 = vmatprep.subr.mxu0 0.0
    %183 = vmatpush1.msra.mxu0 0.0
    %184 = vmatprep.subr.mxu0 0.0
    %185 = vmatpush1.msra.mxu0 0.0
    %186 = vmatprep.subr.mxu0 0.0
    %187 = vmatpush1.msra.mxu0 0.0
    %188 = vmatprep.subr.mxu0 0.0
    %189 = vmatpush1.msra.mxu0 0.0
    %190 = vmatprep.subr.mxu0 0.0
    %191 = vmatpush1.msra.mxu0 0.0
    %192 = vmatprep.subr.mxu0 0.0
    %193 = vmatpush1.msra.mxu0 0.0
    %194 = vmatprep.subr.mxu0 0.0
    %195 = vmatpush1.msra.mxu0 0.0
    %196 = vmatprep.subr.mxu0 0.0
    %197 = vmatpush1.msra.mxu0 0.0
    %198 = vmatprep.subr.mxu0 0.0
    %199 = vmatpush1.msra.mxu0 0.0
    %200 = vmatprep.subr.mxu0 0.0
    %201 = vmatpush1.msra.mxu0 0.0
    %202 = vmatprep.subr.mxu0 0.0
    %203 = vmatpush1.msra.mxu0 0.0
    %204 = vmatprep.subr.mxu0 0.0
    %205 = vmatpush1.msra.mxu0 %v166
    %206 = vmatprep.subr.mxu0 0.0
    %207 = vmatpush1.msra.mxu0 %v165
    %208 = vmatprep.subr.mxu0 0.0
    %209 = vmatpush1.msra.mxu0 %v164
    %210 = vmatprep.subr.mxu0 0.0
    %211 = vmatpush1.msra.mxu0 %v163
    %212 = vmatprep.subr.mxu0 0.0
    %213 = vmatpush2.msra.mxu0 0.0
    %214 = vmatprep.subr.mxu0 0.0
    %215 = vmatpush2.msra.mxu0 0.0
    %216 = vmatprep.subr.mxu0 0.0
    %217 = vmatpush2.msra.mxu0 0.0
    %218 = vmatprep.subr.mxu0 0.0
    %219 = vmatpush2.msra.mxu0 0.0
    %220 = vmatprep.subr.mxu0 0.0
    %221 = vmatpush2.msra.mxu0 0.0
    %222 = vmatprep.subr.mxu0 0.0
    %223 = vmatpush2.msra.mxu0 0.0
    %224 = vmatprep.subr.mxu0 0.0
    %225 = vmatpush2.msra.mxu0 0.0
    %226 = vmatprep.subr.mxu0 0.0
    %227 = vmatpush2.msra.mxu0 0.0
    %228 = vmatprep.subr.mxu0 0.0
    %229 = vmatpush2.msra.mxu0 0.0
    %230 = vmatprep.subr.mxu0 0.0
    %231 = vmatpush2.msra.mxu0 0.0
    %232 = vmatprep.subr.mxu0 0.0
    %233 = vmatpush2.msra.mxu0 0.0
    %234 = vmatprep.subr.mxu0 0.0
    %235 = vmatpush2.msra.mxu0 0.0
    %236 = vmatprep.subr.mxu0 0.0
    %237 = vmatpush2.msra.mxu0 0.0
    %238 = vmatprep.subr.mxu0 0.0
    %239 = vmatpush2.msra.mxu0 0.0
    %240 = vmatprep.subr.mxu0 0.0
    %241 = vmatpush2.msra.mxu0 0.0
    %242 = vmatprep.subr.mxu0 0.0
    %243 = vmatpush2.msra.mxu0 0.0
    %244 = vmatprep.mubr.f32.mxu0 0.0
    %245 = vmatmul.mubr.f32.gmra.mxu0 %v175
    %v246 = vpop.f32.mrf.mxu0
    %v247 = vadd.f32 %v172, %v246
    %v248 = vpop.f32.mrf.mxu0
    %249 = vmatprep.mubr.f32.mxu0 0.0
    %250 = vmatmul.mubr.f32.gmra.mxu0 %v178
    %v251 = vpop.f32.mrf.mxu0
    %v252 = vadd.f32 %v172, %v251
    %v253 = vpop.f32.mrf.mxu0
    %254 = vdwg.mxu0
    %v255 = vld [vmem:[#allocation2] sm:$0xff]
    %v256 = vld [vmem:[#allocation2 + $0x8] sm:$0xff]
    %259 = vrot.lane.b32.xlu0 %v247, 120
    %v260 = vpop.permute.xlu0 %259
    %261 = vrot.lane.b32.xlu0 %v252, 120
    %v262 = vpop.permute.xlu0 %261
    %263 = vrot.lane.b32.xlu0 %v247, 112
    %v264 = vpop.permute.xlu0 %263
    %265 = vrot.lane.b32.xlu0 %v252, 112
    %v266 = vpop.permute.xlu0 %265
    %267 = vrot.lane.b32.xlu0 %v247, 104
    %v268 = vpop.permute.xlu0 %267
    %269 = vrot.lane.b32.xlu0 %v252, 104
    %v270 = vpop.permute.xlu0 %269
    %271 = vrot.lane.b32.xlu0 %v247, 96
    %v272 = vpop.permute.xlu0 %271
    %273 = vrot.lane.b32.xlu0 %v252, 96
    %v274 = vpop.permute.xlu0 %273
    %vm275 = vcmask 64512
    %v276 = vsel %vm275, %v247, 0
    %v278 = vsel %vm275, %v252, 0
    %v280 = vsel %vm275, %v272, 0
    %v282 = vsel %vm275, %v274, 0
    %284 = vmatprep.subr.mxu0 0.0
    %285 = vmatpush1.xpose.msra.mxu0 0.0
    %286 = vmatprep.subr.mxu0 0.0
    %287 = vmatpush1.xpose.msra.mxu0 0.0
    %288 = vmatprep.subr.mxu0 0.0
    %289 = vmatpush1.xpose.msra.mxu0 0.0
    %290 = vmatprep.subr.mxu0 0.0
    %291 = vmatpush1.xpose.msra.mxu0 0.0
    %292 = vmatprep.subr.mxu0 0.0
    %293 = vmatpush1.xpose.msra.mxu0 0.0
    %294 = vmatprep.subr.mxu0 0.0
    %295 = vmatpush1.xpose.msra.mxu0 0.0
    %296 = vmatprep.subr.mxu0 0.0
    %297 = vmatpush1.xpose.msra.mxu0 0.0
    %298 = vmatprep.subr.mxu0 0.0
    %299 = vmatpush1.xpose.msra.mxu0 0.0
    %300 = vmatprep.subr.mxu0 0.0
    %301 = vmatpush1.xpose.msra.mxu0 0.0
    %302 = vmatprep.subr.mxu0 0.0
    %303 = vmatpush1.xpose.msra.mxu0 0.0
    %304 = vmatprep.subr.mxu0 0.0
    %305 = vmatpush1.xpose.msra.mxu0 0.0
    %306 = vmatprep.subr.mxu0 0.0
    %307 = vmatpush1.xpose.msra.mxu0 0.0
    %308 = vmatprep.subr.mxu0 0.0
    %309 = vmatpush1.xpose.msra.mxu0 0.0
    %310 = vmatprep.subr.mxu0 0.0
    %311 = vmatpush1.xpose.msra.mxu0 0.0
    %312 = vmatprep.subr.mxu0 0.0
    %313 = vmatpush1.xpose.msra.mxu0 %v282
    %314 = vmatprep.subr.mxu0 0.0
    %315 = vmatpush1.xpose.msra.mxu0 %v280
    %316 = vmatprep.subr.mxu0 0.0
    %317 = vmatpush2.xpose.msra.mxu0 0.0
    %318 = vmatprep.subr.mxu0 0.0
    %319 = vmatpush2.xpose.msra.mxu0 0.0
    %320 = vmatprep.subr.mxu0 0.0
    %321 = vmatpush2.xpose.msra.mxu0 0.0
    %322 = vmatprep.subr.mxu0 0.0
    %323 = vmatpush2.xpose.msra.mxu0 0.0
    %324 = vmatprep.subr.mxu0 0.0
    %325 = vmatpush2.xpose.msra.mxu0 0.0
    %326 = vmatprep.subr.mxu0 0.0
    %327 = vmatpush2.xpose.msra.mxu0 0.0
    %328 = vmatprep.subr.mxu0 0.0
    %329 = vmatpush2.xpose.msra.mxu0 0.0
    %330 = vmatprep.subr.mxu0 0.0
    %331 = vmatpush2.xpose.msra.mxu0 0.0
    %332 = vmatprep.subr.mxu0 0.0
    %333 = vmatpush2.xpose.msra.mxu0 0.0
    %334 = vmatprep.subr.mxu0 0.0
    %335 = vmatpush2.xpose.msra.mxu0 0.0
    %336 = vmatprep.subr.mxu0 0.0
    %337 = vmatpush2.xpose.msra.mxu0 0.0
    %338 = vmatprep.subr.mxu0 0.0
    %339 = vmatpush2.xpose.msra.mxu0 0.0
    %340 = vmatprep.subr.mxu0 0.0
    %341 = vmatpush2.xpose.msra.mxu0 0.0
    %342 = vmatprep.subr.mxu0 0.0
    %343 = vmatpush2.xpose.msra.mxu0 0.0
    %344 = vmatprep.subr.mxu0 0.0
    %345 = vmatpush2.xpose.msra.mxu0 0.0
    %346 = vmatprep.subr.mxu0 0.0
    %347 = vmatpush2.xpose.msra.mxu0 0.0
    %348 = vmatprep.mubr.f32.mxu0 0.0
    %349 = vmatmul.mubr.f32.gmra.mxu0 %v276
    %v350 = vpop.f32.mrf.mxu0
    %v351 = vadd.f32 0.0, %v350
    %v352 = vpop.f32.mrf.mxu0
    %353 = vmatprep.mubr.f32.mxu0 0.0
    %354 = vmatmul.mubr.f32.gmra.mxu0 %v278
    %v355 = vpop.f32.mrf.mxu0
    %v356 = vadd.f32 0.0, %v355
    %v357 = vpop.f32.mrf.mxu0
    %358 = vdwg.mxu0
    %359 = vrot.lane.b32.xlu0 %v260, 96
    %v360 = vpop.permute.xlu0 %359
    %361 = vrot.lane.b32.xlu0 %v262, 96
    %v362 = vpop.permute.xlu0 %361
    %v363 = vsel %vm275, %v260, 0
    %v365 = vsel %vm275, %v262, 0
    %v367 = vsel %vm275, %v360, 0
    %v369 = vsel %vm275, %v362, 0
    %371 = vmatprep.subr.mxu0 0.0
    %372 = vmatpush1.xpose.msra.mxu0 0.0
    %373 = vmatprep.subr.mxu0 0.0
    %374 = vmatpush1.xpose.msra.mxu0 0.0
    %375 = vmatprep.subr.mxu0 0.0
    %376 = vmatpush1.xpose.msra.mxu0 0.0
    %377 = vmatprep.subr.mxu0 0.0
    %378 = vmatpush1.xpose.msra.mxu0 0.0
    %379 = vmatprep.subr.mxu0 0.0
    %380 = vmatpush1.xpose.msra.mxu0 0.0
    %381 = vmatprep.subr.mxu0 0.0
    %382 = vmatpush1.xpose.msra.mxu0 0.0
    %383 = vmatprep.subr.mxu0 0.0
    %384 = vmatpush1.xpose.msra.mxu0 0.0
    %385 = vmatprep.subr.mxu0 0.0
    %386 = vmatpush1.xpose.msra.mxu0 0.0
    %387 = vmatprep.subr.mxu0 0.0
    %388 = vmatpush1.xpose.msra.mxu0 0.0
    %389 = vmatprep.subr.mxu0 0.0
    %390 = vmatpush1.xpose.msra.mxu0 0.0
    %391 = vmatprep.subr.mxu0 0.0
    %392 = vmatpush1.xpose.msra.mxu0 0.0
    %393 = vmatprep.subr.mxu0 0.0
    %394 = vmatpush1.xpose.msra.mxu0 0.0
    %395 = vmatprep.subr.mxu0 0.0
    %396 = vmatpush1.xpose.msra.mxu0 0.0
    %397 = vmatprep.subr.mxu0 0.0
    %398 = vmatpush1.xpose.msra.mxu0 0.0
    %399 = vmatprep.subr.mxu0 0.0
    %400 = vmatpush1.xpose.msra.mxu0 %v369
    %401 = vmatprep.subr.mxu0 0.0
    %402 = vmatpush1.xpose.msra.mxu0 %v367
    %403 = vmatprep.subr.mxu0 0.0
    %404 = vmatpush2.xpose.msra.mxu0 0.0
    %405 = vmatprep.subr.mxu0 0.0
    %406 = vmatpush2.xpose.msra.mxu0 0.0
    %407 = vmatprep.subr.mxu0 0.0
    %408 = vmatpush2.xpose.msra.mxu0 0.0
    %409 = vmatprep.subr.mxu0 0.0
    %410 = vmatpush2.xpose.msra.mxu0 0.0
    %411 = vmatprep.subr.mxu0 0.0
    %412 = vmatpush2.xpose.msra.mxu0 0.0
    %413 = vmatprep.subr.mxu0 0.0
    %414 = vmatpush2.xpose.msra.mxu0 0.0
    %415 = vmatprep.subr.mxu0 0.0
    %416 = vmatpush2.xpose.msra.mxu0 0.0
    %417 = vmatprep.subr.mxu0 0.0
    %418 = vmatpush2.xpose.msra.mxu0 0.0
    %419 = vmatprep.subr.mxu0 0.0
    %420 = vmatpush2.xpose.msra.mxu0 0.0
    %421 = vmatprep.subr.mxu0 0.0
    %422 = vmatpush2.xpose.msra.mxu0 0.0
    %423 = vmatprep.subr.mxu0 0.0
    %424 = vmatpush2.xpose.msra.mxu0 0.0
    %425 = vmatprep.subr.mxu0 0.0
    %426 = vmatpush2.xpose.msra.mxu0 0.0
    %427 = vmatprep.subr.mxu0 0.0
    %428 = vmatpush2.xpose.msra.mxu0 0.0
    %429 = vmatprep.subr.mxu0 0.0
    %430 = vmatpush2.xpose.msra.mxu0 0.0
    %431 = vmatprep.subr.mxu0 0.0
    %432 = vmatpush2.xpose.msra.mxu0 0.0
    %433 = vmatprep.subr.mxu0 0.0
    %434 = vmatpush2.xpose.msra.mxu0 0.0
    %435 = vmatprep.mubr.f32.mxu0 0.0
    %436 = vmatmul.mubr.f32.gmra.mxu0 %v363
    %v437 = vpop.f32.mrf.mxu0
    %v438 = vadd.f32 0.0, %v437
    %v439 = vpop.f32.mrf.mxu0
    %440 = vmatprep.mubr.f32.mxu0 0.0
    %441 = vmatmul.mubr.f32.gmra.mxu0 %v365
    %v442 = vpop.f32.mrf.mxu0
    %v443 = vadd.f32 0.0, %v442
    %v444 = vpop.f32.mrf.mxu0
    %445 = vdwg.mxu0
    %446 = vrot.lane.b32.xlu0 %v264, 96
    %v447 = vpop.permute.xlu0 %446
    %448 = vrot.lane.b32.xlu0 %v266, 96
    %v449 = vpop.permute.xlu0 %448
    %v450 = vsel %vm275, %v264, 0
    %v452 = vsel %vm275, %v266, 0
    %v454 = vsel %vm275, %v447, 0
    %v456 = vsel %vm275, %v449, 0
    %458 = vmatprep.subr.mxu0 0.0
    %459 = vmatpush1.xpose.msra.mxu0 0.0
    %460 = vmatprep.subr.mxu0 0.0
    %461 = vmatpush1.xpose.msra.mxu0 0.0
    %462 = vmatprep.subr.mxu0 0.0
    %463 = vmatpush1.xpose.msra.mxu0 0.0
    %464 = vmatprep.subr.mxu0 0.0
    %465 = vmatpush1.xpose.msra.mxu0 0.0
    %466 = vmatprep.subr.mxu0 0.0
    %467 = vmatpush1.xpose.msra.mxu0 0.0
    %468 = vmatprep.subr.mxu0 0.0
    %469 = vmatpush1.xpose.msra.mxu0 0.0
    %470 = vmatprep.subr.mxu0 0.0
    %471 = vmatpush1.xpose.msra.mxu0 0.0
    %472 = vmatprep.subr.mxu0 0.0
    %473 = vmatpush1.xpose.msra.mxu0 0.0
    %474 = vmatprep.subr.mxu0 0.0
    %475 = vmatpush1.xpose.msra.mxu0 0.0
    %476 = vmatprep.subr.mxu0 0.0
    %477 = vmatpush1.xpose.msra.mxu0 0.0
    %478 = vmatprep.subr.mxu0 0.0
    %479 = vmatpush1.xpose.msra.mxu0 0.0
    %480 = vmatprep.subr.mxu0 0.0
    %481 = vmatpush1.xpose.msra.mxu0 0.0
    %482 = vmatprep.subr.mxu0 0.0
    %483 = vmatpush1.xpose.msra.mxu0 0.0
    %484 = vmatprep.subr.mxu0 0.0
    %485 = vmatpush1.xpose.msra.mxu0 0.0
    %486 = vmatprep.subr.mxu0 0.0
    %487 = vmatpush1.xpose.msra.mxu0 %v456
    %488 = vmatprep.subr.mxu0 0.0
    %489 = vmatpush1.xpose.msra.mxu0 %v454
    %490 = vmatprep.subr.mxu0 0.0
    %491 = vmatpush2.xpose.msra.mxu0 0.0
    %492 = vmatprep.subr.mxu0 0.0
    %493 = vmatpush2.xpose.msra.mxu0 0.0
    %494 = vmatprep.subr.mxu0 0.0
    %495 = vmatpush2.xpose.msra.mxu0 0.0
    %496 = vmatprep.subr.mxu0 0.0
    %497 = vmatpush2.xpose.msra.mxu0 0.0
    %498 = vmatprep.subr.mxu0 0.0
    %499 = vmatpush2.xpose.msra.mxu0 0.0
    %500 = vmatprep.subr.mxu0 0.0
    %501 = vmatpush2.xpose.msra.mxu0 0.0
    %502 = vmatprep.subr.mxu0 0.0
    %503 = vmatpush2.xpose.msra.mxu0 0.0
    %504 = vmatprep.subr.mxu0 0.0
    %505 = vmatpush2.xpose.msra.mxu0 0.0
    %506 = vmatprep.subr.mxu0 0.0
    %507 = vmatpush2.xpose.msra.mxu0 0.0
    %508 = vmatprep.subr.mxu0 0.0
    %509 = vmatpush2.xpose.msra.mxu0 0.0
    %510 = vmatprep.subr.mxu0 0.0
    %511 = vmatpush2.xpose.msra.mxu0 0.0
    %512 = vmatprep.subr.mxu0 0.0
    %513 = vmatpush2.xpose.msra.mxu0 0.0
    %514 = vmatprep.subr.mxu0 0.0
    %515 = vmatpush2.xpose.msra.mxu0 0.0
    %516 = vmatprep.subr.mxu0 0.0
    %517 = vmatpush2.xpose.msra.mxu0 0.0
    %518 = vmatprep.subr.mxu0 0.0
    %519 = vmatpush2.xpose.msra.mxu0 0.0
    %520 = vmatprep.subr.mxu0 0.0
    %521 = vmatpush2.xpose.msra.mxu0 0.0
    %522 = vmatprep.mubr.f32.mxu0 0.0
    %523 = vmatmul.mubr.f32.gmra.mxu0 %v450
    %v524 = vpop.f32.mrf.mxu0
    %v525 = vadd.f32 0.0, %v524
    %v526 = vpop.f32.mrf.mxu0
    %527 = vmatprep.mubr.f32.mxu0 0.0
    %528 = vmatmul.mubr.f32.gmra.mxu0 %v452
    %v529 = vpop.f32.mrf.mxu0
    %v530 = vadd.f32 0.0, %v529
    %v531 = vpop.f32.mrf.mxu0
    %532 = vdwg.mxu0
    %533 = vrot.lane.b32.xlu0 %v268, 96
    %v534 = vpop.permute.xlu0 %533
    %535 = vrot.lane.b32.xlu0 %v270, 96
    %v536 = vpop.permute.xlu0 %535
    %v537 = vsel %vm275, %v268, 0
    %v539 = vsel %vm275, %v270, 0
    %v541 = vsel %vm275, %v534, 0
    %v543 = vsel %vm275, %v536, 0
    %545 = vmatprep.subr.mxu0 0.0
    %546 = vmatpush1.xpose.msra.mxu0 0.0
    %547 = vmatprep.subr.mxu0 0.0
    %548 = vmatpush1.xpose.msra.mxu0 0.0
    %549 = vmatprep.subr.mxu0 0.0
    %550 = vmatpush1.xpose.msra.mxu0 0.0
    %551 = vmatprep.subr.mxu0 0.0
    %552 = vmatpush1.xpose.msra.mxu0 0.0
    %553 = vmatprep.subr.mxu0 0.0
    %554 = vmatpush1.xpose.msra.mxu0 0.0
    %555 = vmatprep.subr.mxu0 0.0
    %556 = vmatpush1.xpose.msra.mxu0 0.0
    %557 = vmatprep.subr.mxu0 0.0
    %558 = vmatpush1.xpose.msra.mxu0 0.0
    %559 = vmatprep.subr.mxu0 0.0
    %560 = vmatpush1.xpose.msra.mxu0 0.0
    %561 = vmatprep.subr.mxu0 0.0
    %562 = vmatpush1.xpose.msra.mxu0 0.0
    %563 = vmatprep.subr.mxu0 0.0
    %564 = vmatpush1.xpose.msra.mxu0 0.0
    %565 = vmatprep.subr.mxu0 0.0
    %566 = vmatpush1.xpose.msra.mxu0 0.0
    %567 = vmatprep.subr.mxu0 0.0
    %568 = vmatpush1.xpose.msra.mxu0 0.0
    %569 = vmatprep.subr.mxu0 0.0
    %570 = vmatpush1.xpose.msra.mxu0 0.0
    %571 = vmatprep.subr.mxu0 0.0
    %572 = vmatpush1.xpose.msra.mxu0 0.0
    %573 = vmatprep.subr.mxu0 0.0
    %574 = vmatpush1.xpose.msra.mxu0 %v543
    %575 = vmatprep.subr.mxu0 0.0
    %576 = vmatpush1.xpose.msra.mxu0 %v541
    %577 = vmatprep.subr.mxu0 0.0
    %578 = vmatpush2.xpose.msra.mxu0 0.0
    %579 = vmatprep.subr.mxu0 0.0
    %580 = vmatpush2.xpose.msra.mxu0 0.0
    %581 = vmatprep.subr.mxu0 0.0
    %582 = vmatpush2.xpose.msra.mxu0 0.0
    %583 = vmatprep.subr.mxu0 0.0
    %584 = vmatpush2.xpose.msra.mxu0 0.0
    %585 = vmatprep.subr.mxu0 0.0
    %586 = vmatpush2.xpose.msra.mxu0 0.0
    %587 = vmatprep.subr.mxu0 0.0
    %588 = vmatpush2.xpose.msra.mxu0 0.0
    %589 = vmatprep.subr.mxu0 0.0
    %590 = vmatpush2.xpose.msra.mxu0 0.0
    %591 = vmatprep.subr.mxu0 0.0
    %592 = vmatpush2.xpose.msra.mxu0 0.0
    %593 = vmatprep.subr.mxu0 0.0
    %594 = vmatpush2.xpose.msra.mxu0 0.0
    %595 = vmatprep.subr.mxu0 0.0
    %596 = vmatpush2.xpose.msra.mxu0 0.0
    %597 = vmatprep.subr.mxu0 0.0
    %598 = vmatpush2.xpose.msra.mxu0 0.0
    %599 = vmatprep.subr.mxu0 0.0
    %600 = vmatpush2.xpose.msra.mxu0 0.0
    %601 = vmatprep.subr.mxu0 0.0
    %602 = vmatpush2.xpose.msra.mxu0 0.0
    %603 = vmatprep.subr.mxu0 0.0
    %604 = vmatpush2.xpose.msra.mxu0 0.0
    %605 = vmatprep.subr.mxu0 0.0
    %606 = vmatpush2.xpose.msra.mxu0 0.0
    %607 = vmatprep.subr.mxu0 0.0
    %608 = vmatpush2.xpose.msra.mxu0 0.0
    %609 = vmatprep.mubr.f32.mxu0 0.0
    %610 = vmatmul.mubr.f32.gmra.mxu0 %v537
    %v611 = vpop.f32.mrf.mxu0
    %v612 = vadd.f32 0.0, %v611
    %v613 = vpop.f32.mrf.mxu0
    %614 = vmatprep.mubr.f32.mxu0 0.0
    %615 = vmatmul.mubr.f32.gmra.mxu0 %v539
    %v616 = vpop.f32.mrf.mxu0
    %v617 = vadd.f32 0.0, %v616
    %v618 = vpop.f32.mrf.mxu0
    %619 = vdwg.mxu0
    %v620 = vmul.f32 %v351, 0.35355338
    %v621 = vmul.f32 %v356, 0.35355338
    %v622 = vmul.f32 %v438, 0.35355338
    %v623 = vmul.f32 %v443, 0.35355338
    %v624 = vmul.f32 %v525, 0.35355338
    %v625 = vmul.f32 %v530, 0.35355338
    %v626 = vmul.f32 %v612, 0.35355338
    %v627 = vmul.f32 %v617, 0.35355338
    %v628 = vadd.f32 %v620, %v255
    %v629 = vadd.f32 %v621, %v256
    %v630 = vadd.f32 %v622, %v255
    %v631 = vadd.f32 %v623, %v256
    %v632 = vadd.f32 %v624, %v255
    %v633 = vadd.f32 %v625, %v256
    %v634 = vadd.f32 %v626, %v255
    %v635 = vadd.f32 %v627, %v256
    %vm636 = vcmask 130048
    %v637 = vsel %vm636, %v628, -inf
    %638 = vmax.xlane.f32.xlu0 %v637
    %v639 = vpop.xlane.xlu0 %638
    %v640 = vsel %vm636, %v629, -inf
    %641 = vmax.xlane.f32.xlu0 %v640
    %v642 = vpop.xlane.xlu0 %641
    %v643 = vsel %vm636, %v630, -inf
    %644 = vmax.xlane.f32.xlu0 %v643
    %v645 = vpop.xlane.xlu0 %644
    %v646 = vsel %vm636, %v631, -inf
    %647 = vmax.xlane.f32.xlu0 %v646
    %v648 = vpop.xlane.xlu0 %647
    %v649 = vsel %vm636, %v632, -inf
    %650 = vmax.xlane.f32.xlu0 %v649
    %v651 = vpop.xlane.xlu0 %650
    %v652 = vsel %vm636, %v633, -inf
    %653 = vmax.xlane.f32.xlu0 %v652
    %v654 = vpop.xlane.xlu0 %653
    %v655 = vsel %vm636, %v634, -inf
    %656 = vmax.xlane.f32.xlu0 %v655
    %v657 = vpop.xlane.xlu0 %656
    %v658 = vsel %vm636, %v635, -inf
    %659 = vmax.xlane.f32.xlu0 %v658
    %v660 = vpop.xlane.xlu0 %659
    %v661 = vsub.f32 %v628, %v639
    %v662 = vsub.f32 %v629, %v642
    %v663 = vsub.f32 %v630, %v645
    %v664 = vsub.f32 %v631, %v648
    %v665 = vsub.f32 %v632, %v651
    %v666 = vsub.f32 %v633, %v654
    %v667 = vsub.f32 %v634, %v657
    %v668 = vsub.f32 %v635, %v660
    %v669 = vmul.f32 %v661, 1.442695
    %v670 = vpow.pop %v669
    %v671 = vmul.f32 %v662, 1.442695
    %v672 = vpow.pop %v671
    %v673 = vmul.f32 %v663, 1.442695
    %v674 = vpow.pop %v673
    %v675 = vmul.f32 %v664, 1.442695
    %v676 = vpow.pop %v675
    %v677 = vmul.f32 %v665, 1.442695
    %v678 = vpow.pop %v677
    %v679 = vmul.f32 %v666, 1.442695
    %v680 = vpow.pop %v679
    %v681 = vmul.f32 %v667, 1.442695
    %v682 = vpow.pop %v681
    %v683 = vmul.f32 %v668, 1.442695
    %v684 = vpow.pop %v683
    %v685 = vsel %vm636, %v670, 0.0
    %686 = vadd.xlane.f32.xlu0 %v685
    %v687 = vpop.xlane.xlu0 %686
    %v688 = vsel %vm636, %v672, 0.0
    %689 = vadd.xlane.f32.xlu0 %v688
    %v690 = vpop.xlane.xlu0 %689
    %v691 = vsel %vm636, %v674, 0.0
    %692 = vadd.xlane.f32.xlu0 %v691
    %v693 = vpop.xlane.xlu0 %692
    %v694 = vsel %vm636, %v676, 0.0
    %695 = vadd.xlane.f32.xlu0 %v694
    %v696 = vpop.xlane.xlu0 %695
    %v697 = vsel %vm636, %v678, 0.0
    %698 = vadd.xlane.f32.xlu0 %v697
    %v699 = vpop.xlane.xlu0 %698
    %v700 = vsel %vm636, %v680, 0.0
    %701 = vadd.xlane.f32.xlu0 %v700
    %v702 = vpop.xlane.xlu0 %701
    %v703 = vsel %vm636, %v682, 0.0
    %704 = vadd.xlane.f32.xlu0 %v703
    %v705 = vpop.xlane.xlu0 %704
    %v706 = vsel %vm636, %v684, 0.0
    %707 = vadd.xlane.f32.xlu0 %v706
    %v708 = vpop.xlane.xlu0 %707
    %v709 = vrcp.pop %v687
    %v710 = vrcp.pop %v690
    %v711 = vrcp.pop %v693
    %v712 = vrcp.pop %v696
    %v713 = vrcp.pop %v699
    %v714 = vrcp.pop %v702
    %v715 = vrcp.pop %v705
    %v716 = vrcp.pop %v708
    %v717 = vmul.f32 %v670, %v709
    %v718 = vmul.f32 %v672, %v710
    %v719 = vmul.f32 %v674, %v711
    %v720 = vmul.f32 %v676, %v712
    %v721 = vmul.f32 %v678, %v713
    %v722 = vmul.f32 %v680, %v714
    %v723 = vmul.f32 %v682, %v715
    %v724 = vmul.f32 %v684, %v716
    %725 = vrot.lane.b32.xlu0 %v247, 64
    %v726 = vpop.permute.xlu0 %725
    %727 = vrot.lane.b32.xlu0 %v252, 64
    %v728 = vpop.permute.xlu0 %727
    %v732 = vsel %vm636, %v717, 0
    %v735 = vsel %vm636, %v718, 0
    %737 = vmatprep.subr.mxu0 0.0
    %738 = vmatpush1.msra.mxu0 0.0
    %739 = vmatprep.subr.mxu0 0.0
    %740 = vmatpush1.msra.mxu0 0.0
    %741 = vmatprep.subr.mxu0 0.0
    %742 = vmatpush1.msra.mxu0 0.0
    %743 = vmatprep.subr.mxu0 0.0
    %744 = vmatpush1.msra.mxu0 0.0
    %745 = vmatprep.subr.mxu0 0.0
    %746 = vmatpush1.msra.mxu0 0.0
    %747 = vmatprep.subr.mxu0 0.0
    %748 = vmatpush1.msra.mxu0 0.0
    %749 = vmatprep.subr.mxu0 0.0
    %750 = vmatpush1.msra.mxu0 0.0
    %751 = vmatprep.subr.mxu0 0.0
    %752 = vmatpush1.msra.mxu0 0.0
    %753 = vmatprep.subr.mxu0 0.0
    %754 = vmatpush1.msra.mxu0 0.0
    %755 = vmatprep.subr.mxu0 0.0
    %756 = vmatpush1.msra.mxu0 0.0
    %757 = vmatprep.subr.mxu0 0.0
    %758 = vmatpush1.msra.mxu0 0.0
    %759 = vmatprep.subr.mxu0 0.0
    %760 = vmatpush1.msra.mxu0 0.0
    %761 = vmatprep.subr.mxu0 0.0
    %762 = vmatpush1.msra.mxu0 0.0
    %763 = vmatprep.subr.mxu0 0.0
    %764 = vmatpush1.msra.mxu0 0.0
    %765 = vmatprep.subr.mxu0 0.0
    %766 = vmatpush1.msra.mxu0 %v728
    %767 = vmatprep.subr.mxu0 0.0
    %768 = vmatpush1.msra.mxu0 %v726
    %769 = vmatprep.subr.mxu0 0.0
    %770 = vmatpush2.msra.mxu0 0.0
    %771 = vmatprep.subr.mxu0 0.0
    %772 = vmatpush2.msra.mxu0 0.0
    %773 = vmatprep.subr.mxu0 0.0
    %774 = vmatpush2.msra.mxu0 0.0
    %775 = vmatprep.subr.mxu0 0.0
    %776 = vmatpush2.msra.mxu0 0.0
    %777 = vmatprep.subr.mxu0 0.0
    %778 = vmatpush2.msra.mxu0 0.0
    %779 = vmatprep.subr.mxu0 0.0
    %780 = vmatpush2.msra.mxu0 0.0
    %781 = vmatprep.subr.mxu0 0.0
    %782 = vmatpush2.msra.mxu0 0.0
    %783 = vmatprep.subr.mxu0 0.0
    %784 = vmatpush2.msra.mxu0 0.0
    %785 = vmatprep.subr.mxu0 0.0
    %786 = vmatpush2.msra.mxu0 0.0
    %787 = vmatprep.subr.mxu0 0.0
    %788 = vmatpush2.msra.mxu0 0.0
    %789 = vmatprep.subr.mxu0 0.0
    %790 = vmatpush2.msra.mxu0 0.0
    %791 = vmatprep.subr.mxu0 0.0
    %792 = vmatpush2.msra.mxu0 0.0
    %793 = vmatprep.subr.mxu0 0.0
    %794 = vmatpush2.msra.mxu0 0.0
    %795 = vmatprep.subr.mxu0 0.0
    %796 = vmatpush2.msra.mxu0 0.0
    %797 = vmatprep.subr.mxu0 0.0
    %798 = vmatpush2.msra.mxu0 0.0
    %799 = vmatprep.subr.mxu0 0.0
    %800 = vmatpush2.msra.mxu0 0.0
    %801 = vmatprep.mubr.f32.mxu0 0.0
    %802 = vmatmul.mubr.f32.gmra.mxu0 %v732
    %v803 = vpop.f32.mrf.mxu0
    %v804 = vadd.f32 0.0, %v803
    %v805 = vpop.f32.mrf.mxu0
    %806 = vmatprep.mubr.f32.mxu0 0.0
    %807 = vmatmul.mubr.f32.gmra.mxu0 %v735
    %v808 = vpop.f32.mrf.mxu0
    %v809 = vadd.f32 0.0, %v808
    %v810 = vpop.f32.mrf.mxu0
    %811 = vdwg.mxu0
    %812 = vrot.lane.b32.xlu0 %v260, 64
    %v813 = vpop.permute.xlu0 %812
    %814 = vrot.lane.b32.xlu0 %v262, 64
    %v815 = vpop.permute.xlu0 %814
    %v819 = vsel %vm636, %v719, 0
    %v822 = vsel %vm636, %v720, 0
    %824 = vmatprep.subr.mxu0 0.0
    %825 = vmatpush1.msra.mxu0 0.0
    %826 = vmatprep.subr.mxu0 0.0
    %827 = vmatpush1.msra.mxu0 0.0
    %828 = vmatprep.subr.mxu0 0.0
    %829 = vmatpush1.msra.mxu0 0.0
    %830 = vmatprep.subr.mxu0 0.0
    %831 = vmatpush1.msra.mxu0 0.0
    %832 = vmatprep.subr.mxu0 0.0
    %833 = vmatpush1.msra.mxu0 0.0
    %834 = vmatprep.subr.mxu0 0.0
    %835 = vmatpush1.msra.mxu0 0.0
    %836 = vmatprep.subr.mxu0 0.0
    %837 = vmatpush1.msra.mxu0 0.0
    %838 = vmatprep.subr.mxu0 0.0
    %839 = vmatpush1.msra.mxu0 0.0
    %840 = vmatprep.subr.mxu0 0.0
    %841 = vmatpush1.msra.mxu0 0.0
    %842 = vmatprep.subr.mxu0 0.0
    %843 = vmatpush1.msra.mxu0 0.0
    %844 = vmatprep.subr.mxu0 0.0
    %845 = vmatpush1.msra.mxu0 0.0
    %846 = vmatprep.subr.mxu0 0.0
    %847 = vmatpush1.msra.mxu0 0.0
    %848 = vmatprep.subr.mxu0 0.0
    %849 = vmatpush1.msra.mxu0 0.0
    %850 = vmatprep.subr.mxu0 0.0
    %851 = vmatpush1.msra.mxu0 0.0
    %852 = vmatprep.subr.mxu0 0.0
    %853 = vmatpush1.msra.mxu0 %v815
    %854 = vmatprep.subr.mxu0 0.0
    %855 = vmatpush1.msra.mxu0 %v813
    %856 = vmatprep.subr.mxu0 0.0
    %857 = vmatpush2.msra.mxu0 0.0
    %858 = vmatprep.subr.mxu0 0.0
    %859 = vmatpush2.msra.mxu0 0.0
    %860 = vmatprep.subr.mxu0 0.0
    %861 = vmatpush2.msra.mxu0 0.0
    %862 = vmatprep.subr.mxu0 0.0
    %863 = vmatpush2.msra.mxu0 0.0
    %864 = vmatprep.subr.mxu0 0.0
    %865 = vmatpush2.msra.mxu0 0.0
    %866 = vmatprep.subr.mxu0 0.0
    %867 = vmatpush2.msra.mxu0 0.0
    %868 = vmatprep.subr.mxu0 0.0
    %869 = vmatpush2.msra.mxu0 0.0
    %870 = vmatprep.subr.mxu0 0.0
    %871 = vmatpush2.msra.mxu0 0.0
    %872 = vmatprep.subr.mxu0 0.0
    %873 = vmatpush2.msra.mxu0 0.0
    %874 = vmatprep.subr.mxu0 0.0
    %875 = vmatpush2.msra.mxu0 0.0
    %876 = vmatprep.subr.mxu0 0.0
    %877 = vmatpush2.msra.mxu0 0.0
    %878 = vmatprep.subr.mxu0 0.0
    %879 = vmatpush2.msra.mxu0 0.0
    %880 = vmatprep.subr.mxu0 0.0
    %881 = vmatpush2.msra.mxu0 0.0
    %882 = vmatprep.subr.mxu0 0.0
    %883 = vmatpush2.msra.mxu0 0.0
    %884 = vmatprep.subr.mxu0 0.0
    %885 = vmatpush2.msra.mxu0 0.0
    %886 = vmatprep.subr.mxu0 0.0
    %887 = vmatpush2.msra.mxu0 0.0
    %888 = vmatprep.mubr.f32.mxu0 0.0
    %889 = vmatmul.mubr.f32.gmra.mxu0 %v819
    %v890 = vpop.f32.mrf.mxu0
    %v891 = vadd.f32 0.0, %v890
    %v892 = vpop.f32.mrf.mxu0
    %893 = vmatprep.mubr.f32.mxu0 0.0
    %894 = vmatmul.mubr.f32.gmra.mxu0 %v822
    %v895 = vpop.f32.mrf.mxu0
    %v896 = vadd.f32 0.0, %v895
    %v897 = vpop.f32.mrf.mxu0
    %898 = vdwg.mxu0
    %899 = vrot.lane.b32.xlu0 %v264, 64
    %v900 = vpop.permute.xlu0 %899
    %901 = vrot.lane.b32.xlu0 %v266, 64
    %v902 = vpop.permute.xlu0 %901
    %v906 = vsel %vm636, %v721, 0
    %v909 = vsel %vm636, %v722, 0
    %911 = vmatprep.subr.mxu0 0.0
    %912 = vmatpush1.msra.mxu0 0.0
    %913 = vmatprep.subr.mxu0 0.0
    %914 = vmatpush1.msra.mxu0 0.0
    %915 = vmatprep.subr.mxu0 0.0
    %916 = vmatpush1.msra.mxu0 0.0
    %917 = vmatprep.subr.mxu0 0.0
    %918 = vmatpush1.msra.mxu0 0.0
    %919 = vmatprep.subr.mxu0 0.0
    %920 = vmatpush1.msra.mxu0 0.0
    %921 = vmatprep.subr.mxu0 0.0
    %922 = vmatpush1.msra.mxu0 0.0
    %923 = vmatprep.subr.mxu0 0.0
    %924 = vmatpush1.msra.mxu0 0.0
    %925 = vmatprep.subr.mxu0 0.0
    %926 = vmatpush1.msra.mxu0 0.0
    %927 = vmatprep.subr.mxu0 0.0
    %928 = vmatpush1.msra.mxu0 0.0
    %929 = vmatprep.subr.mxu0 0.0
    %930 = vmatpush1.msra.mxu0 0.0
    %931 = vmatprep.subr.mxu0 0.0
    %932 = vmatpush1.msra.mxu0 0.0
    %933 = vmatprep.subr.mxu0 0.0
    %934 = vmatpush1.msra.mxu0 0.0
    %935 = vmatprep.subr.mxu0 0.0
    %936 = vmatpush1.msra.mxu0 0.0
    %937 = vmatprep.subr.mxu0 0.0
    %938 = vmatpush1.msra.mxu0 0.0
    %939 = vmatprep.subr.mxu0 0.0
    %940 = vmatpush1.msra.mxu0 %v902
    %941 = vmatprep.subr.mxu0 0.0
    %942 = vmatpush1.msra.mxu0 %v900
    %943 = vmatprep.subr.mxu0 0.0
    %944 = vmatpush2.msra.mxu0 0.0
    %945 = vmatprep.subr.mxu0 0.0
    %946 = vmatpush2.msra.mxu0 0.0
    %947 = vmatprep.subr.mxu0 0.0
    %948 = vmatpush2.msra.mxu0 0.0
    %949 = vmatprep.subr.mxu0 0.0
    %950 = vmatpush2.msra.mxu0 0.0
    %951 = vmatprep.subr.mxu0 0.0
    %952 = vmatpush2.msra.mxu0 0.0
    %953 = vmatprep.subr.mxu0 0.0
    %954 = vmatpush2.msra.mxu0 0.0
    %955 = vmatprep.subr.mxu0 0.0
    %956 = vmatpush2.msra.mxu0 0.0
    %957 = vmatprep.subr.mxu0 0.0
    %958 = vmatpush2.msra.mxu0 0.0
    %959 = vmatprep.subr.mxu0 0.0
    %960 = vmatpush2.msra.mxu0 0.0
    %961 = vmatprep.subr.mxu0 0.0
    %962 = vmatpush2.msra.mxu0 0.0
    %963 = vmatprep.subr.mxu0 0.0
    %964 = vmatpush2.msra.mxu0 0.0
    %965 = vmatprep.subr.mxu0 0.0
    %966 = vmatpush2.msra.mxu0 0.0
    %967 = vmatprep.subr.mxu0 0.0
    %968 = vmatpush2.msra.mxu0 0.0
    %969 = vmatprep.subr.mxu0 0.0
    %970 = vmatpush2.msra.mxu0 0.0
    %971 = vmatprep.subr.mxu0 0.0
    %972 = vmatpush2.msra.mxu0 0.0
    %973 = vmatprep.subr.mxu0 0.0
    %974 = vmatpush2.msra.mxu0 0.0
    %975 = vmatprep.mubr.f32.mxu0 0.0
    %976 = vmatmul.mubr.f32.gmra.mxu0 %v906
    %v977 = vpop.f32.mrf.mxu0
    %v978 = vadd.f32 0.0, %v977
    %v979 = vpop.f32.mrf.mxu0
    %980 = vmatprep.mubr.f32.mxu0 0.0
    %981 = vmatmul.mubr.f32.gmra.mxu0 %v909
    %v982 = vpop.f32.mrf.mxu0
    %v983 = vadd.f32 0.0, %v982
    %v984 = vpop.f32.mrf.mxu0
    %985 = vdwg.mxu0
    %986 = vrot.lane.b32.xlu0 %v268, 64
    %v987 = vpop.permute.xlu0 %986
    %988 = vrot.lane.b32.xlu0 %v270, 64
    %v989 = vpop.permute.xlu0 %988
    %v993 = vsel %vm636, %v723, 0
    %v996 = vsel %vm636, %v724, 0
    %998 = vmatprep.subr.mxu0 0.0
    %999 = vmatpush1.msra.mxu0 0.0
    %1000 = vmatprep.subr.mxu0 0.0
    %1001 = vmatpush1.msra.mxu0 0.0
    %1002 = vmatprep.subr.mxu0 0.0
    %1003 = vmatpush1.msra.mxu0 0.0
    %1004 = vmatprep.subr.mxu0 0.0
    %1005 = vmatpush1.msra.mxu0 0.0
    %1006 = vmatprep.subr.mxu0 0.0
    %1007 = vmatpush1.msra.mxu0 0.0
    %1008 = vmatprep.subr.mxu0 0.0
    %1009 = vmatpush1.msra.mxu0 0.0
    %1010 = vmatprep.subr.mxu0 0.0
    %1011 = vmatpush1.msra.mxu0 0.0
    %1012 = vmatprep.subr.mxu0 0.0
    %1013 = vmatpush1.msra.mxu0 0.0
    %1014 = vmatprep.subr.mxu0 0.0
    %1015 = vmatpush1.msra.mxu0 0.0
    %1016 = vmatprep.subr.mxu0 0.0
    %1017 = vmatpush1.msra.mxu0 0.0
    %1018 = vmatprep.subr.mxu0 0.0
    %1019 = vmatpush1.msra.mxu0 0.0
    %1020 = vmatprep.subr.mxu0 0.0
    %1021 = vmatpush1.msra.mxu0 0.0
    %1022 = vmatprep.subr.mxu0 0.0
    %1023 = vmatpush1.msra.mxu0 0.0
    %1024 = vmatprep.subr.mxu0 0.0
    %1025 = vmatpush1.msra.mxu0 0.0
    %1026 = vmatprep.subr.mxu0 0.0
    %1027 = vmatpush1.msra.mxu0 %v989
    %1028 = vmatprep.subr.mxu0 0.0
    %1029 = vmatpush1.msra.mxu0 %v987
    %1030 = vmatprep.subr.mxu0 0.0
    %1031 = vmatpush2.msra.mxu0 0.0
    %1032 = vmatprep.subr.mxu0 0.0
    %1033 = vmatpush2.msra.mxu0 0.0
    %1034 = vmatprep.subr.mxu0 0.0
    %1035 = vmatpush2.msra.mxu0 0.0
    %1036 = vmatprep.subr.mxu0 0.0
    %1037 = vmatpush2.msra.mxu0 0.0
    %1038 = vmatprep.subr.mxu0 0.0
    %1039 = vmatpush2.msra.mxu0 0.0
    %1040 = vmatprep.subr.mxu0 0.0
    %1041 = vmatpush2.msra.mxu0 0.0
    %1042 = vmatprep.subr.mxu0 0.0
    %1043 = vmatpush2.msra.mxu0 0.0
    %1044 = vmatprep.subr.mxu0 0.0
    %1045 = vmatpush2.msra.mxu0 0.0
    %1046 = vmatprep.subr.mxu0 0.0
    %1047 = vmatpush2.msra.mxu0 0.0
    %1048 = vmatprep.subr.mxu0 0.0
    %1049 = vmatpush2.msra.mxu0 0.0
    %1050 = vmatprep.subr.mxu0 0.0
    %1051 = vmatpush2.msra.mxu0 0.0
    %1052 = vmatprep.subr.mxu0 0.0
    %1053 = vmatpush2.msra.mxu0 0.0
    %1054 = vmatprep.subr.mxu0 0.0
    %1055 = vmatpush2.msra.mxu0 0.0
    %1056 = vmatprep.subr.mxu0 0.0
    %1057 = vmatpush2.msra.mxu0 0.0
    %1058 = vmatprep.subr.mxu0 0.0
    %1059 = vmatpush2.msra.mxu0 0.0
    %1060 = vmatprep.subr.mxu0 0.0
    %1061 = vmatpush2.msra.mxu0 0.0
    %1062 = vmatprep.mubr.f32.mxu0 0.0
    %1063 = vmatmul.mubr.f32.gmra.mxu0 %v993
    %v1064 = vpop.f32.mrf.mxu0
    %v1065 = vadd.f32 0.0, %v1064
    %v1066 = vpop.f32.mrf.mxu0
    %1067 = vmatprep.mubr.f32.mxu0 0.0
    %1068 = vmatmul.mubr.f32.gmra.mxu0 %v996
    %v1069 = vpop.f32.mrf.mxu0
    %v1070 = vadd.f32 0.0, %v1069
    %v1071 = vpop.f32.mrf.mxu0
    %1072 = vdwg.mxu0
    %1075 = vrot.lane.b32.xlu0 %v891, 8
    %v1076 = vpop.permute.xlu0 %1075
    %1077 = vrot.lane.b32.xlu0 %v896, 8
    %v1078 = vpop.permute.xlu0 %1077
    %1083 = vrot.lane.b32.xlu0 %v978, 16
    %v1084 = vpop.permute.xlu0 %1083
    %1085 = vrot.lane.b32.xlu0 %v983, 16
    %v1086 = vpop.permute.xlu0 %1085
    %1091 = vrot.lane.b32.xlu0 %v1065, 24
    %v1092 = vpop.permute.xlu0 %1091
    %1093 = vrot.lane.b32.xlu0 %v1070, 24
    %v1094 = vpop.permute.xlu0 %1093
    %v1097 = vsel %vm275, %v804, %v1076
    %v1098 = vsel %vm275, %v809, %v1078
    %v1099 = vsel %vm636, %v1097, %v1084
    %v1100 = vsel %vm636, %v1098, %v1086
    %vm1101 = vcmask 195584
    %v1102 = vsel %vm1101, %v1099, %v1092
    %v1103 = vsel %vm1101, %v1100, %v1094
    %v1105 = vsel %vm115, %v1102, 0
    %v1108 = vsel %vm115, %v1103, 0
    %1110 = vmatprep.subr.mxu0 0.0
    %1111 = vmatpush1.msra.mxu0 0.0
    %1112 = vmatprep.subr.mxu0 0.0
    %1113 = vmatpush1.msra.mxu0 0.0
    %1114 = vmatprep.subr.mxu0 0.0
    %1115 = vmatpush1.msra.mxu0 0.0
    %1116 = vmatprep.subr.mxu0 0.0
    %1117 = vmatpush1.msra.mxu0 0.0
    %1118 = vmatprep.subr.mxu0 0.0
    %1119 = vmatpush1.msra.mxu0 0.0
    %1120 = vmatprep.subr.mxu0 0.0
    %1121 = vmatpush1.msra.mxu0 0.0
    %1122 = vmatprep.subr.mxu0 0.0
    %1123 = vmatpush1.msra.mxu0 0.0
    %1124 = vmatprep.subr.mxu0 0.0
    %1125 = vmatpush1.msra.mxu0 0.0
    %1126 = vmatprep.subr.mxu0 0.0
    %1127 = vmatpush1.msra.mxu0 0.0
    %1128 = vmatprep.subr.mxu0 0.0
    %1129 = vmatpush1.msra.mxu0 0.0
    %1130 = vmatprep.subr.mxu0 0.0
    %1131 = vmatpush1.msra.mxu0 0.0
    %1132 = vmatprep.subr.mxu0 0.0
    %1133 = vmatpush1.msra.mxu0 0.0
    %1134 = vmatprep.subr.mxu0 0.0
    %1135 = vmatpush1.msra.mxu0 %v99
    %1136 = vmatprep.subr.mxu0 0.0
    %1137 = vmatpush1.msra.mxu0 %v98
    %1138 = vmatprep.subr.mxu0 0.0
    %1139 = vmatpush1.msra.mxu0 %v97
    %1140 = vmatprep.subr.mxu0 0.0
    %1141 = vmatpush1.msra.mxu0 %v96
    %1142 = vmatprep.subr.mxu0 0.0
    %1143 = vmatpush2.msra.mxu0 0.0
    %1144 = vmatprep.subr.mxu0 0.0
    %1145 = vmatpush2.msra.mxu0 0.0
    %1146 = vmatprep.subr.mxu0 0.0
    %1147 = vmatpush2.msra.mxu0 0.0
    %1148 = vmatprep.subr.mxu0 0.0
    %1149 = vmatpush2.msra.mxu0 0.0
    %1150 = vmatprep.subr.mxu0 0.0
    %1151 = vmatpush2.msra.mxu0 0.0
    %1152 = vmatprep.subr.mxu0 0.0
    %1153 = vmatpush2.msra.mxu0 0.0
    %1154 = vmatprep.subr.mxu0 0.0
    %1155 = vmatpush2.msra.mxu0 0.0
    %1156 = vmatprep.subr.mxu0 0.0
    %1157 = vmatpush2.msra.mxu0 0.0
    %1158 = vmatprep.subr.mxu0 0.0
    %1159 = vmatpush2.msra.mxu0 0.0
    %1160 = vmatprep.subr.mxu0 0.0
    %1161 = vmatpush2.msra.mxu0 0.0
    %1162 = vmatprep.subr.mxu0 0.0
    %1163 = vmatpush2.msra.mxu0 0.0
    %1164 = vmatprep.subr.mxu0 0.0
    %1165 = vmatpush2.msra.mxu0 0.0
    %1166 = vmatprep.subr.mxu0 0.0
    %1167 = vmatpush2.msra.mxu0 0.0
    %1168 = vmatprep.subr.mxu0 0.0
    %1169 = vmatpush2.msra.mxu0 0.0
    %1170 = vmatprep.subr.mxu0 0.0
    %1171 = vmatpush2.msra.mxu0 0.0
    %1172 = vmatprep.subr.mxu0 0.0
    %1173 = vmatpush2.msra.mxu0 0.0
    %1174 = vmatprep.mubr.f32.mxu0 0.0
    %1175 = vmatmul.mubr.f32.gmra.mxu0 %v1105
    %v1176 = vpop.f32.mrf.mxu0
    %v1177 = vadd.f32 0.0, %v1176
    %v1178 = vpop.f32.mrf.mxu0
    %1179 = vmatprep.mubr.f32.mxu0 0.0
    %1180 = vmatmul.mubr.f32.gmra.mxu0 %v1108
    %v1181 = vpop.f32.mrf.mxu0
    %v1182 = vadd.f32 0.0, %v1181
    %v1183 = vpop.f32.mrf.mxu0
    %1184 = vdwg.mxu0
    %v1185 = vadd.f32 %v92, %v1177
    %v1186 = vadd.f32 %v93, %v1182
    %v1187 = vlaneseq
    %v1188 = vshrl.u32 %v1187, 7
    %v1189 = vsub.s32 0, %v1188
    %v1190 = vrot.slane %v112, %v1189
    %v1191 = vadd.f32 %v1185, %v1190
    %v1192 = vadd.f32 %v1186, %v1190
    %s1193 = sld [smem:[#allocation8 + $0x2]]
    %s1194 = sld [smem:[#allocation8 + $0x3]]
    %v1195 = vsel %vm115, %v1191, 0.0
    %1196 = vadd.xlane.f32.xlu0 %v1195
    %v1197 = vpop.xlane.xlu0 %1196
    %v1198 = vsel %vm115, %v1192, 0.0
    %1199 = vadd.xlane.f32.xlu0 %v1198
    %v1200 = vpop.xlane.xlu0 %1199
    %v1201 = vmul.f32 %v1197, %v122
    %v1202 = vmul.f32 %v1200, %v122
    %v1203 = vsub.f32 %v1191, %v1201
    %v1204 = vsub.f32 %v1192, %v1202
    %v1205 = vmul.f32 %v1203, %v1203
    %v1206 = vmul.f32 %v1204, %v1204
    %v1207 = vsel %vm115, %v1205, 0.0
    %1208 = vadd.xlane.f32.xlu0 %v1207
    %v1209 = vpop.xlane.xlu0 %1208
    %v1210 = vsel %vm115, %v1206, 0.0
    %1211 = vadd.xlane.f32.xlu0 %v1210
    %v1212 = vpop.xlane.xlu0 %1211
    %v1213 = vmul.f32 %v1209, 0.032258064
    %v1214 = vmul.f32 %v1212, 0.032258064
    %v1215 = vrsqrt.pop %v1213
    %v1216 = vmul.f32 %v1213, %v1215
    %vm1217 = vcmp.eq.f32.partialorder %v1213, inf
    %v1218 = vsel %vm1217, %v1213, %v1216
    %vm1219 = vcmp.eq.f32.partialorder %v1213, 0.0
    %v1220 = vand.u32 %v1213, 2147483648
    %v1221 = vsel %vm1219, %v1220, %v1218
    %v1222 = vrsqrt.pop %v1214
    %v1223 = vmul.f32 %v1214, %v1222
    %vm1224 = vcmp.eq.f32.partialorder %v1214, inf
    %v1225 = vsel %vm1224, %v1214, %v1223
    %vm1226 = vcmp.eq.f32.partialorder %v1214, 0.0
    %v1227 = vand.u32 %v1214, 2147483648
    %v1228 = vsel %vm1226, %v1227, %v1225
    %v1229 = vadd.f32 %v1221, 1e-06
    %v1230 = vadd.f32 %v1228, 1e-06
    %v1231 = vrcp.pop %v1229
    %v1232 = vrcp.pop %v1230
    %v1233 = vstv %s1193
    %v1234 = vmul.f32 %v1233, %v1203
    %v1235 = vmul.f32 %v1233, %v1204
    %v1236 = vmul.f32 %v1234, %v1231
    %v1237 = vmul.f32 %v1235, %v1232
    %v1238 = vstv %s1194
    %v1239 = vadd.f32 %v1236, %v1238
    %v1240 = vadd.f32 %v1237, %v1238
    %v1241 = vld [vmem:[%s6] sm:$0xff]
    %v1242 = vld [vmem:[%s6 + $0x8] sm:$0xff]
    %v1243 = vld [vmem:[%s6 + $0x10] sm:$0xff]
    %v1244 = vld [vmem:[%s6 + $0x18] sm:$0xff]
    %v1245 = vld [vmem:[%s7] sm:$0x1]
    %v1247 = vlaneseq
    %v1248 = vshrl.u32 %v1247, 7
    %v1249 = vsub.s32 0, %v1248
    %v1250 = vrot.slane %v1245, %v1249
    %v1253 = vsel %vm115, %v1239, 0
    %v1256 = vsel %vm115, %v1240, 0
    %1258 = vmatprep.subr.mxu0 0.0
    %1259 = vmatpush1.msra.mxu0 0.0
    %1260 = vmatprep.subr.mxu0 0.0
    %1261 = vmatpush1.msra.mxu0 0.0
    %1262 = vmatprep.subr.mxu0 0.0
    %1263 = vmatpush1.msra.mxu0 0.0
    %1264 = vmatprep.subr.mxu0 0.0
    %1265 = vmatpush1.msra.mxu0 0.0
    %1266 = vmatprep.subr.mxu0 0.0
    %1267 = vmatpush1.msra.mxu0 0.0
    %1268 = vmatprep.subr.mxu0 0.0
    %1269 = vmatpush1.msra.mxu0 0.0
    %1270 = vmatprep.subr.mxu0 0.0
    %1271 = vmatpush1.msra.mxu0 0.0
    %1272 = vmatprep.subr.mxu0 0.0
    %1273 = vmatpush1.msra.mxu0 0.0
    %1274 = vmatprep.subr.mxu0 0.0
    %1275 = vmatpush1.msra.mxu0 0.0
    %1276 = vmatprep.subr.mxu0 0.0
    %1277 = vmatpush1.msra.mxu0 0.0
    %1278 = vmatprep.subr.mxu0 0.0
    %1279 = vmatpush1.msra.mxu0 0.0
    %1280 = vmatprep.subr.mxu0 0.0
    %1281 = vmatpush1.msra.mxu0 0.0
    %1282 = vmatprep.subr.mxu0 0.0
    %1283 = vmatpush1.msra.mxu0 %v1244
    %1284 = vmatprep.subr.mxu0 0.0
    %1285 = vmatpush1.msra.mxu0 %v1243
    %1286 = vmatprep.subr.mxu0 0.0
    %1287 = vmatpush1.msra.mxu0 %v1242
    %1288 = vmatprep.subr.mxu0 0.0
    %1289 = vmatpush1.msra.mxu0 %v1241
    %1290 = vmatprep.subr.mxu0 0.0
    %1291 = vmatpush2.msra.mxu0 0.0
    %1292 = vmatprep.subr.mxu0 0.0
    %1293 = vmatpush2.msra.mxu0 0.0
    %1294 = vmatprep.subr.mxu0 0.0
    %1295 = vmatpush2.msra.mxu0 0.0
    %1296 = vmatprep.subr.mxu0 0.0
    %1297 = vmatpush2.msra.mxu0 0.0
    %1298 = vmatprep.subr.mxu0 0.0
    %1299 = vmatpush2.msra.mxu0 0.0
    %1300 = vmatprep.subr.mxu0 0.0
    %1301 = vmatpush2.msra.mxu0 0.0
    %1302 = vmatprep.subr.mxu0 0.0
    %1303 = vmatpush2.msra.mxu0 0.0
    %1304 = vmatprep.subr.mxu0 0.0
    %1305 = vmatpush2.msra.mxu0 0.0
    %1306 = vmatprep.subr.mxu0 0.0
    %1307 = vmatpush2.msra.mxu0 0.0
    %1308 = vmatprep.subr.mxu0 0.0
    %1309 = vmatpush2.msra.mxu0 0.0
    %1310 = vmatprep.subr.mxu0 0.0
    %1311 = vmatpush2.msra.mxu0 0.0
    %1312 = vmatprep.subr.mxu0 0.0
    %1313 = vmatpush2.msra.mxu0 0.0
    %1314 = vmatprep.subr.mxu0 0.0
    %1315 = vmatpush2.msra.mxu0 0.0
    %1316 = vmatprep.subr.mxu0 0.0
    %1317 = vmatpush2.msra.mxu0 0.0
    %1318 = vmatprep.subr.mxu0 0.0
    %1319 = vmatpush2.msra.mxu0 0.0
    %1320 = vmatprep.subr.mxu0 0.0
    %1321 = vmatpush2.msra.mxu0 0.0
    %1322 = vmatprep.mubr.f32.mxu0 0.0
    %1323 = vmatmul.mubr.f32.gmra.mxu0 %v1253
    %v1324 = vpop.f32.mrf.mxu0
    %v1325 = vadd.f32 %v1250, %v1324
    %v1326 = vpop.f32.mrf.mxu0
    %1327 = vmatprep.mubr.f32.mxu0 0.0
    %1328 = vmatmul.mubr.f32.gmra.mxu0 %v1256
    %v1329 = vpop.f32.mrf.mxu0
    %v1330 = vadd.f32 %v1250, %v1329
    %v1331 = vpop.f32.mrf.mxu0
    %1332 = vdwg.mxu0
    %v1333 = vld [vmem:[%s8] sm:$0xff]
    %v1334 = vld [vmem:[%s8 + $0x8] sm:$0xff]
    %v1335 = vld [vmem:[%s8 + $0x10] sm:$0xff]
    %v1336 = vld [vmem:[%s8 + $0x18] sm:$0xff]
    %v1337 = vld [vmem:[%s9] sm:$0x1]
    %v1339 = vlaneseq
    %v1340 = vshrl.u32 %v1339, 7
    %v1341 = vsub.s32 0, %v1340
    %v1342 = vrot.slane %v1337, %v1341
    %v1345 = vsel %vm115, %v94, 0
    %v1348 = vsel %vm115, %v95, 0
    %1350 = vmatprep.subr.mxu0 0.0
    %1351 = vmatpush1.msra.mxu0 0.0
    %1352 = vmatprep.subr.mxu0 0.0
    %1353 = vmatpush1.msra.mxu0 0.0
    %1354 = vmatprep.subr.mxu0 0.0
    %1355 = vmatpush1.msra.mxu0 0.0
    %1356 = vmatprep.subr.mxu0 0.0
    %1357 = vmatpush1.msra.mxu0 0.0
    %1358 = vmatprep.subr.mxu0 0.0
    %1359 = vmatpush1.msra.mxu0 0.0
    %1360 = vmatprep.subr.mxu0 0.0
    %1361 = vmatpush1.msra.mxu0 0.0
    %1362 = vmatprep.subr.mxu0 0.0
    %1363 = vmatpush1.msra.mxu0 0.0
    %1364 = vmatprep.subr.mxu0 0.0
    %1365 = vmatpush1.msra.mxu0 0.0
    %1366 = vmatprep.subr.mxu0 0.0
    %1367 = vmatpush1.msra.mxu0 0.0
    %1368 = vmatprep.subr.mxu0 0.0
    %1369 = vmatpush1.msra.mxu0 0.0
    %1370 = vmatprep.subr.mxu0 0.0
    %1371 = vmatpush1.msra.mxu0 0.0
    %1372 = vmatprep.subr.mxu0 0.0
    %1373 = vmatpush1.msra.mxu0 0.0
    %1374 = vmatprep.subr.mxu0 0.0
    %1375 = vmatpush1.msra.mxu0 %v1336
    %1376 = vmatprep.subr.mxu0 0.0
    %1377 = vmatpush1.msra.mxu0 %v1335
    %1378 = vmatprep.subr.mxu0 0.0
    %1379 = vmatpush1.msra.mxu0 %v1334
    %1380 = vmatprep.subr.mxu0 0.0
    %1381 = vmatpush1.msra.mxu0 %v1333
    %1382 = vmatprep.subr.mxu0 0.0
    %1383 = vmatpush2.msra.mxu0 0.0
    %1384 = vmatprep.subr.mxu0 0.0
    %1385 = vmatpush2.msra.mxu0 0.0
    %1386 = vmatprep.subr.mxu0 0.0
    %1387 = vmatpush2.msra.mxu0 0.0
    %1388 = vmatprep.subr.mxu0 0.0
    %1389 = vmatpush2.msra.mxu0 0.0
    %1390 = vmatprep.subr.mxu0 0.0
    %1391 = vmatpush2.msra.mxu0 0.0
    %1392 = vmatprep.subr.mxu0 0.0
    %1393 = vmatpush2.msra.mxu0 0.0
    %1394 = vmatprep.subr.mxu0 0.0
    %1395 = vmatpush2.msra.mxu0 0.0
    %1396 = vmatprep.subr.mxu0 0.0
    %1397 = vmatpush2.msra.mxu0 0.0
    %1398 = vmatprep.subr.mxu0 0.0
    %1399 = vmatpush2.msra.mxu0 0.0
    %1400 = vmatprep.subr.mxu0 0.0
    %1401 = vmatpush2.msra.mxu0 0.0
    %1402 = vmatprep.subr.mxu0 0.0
    %1403 = vmatpush2.msra.mxu0 0.0
    %1404 = vmatprep.subr.mxu0 0.0
    %1405 = vmatpush2.msra.mxu0 0.0
    %1406 = vmatprep.subr.mxu0 0.0
    %1407 = vmatpush2.msra.mxu0 0.0
    %1408 = vmatprep.subr.mxu0 0.0
    %1409 = vmatpush2.msra.mxu0 0.0
    %1410 = vmatprep.subr.mxu0 0.0
    %1411 = vmatpush2.msra.mxu0 0.0
    %1412 = vmatprep.subr.mxu0 0.0
    %1413 = vmatpush2.msra.mxu0 0.0
    %1414 = vmatprep.mubr.f32.mxu0 0.0
    %1415 = vmatmul.mubr.f32.gmra.mxu0 %v1345
    %v1416 = vpop.f32.mrf.mxu0
    %v1417 = vadd.f32 %v1342, %v1416
    %v1418 = vpop.f32.mrf.mxu0
    %1419 = vmatprep.mubr.f32.mxu0 0.0
    %1420 = vmatmul.mubr.f32.gmra.mxu0 %v1348
    %v1421 = vpop.f32.mrf.mxu0
    %v1422 = vadd.f32 %v1342, %v1421
    %v1423 = vpop.f32.mrf.mxu0
    %1424 = vdwg.mxu0
    %v1425 = vld [vmem:[#allocation6] sm:$0xff]
    %v1426 = vld [vmem:[#allocation6 + $0x8] sm:$0xff]
    %1429 = vrot.lane.b32.xlu0 %v1325, 120
    %v1430 = vpop.permute.xlu0 %1429
    %1431 = vrot.lane.b32.xlu0 %v1330, 120
    %v1432 = vpop.permute.xlu0 %1431
    %1433 = vrot.lane.b32.xlu0 %v1325, 112
    %v1434 = vpop.permute.xlu0 %1433
    %1435 = vrot.lane.b32.xlu0 %v1330, 112
    %v1436 = vpop.permute.xlu0 %1435
    %1437 = vrot.lane.b32.xlu0 %v1325, 104
    %v1438 = vpop.permute.xlu0 %1437
    %1439 = vrot.lane.b32.xlu0 %v1330, 104
    %v1440 = vpop.permute.xlu0 %1439
    %1443 = vrot.lane.b32.xlu0 %v1417, 120
    %v1444 = vpop.permute.xlu0 %1443
    %1445 = vrot.lane.b32.xlu0 %v1422, 120
    %v1446 = vpop.permute.xlu0 %1445
    %1447 = vrot.lane.b32.xlu0 %v1417, 112
    %v1448 = vpop.permute.xlu0 %1447
    %1449 = vrot.lane.b32.xlu0 %v1422, 112
    %v1450 = vpop.permute.xlu0 %1449
    %1451 = vrot.lane.b32.xlu0 %v1417, 104
    %v1452 = vpop.permute.xlu0 %1451
    %1453 = vrot.lane.b32.xlu0 %v1422, 104
    %v1454 = vpop.permute.xlu0 %1453
    %v1455 = vsel %vm275, %v1325, 0
    %v1457 = vsel %vm275, %v1330, 0
    %v1459 = vsel %vm275, %v1417, 0
    %v1461 = vsel %vm275, %v1422, 0
    %1463 = vmatprep.subr.mxu0 0.0
    %1464 = vmatpush1.xpose.msra.mxu0 0.0
    %1465 = vmatprep.subr.mxu0 0.0
    %1466 = vmatpush1.xpose.msra.mxu0 0.0
    %1467 = vmatprep.subr.mxu0 0.0
    %1468 = vmatpush1.xpose.msra.mxu0 0.0
    %1469 = vmatprep.subr.mxu0 0.0
    %1470 = vmatpush1.xpose.msra.mxu0 0.0
    %1471 = vmatprep.subr.mxu0 0.0
    %1472 = vmatpush1.xpose.msra.mxu0 0.0
    %1473 = vmatprep.subr.mxu0 0.0
    %1474 = vmatpush1.xpose.msra.mxu0 0.0
    %1475 = vmatprep.subr.mxu0 0.0
    %1476 = vmatpush1.xpose.msra.mxu0 0.0
    %1477 = vmatprep.subr.mxu0 0.0
    %1478 = vmatpush1.xpose.msra.mxu0 0.0
    %1479 = vmatprep.subr.mxu0 0.0
    %1480 = vmatpush1.xpose.msra.mxu0 0.0
    %1481 = vmatprep.subr.mxu0 0.0
    %1482 = vmatpush1.xpose.msra.mxu0 0.0
    %1483 = vmatprep.subr.mxu0 0.0
    %1484 = vmatpush1.xpose.msra.mxu0 0.0
    %1485 = vmatprep.subr.mxu0 0.0
    %1486 = vmatpush1.xpose.msra.mxu0 0.0
    %1487 = vmatprep.subr.mxu0 0.0
    %1488 = vmatpush1.xpose.msra.mxu0 0.0
    %1489 = vmatprep.subr.mxu0 0.0
    %1490 = vmatpush1.xpose.msra.mxu0 0.0
    %1491 = vmatprep.subr.mxu0 0.0
    %1492 = vmatpush1.xpose.msra.mxu0 %v1461
    %1493 = vmatprep.subr.mxu0 0.0
    %1494 = vmatpush1.xpose.msra.mxu0 %v1459
    %1495 = vmatprep.subr.mxu0 0.0
    %1496 = vmatpush2.xpose.msra.mxu0 0.0
    %1497 = vmatprep.subr.mxu0 0.0
    %1498 = vmatpush2.xpose.msra.mxu0 0.0
    %1499 = vmatprep.subr.mxu0 0.0
    %1500 = vmatpush2.xpose.msra.mxu0 0.0
    %1501 = vmatprep.subr.mxu0 0.0
    %1502 = vmatpush2.xpose.msra.mxu0 0.0
    %1503 = vmatprep.subr.mxu0 0.0
    %1504 = vmatpush2.xpose.msra.mxu0 0.0
    %1505 = vmatprep.subr.mxu0 0.0
    %1506 = vmatpush2.xpose.msra.mxu0 0.0
    %1507 = vmatprep.subr.mxu0 0.0
    %1508 = vmatpush2.xpose.msra.mxu0 0.0
    %1509 = vmatprep.subr.mxu0 0.0
    %1510 = vmatpush2.xpose.msra.mxu0 0.0
    %1511 = vmatprep.subr.mxu0 0.0
    %1512 = vmatpush2.xpose.msra.mxu0 0.0
    %1513 = vmatprep.subr.mxu0 0.0
    %1514 = vmatpush2.xpose.msra.mxu0 0.0
    %1515 = vmatprep.subr.mxu0 0.0
    %1516 = vmatpush2.xpose.msra.mxu0 0.0
    %1517 = vmatprep.subr.mxu0 0.0
    %1518 = vmatpush2.xpose.msra.mxu0 0.0
    %1519 = vmatprep.subr.mxu0 0.0
    %1520 = vmatpush2.xpose.msra.mxu0 0.0
    %1521 = vmatprep.subr.mxu0 0.0
    %1522 = vmatpush2.xpose.msra.mxu0 0.0
    %1523 = vmatprep.subr.mxu0 0.0
    %1524 = vmatpush2.xpose.msra.mxu0 0.0
    %1525 = vmatprep.subr.mxu0 0.0
    %1526 = vmatpush2.xpose.msra.mxu0 0.0
    %1527 = vmatprep.mubr.f32.mxu0 0.0
    %1528 = vmatmul.mubr.f32.gmra.mxu0 %v1455
    %v1529 = vpop.f32.mrf.mxu0
    %v1530 = vadd.f32 0.0, %v1529
    %v1531 = vpop.f32.mrf.mxu0
    %1532 = vmatprep.mubr.f32.mxu0 0.0
    %1533 = vmatmul.mubr.f32.gmra.mxu0 %v1457
    %v1534 = vpop.f32.mrf.mxu0
    %v1535 = vadd.f32 0.0, %v1534
    %v1536 = vpop.f32.mrf.mxu0
    %1537 = vdwg.mxu0
    %v1538 = vsel %vm275, %v1430, 0
    %v1540 = vsel %vm275, %v1432, 0
    %v1542 = vsel %vm275, %v1444, 0
    %v1544 = vsel %vm275, %v1446, 0
    %1546 = vmatprep.subr.mxu0 0.0
    %1547 = vmatpush1.xpose.msra.mxu0 0.0
    %1548 = vmatprep.subr.mxu0 0.0
    %1549 = vmatpush1.xpose.msra.mxu0 0.0
    %1550 = vmatprep.subr.mxu0 0.0
    %1551 = vmatpush1.xpose.msra.mxu0 0.0
    %1552 = vmatprep.subr.mxu0 0.0
    %1553 = vmatpush1.xpose.msra.mxu0 0.0
    %1554 = vmatprep.subr.mxu0 0.0
    %1555 = vmatpush1.xpose.msra.mxu0 0.0
    %1556 = vmatprep.subr.mxu0 0.0
    %1557 = vmatpush1.xpose.msra.mxu0 0.0
    %1558 = vmatprep.subr.mxu0 0.0
    %1559 = vmatpush1.xpose.msra.mxu0 0.0
    %1560 = vmatprep.subr.mxu0 0.0
    %1561 = vmatpush1.xpose.msra.mxu0 0.0
    %1562 = vmatprep.subr.mxu0 0.0
    %1563 = vmatpush1.xpose.msra.mxu0 0.0
    %1564 = vmatprep.subr.mxu0 0.0
    %1565 = vmatpush1.xpose.msra.mxu0 0.0
    %1566 = vmatprep.subr.mxu0 0.0
    %1567 = vmatpush1.xpose.msra.mxu0 0.0
    %1568 = vmatprep.subr.mxu0 0.0
    %1569 = vmatpush1.xpose.msra.mxu0 0.0
    %1570 = vmatprep.subr.mxu0 0.0
    %1571 = vmatpush1.xpose.msra.mxu0 0.0
    %1572 = vmatprep.subr.mxu0 0.0
    %1573 = vmatpush1.xpose.msra.mxu0 0.0
    %1574 = vmatprep.subr.mxu0 0.0
    %1575 = vmatpush1.xpose.msra.mxu0 %v1544
    %1576 = vmatprep.subr.mxu0 0.0
    %1577 = vmatpush1.xpose.msra.mxu0 %v1542
    %1578 = vmatprep.subr.mxu0 0.0
    %1579 = vmatpush2.xpose.msra.mxu0 0.0
    %1580 = vmatprep.subr.mxu0 0.0
    %1581 = vmatpush2.xpose.msra.mxu0 0.0
    %1582 = vmatprep.subr.mxu0 0.0
    %1583 = vmatpush2.xpose.msra.mxu0 0.0
    %1584 = vmatprep.subr.mxu0 0.0
    %1585 = vmatpush2.xpose.msra.mxu0 0.0
    %1586 = vmatprep.subr.mxu0 0.0
    %1587 = vmatpush2.xpose.msra.mxu0 0.0
    %1588 = vmatprep.subr.mxu0 0.0
    %1589 = vmatpush2.xpose.msra.mxu0 0.0
    %1590 = vmatprep.subr.mxu0 0.0
    %1591 = vmatpush2.xpose.msra.mxu0 0.0
    %1592 = vmatprep.subr.mxu0 0.0
    %1593 = vmatpush2.xpose.msra.mxu0 0.0
    %1594 = vmatprep.subr.mxu0 0.0
    %1595 = vmatpush2.xpose.msra.mxu0 0.0
    %1596 = vmatprep.subr.mxu0 0.0
    %1597 = vmatpush2.xpose.msra.mxu0 0.0
    %1598 = vmatprep.subr.mxu0 0.0
    %1599 = vmatpush2.xpose.msra.mxu0 0.0
    %1600 = vmatprep.subr.mxu0 0.0
    %1601 = vmatpush2.xpose.msra.mxu0 0.0
    %1602 = vmatprep.subr.mxu0 0.0
    %1603 = vmatpush2.xpose.msra.mxu0 0.0
    %1604 = vmatprep.subr.mxu0 0.0
    %1605 = vmatpush2.xpose.msra.mxu0 0.0
    %1606 = vmatprep.subr.mxu0 0.0
    %1607 = vmatpush2.xpose.msra.mxu0 0.0
    %1608 = vmatprep.subr.mxu0 0.0
    %1609 = vmatpush2.xpose.msra.mxu0 0.0
    %1610 = vmatprep.mubr.f32.mxu0 0.0
    %1611 = vmatmul.mubr.f32.gmra.mxu0 %v1538
    %v1612 = vpop.f32.mrf.mxu0
    %v1613 = vadd.f32 0.0, %v1612
    %v1614 = vpop.f32.mrf.mxu0
    %1615 = vmatprep.mubr.f32.mxu0 0.0
    %1616 = vmatmul.mubr.f32.gmra.mxu0 %v1540
    %v1617 = vpop.f32.mrf.mxu0
    %v1618 = vadd.f32 0.0, %v1617
    %v1619 = vpop.f32.mrf.mxu0
    %1620 = vdwg.mxu0
    %v1621 = vsel %vm275, %v1434, 0
    %v1623 = vsel %vm275, %v1436, 0
    %v1625 = vsel %vm275, %v1448, 0
    %v1627 = vsel %vm275, %v1450, 0
    %1629 = vmatprep.subr.mxu0 0.0
    %1630 = vmatpush1.xpose.msra.mxu0 0.0
    %1631 = vmatprep.subr.mxu0 0.0
    %1632 = vmatpush1.xpose.msra.mxu0 0.0
    %1633 = vmatprep.subr.mxu0 0.0
    %1634 = vmatpush1.xpose.msra.mxu0 0.0
    %1635 = vmatprep.subr.mxu0 0.0
    %1636 = vmatpush1.xpose.msra.mxu0 0.0
    %1637 = vmatprep.subr.mxu0 0.0
    %1638 = vmatpush1.xpose.msra.mxu0 0.0
    %1639 = vmatprep.subr.mxu0 0.0
    %1640 = vmatpush1.xpose.msra.mxu0 0.0
    %1641 = vmatprep.subr.mxu0 0.0
    %1642 = vmatpush1.xpose.msra.mxu0 0.0
    %1643 = vmatprep.subr.mxu0 0.0
    %1644 = vmatpush1.xpose.msra.mxu0 0.0
    %1645 = vmatprep.subr.mxu0 0.0
    %1646 = vmatpush1.xpose.msra.mxu0 0.0
    %1647 = vmatprep.subr.mxu0 0.0
    %1648 = vmatpush1.xpose.msra.mxu0 0.0
    %1649 = vmatprep.subr.mxu0 0.0
    %1650 = vmatpush1.xpose.msra.mxu0 0.0
    %1651 = vmatprep.subr.mxu0 0.0
    %1652 = vmatpush1.xpose.msra.mxu0 0.0
    %1653 = vmatprep.subr.mxu0 0.0
    %1654 = vmatpush1.xpose.msra.mxu0 0.0
    %1655 = vmatprep.subr.mxu0 0.0
    %1656 = vmatpush1.xpose.msra.mxu0 0.0
    %1657 = vmatprep.subr.mxu0 0.0
    %1658 = vmatpush1.xpose.msra.mxu0 %v1627
    %1659 = vmatprep.subr.mxu0 0.0
    %1660 = vmatpush1.xpose.msra.mxu0 %v1625
    %1661 = vmatprep.subr.mxu0 0.0
    %1662 = vmatpush2.xpose.msra.mxu0 0.0
    %1663 = vmatprep.subr.mxu0 0.0
    %1664 = vmatpush2.xpose.msra.mxu0 0.0
    %1665 = vmatprep.subr.mxu0 0.0
    %1666 = vmatpush2.xpose.msra.mxu0 0.0
    %1667 = vmatprep.subr.mxu0 0.0
    %1668 = vmatpush2.xpose.msra.mxu0 0.0
    %1669 = vmatprep.subr.mxu0 0.0
    %1670 = vmatpush2.xpose.msra.mxu0 0.0
    %1671 = vmatprep.subr.mxu0 0.0
    %1672 = vmatpush2.xpose.msra.mxu0 0.0
    %1673 = vmatprep.subr.mxu0 0.0
    %1674 = vmatpush2.xpose.msra.mxu0 0.0
    %1675 = vmatprep.subr.mxu0 0.0
    %1676 = vmatpush2.xpose.msra.mxu0 0.0
    %1677 = vmatprep.subr.mxu0 0.0
    %1678 = vmatpush2.xpose.msra.mxu0 0.0
    %1679 = vmatprep.subr.mxu0 0.0
    %1680 = vmatpush2.xpose.msra.mxu0 0.0
    %1681 = vmatprep.subr.mxu0 0.0
    %1682 = vmatpush2.xpose.msra.mxu0 0.0
    %1683 = vmatprep.subr.mxu0 0.0
    %1684 = vmatpush2.xpose.msra.mxu0 0.0
    %1685 = vmatprep.subr.mxu0 0.0
    %1686 = vmatpush2.xpose.msra.mxu0 0.0
    %1687 = vmatprep.subr.mxu0 0.0
    %1688 = vmatpush2.xpose.msra.mxu0 0.0
    %1689 = vmatprep.subr.mxu0 0.0
    %1690 = vmatpush2.xpose.msra.mxu0 0.0
    %1691 = vmatprep.subr.mxu0 0.0
    %1692 = vmatpush2.xpose.msra.mxu0 0.0
    %1693 = vmatprep.mubr.f32.mxu0 0.0
    %1694 = vmatmul.mubr.f32.gmra.mxu0 %v1621
    %v1695 = vpop.f32.mrf.mxu0
    %v1696 = vadd.f32 0.0, %v1695
    %v1697 = vpop.f32.mrf.mxu0
    %1698 = vmatprep.mubr.f32.mxu0 0.0
    %1699 = vmatmul.mubr.f32.gmra.mxu0 %v1623
    %v1700 = vpop.f32.mrf.mxu0
    %v1701 = vadd.f32 0.0, %v1700
    %v1702 = vpop.f32.mrf.mxu0
    %1703 = vdwg.mxu0
    %v1704 = vsel %vm275, %v1438, 0
    %v1706 = vsel %vm275, %v1440, 0
    %v1708 = vsel %vm275, %v1452, 0
    %v1710 = vsel %vm275, %v1454, 0
    %1712 = vmatprep.subr.mxu0 0.0
    %1713 = vmatpush1.xpose.msra.mxu0 0.0
    %1714 = vmatprep.subr.mxu0 0.0
    %1715 = vmatpush1.xpose.msra.mxu0 0.0
    %1716 = vmatprep.subr.mxu0 0.0
    %1717 = vmatpush1.xpose.msra.mxu0 0.0
    %1718 = vmatprep.subr.mxu0 0.0
    %1719 = vmatpush1.xpose.msra.mxu0 0.0
    %1720 = vmatprep.subr.mxu0 0.0
    %1721 = vmatpush1.xpose.msra.mxu0 0.0
    %1722 = vmatprep.subr.mxu0 0.0
    %1723 = vmatpush1.xpose.msra.mxu0 0.0
    %1724 = vmatprep.subr.mxu0 0.0
    %1725 = vmatpush1.xpose.msra.mxu0 0.0
    %1726 = vmatprep.subr.mxu0 0.0
    %1727 = vmatpush1.xpose.msra.mxu0 0.0
    %1728 = vmatprep.subr.mxu0 0.0
    %1729 = vmatpush1.xpose.msra.mxu0 0.0
    %1730 = vmatprep.subr.mxu0 0.0
    %1731 = vmatpush1.xpose.msra.mxu0 0.0
    %1732 = vmatprep.subr.mxu0 0.0
    %1733 = vmatpush1.xpose.msra.mxu0 0.0
    %1734 = vmatprep.subr.mxu0 0.0
    %1735 = vmatpush1.xpose.msra.mxu0 0.0
    %1736 = vmatprep.subr.mxu0 0.0
    %1737 = vmatpush1.xpose.msra.mxu0 0.0
    %1738 = vmatprep.subr.mxu0 0.0
    %1739 = vmatpush1.xpose.msra.mxu0 0.0
    %1740 = vmatprep.subr.mxu0 0.0
    %1741 = vmatpush1.xpose.msra.mxu0 %v1710
    %1742 = vmatprep.subr.mxu0 0.0
    %1743 = vmatpush1.xpose.msra.mxu0 %v1708
    %1744 = vmatprep.subr.mxu0 0.0
    %1745 = vmatpush2.xpose.msra.mxu0 0.0
    %1746 = vmatprep.subr.mxu0 0.0
    %1747 = vmatpush2.xpose.msra.mxu0 0.0
    %1748 = vmatprep.subr.mxu0 0.0
    %1749 = vmatpush2.xpose.msra.mxu0 0.0
    %1750 = vmatprep.subr.mxu0 0.0
    %1751 = vmatpush2.xpose.msra.mxu0 0.0
    %1752 = vmatprep.subr.mxu0 0.0
    %1753 = vmatpush2.xpose.msra.mxu0 0.0
    %1754 = vmatprep.subr.mxu0 0.0
    %1755 = vmatpush2.xpose.msra.mxu0 0.0
    %1756 = vmatprep.subr.mxu0 0.0
    %1757 = vmatpush2.xpose.msra.mxu0 0.0
    %1758 = vmatprep.subr.mxu0 0.0
    %1759 = vmatpush2.xpose.msra.mxu0 0.0
    %1760 = vmatprep.subr.mxu0 0.0
    %1761 = vmatpush2.xpose.msra.mxu0 0.0
    %1762 = vmatprep.subr.mxu0 0.0
    %1763 = vmatpush2.xpose.msra.mxu0 0.0
    %1764 = vmatprep.subr.mxu0 0.0
    %1765 = vmatpush2.xpose.msra.mxu0 0.0
    %1766 = vmatprep.subr.mxu0 0.0
    %1767 = vmatpush2.xpose.msra.mxu0 0.0
    %1768 = vmatprep.subr.mxu0 0.0
    %1769 = vmatpush2.xpose.msra.mxu0 0.0
    %1770 = vmatprep.subr.mxu0 0.0
    %1771 = vmatpush2.xpose.msra.mxu0 0.0
    %1772 = vmatprep.subr.mxu0 0.0
    %1773 = vmatpush2.xpose.msra.mxu0 0.0
    %1774 = vmatprep.subr.mxu0 0.0
    %1775 = vmatpush2.xpose.msra.mxu0 0.0
    %1776 = vmatprep.mubr.f32.mxu0 0.0
    %1777 = vmatmul.mubr.f32.gmra.mxu0 %v1704
    %v1778 = vpop.f32.mrf.mxu0
    %v1779 = vadd.f32 0.0, %v1778
    %v1780 = vpop.f32.mrf.mxu0
    %1781 = vmatprep.mubr.f32.mxu0 0.0
    %1782 = vmatmul.mubr.f32.gmra.mxu0 %v1706
    %v1783 = vpop.f32.mrf.mxu0
    %v1784 = vadd.f32 0.0, %v1783
    %v1785 = vpop.f32.mrf.mxu0
    %1786 = vdwg.mxu0
    %v1787 = vmul.f32 %v1530, 0.35355338
    %v1788 = vmul.f32 %v1535, 0.35355338
    %v1789 = vmul.f32 %v1613, 0.35355338
    %v1790 = vmul.f32 %v1618, 0.35355338
    %v1791 = vmul.f32 %v1696, 0.35355338
    %v1792 = vmul.f32 %v1701, 0.35355338
    %v1793 = vmul.f32 %v1779, 0.35355338
    %v1794 = vmul.f32 %v1784, 0.35355338
    %v1795 = vadd.f32 %v1787, %v1425
    %v1796 = vadd.f32 %v1788, %v1426
    %v1797 = vadd.f32 %v1789, %v1425
    %v1798 = vadd.f32 %v1790, %v1426
    %v1799 = vadd.f32 %v1791, %v1425
    %v1800 = vadd.f32 %v1792, %v1426
    %v1801 = vadd.f32 %v1793, %v1425
    %v1802 = vadd.f32 %v1794, %v1426
    %v1803 = vsel %vm636, %v1795, -inf
    %1804 = vmax.xlane.f32.xlu0 %v1803
    %v1805 = vpop.xlane.xlu0 %1804
    %v1806 = vsel %vm636, %v1796, -inf
    %1807 = vmax.xlane.f32.xlu0 %v1806
    %v1808 = vpop.xlane.xlu0 %1807
    %v1809 = vsel %vm636, %v1797, -inf
    %1810 = vmax.xlane.f32.xlu0 %v1809
    %v1811 = vpop.xlane.xlu0 %1810
    %v1812 = vsel %vm636, %v1798, -inf
    %1813 = vmax.xlane.f32.xlu0 %v1812
    %v1814 = vpop.xlane.xlu0 %1813
    %v1815 = vsel %vm636, %v1799, -inf
    %1816 = vmax.xlane.f32.xlu0 %v1815
    %v1817 = vpop.xlane.xlu0 %1816
    %v1818 = vsel %vm636, %v1800, -inf
    %1819 = vmax.xlane.f32.xlu0 %v1818
    %v1820 = vpop.xlane.xlu0 %1819
    %v1821 = vsel %vm636, %v1801, -inf
    %1822 = vmax.xlane.f32.xlu0 %v1821
    %v1823 = vpop.xlane.xlu0 %1822
    %v1824 = vsel %vm636, %v1802, -inf
    %1825 = vmax.xlane.f32.xlu0 %v1824
    %v1826 = vpop.xlane.xlu0 %1825
    %v1827 = vsub.f32 %v1795, %v1805
    %v1828 = vsub.f32 %v1796, %v1808
    %v1829 = vsub.f32 %v1797, %v1811
    %v1830 = vsub.f32 %v1798, %v1814
    %v1831 = vsub.f32 %v1799, %v1817
    %v1832 = vsub.f32 %v1800, %v1820
    %v1833 = vsub.f32 %v1801, %v1823
    %v1834 = vsub.f32 %v1802, %v1826
    %v1835 = vmul.f32 %v1827, 1.442695
    %v1836 = vpow.pop %v1835
    %v1837 = vmul.f32 %v1828, 1.442695
    %v1838 = vpow.pop %v1837
    %v1839 = vmul.f32 %v1829, 1.442695
    %v1840 = vpow.pop %v1839
    %v1841 = vmul.f32 %v1830, 1.442695
    %v1842 = vpow.pop %v1841
    %v1843 = vmul.f32 %v1831, 1.442695
    %v1844 = vpow.pop %v1843
    %v1845 = vmul.f32 %v1832, 1.442695
    %v1846 = vpow.pop %v1845
    %v1847 = vmul.f32 %v1833, 1.442695
    %v1848 = vpow.pop %v1847
    %v1849 = vmul.f32 %v1834, 1.442695
    %v1850 = vpow.pop %v1849
    %v1851 = vsel %vm636, %v1836, 0.0
    %1852 = vadd.xlane.f32.xlu0 %v1851
    %v1853 = vpop.xlane.xlu0 %1852
    %v1854 = vsel %vm636, %v1838, 0.0
    %1855 = vadd.xlane.f32.xlu0 %v1854
    %v1856 = vpop.xlane.xlu0 %1855
    %v1857 = vsel %vm636, %v1840, 0.0
    %1858 = vadd.xlane.f32.xlu0 %v1857
    %v1859 = vpop.xlane.xlu0 %1858
    %v1860 = vsel %vm636, %v1842, 0.0
    %1861 = vadd.xlane.f32.xlu0 %v1860
    %v1862 = vpop.xlane.xlu0 %1861
    %v1863 = vsel %vm636, %v1844, 0.0
    %1864 = vadd.xlane.f32.xlu0 %v1863
    %v1865 = vpop.xlane.xlu0 %1864
    %v1866 = vsel %vm636, %v1846, 0.0
    %1867 = vadd.xlane.f32.xlu0 %v1866
    %v1868 = vpop.xlane.xlu0 %1867
    %v1869 = vsel %vm636, %v1848, 0.0
    %1870 = vadd.xlane.f32.xlu0 %v1869
    %v1871 = vpop.xlane.xlu0 %1870
    %v1872 = vsel %vm636, %v1850, 0.0
    %1873 = vadd.xlane.f32.xlu0 %v1872
    %v1874 = vpop.xlane.xlu0 %1873
    %v1875 = vrcp.pop %v1853
    %v1876 = vrcp.pop %v1856
    %v1877 = vrcp.pop %v1859
    %v1878 = vrcp.pop %v1862
    %v1879 = vrcp.pop %v1865
    %v1880 = vrcp.pop %v1868
    %v1881 = vrcp.pop %v1871
    %v1882 = vrcp.pop %v1874
    %v1883 = vmul.f32 %v1836, %v1875
    %v1884 = vmul.f32 %v1838, %v1876
    %v1885 = vmul.f32 %v1840, %v1877
    %v1886 = vmul.f32 %v1842, %v1878
    %v1887 = vmul.f32 %v1844, %v1879
    %v1888 = vmul.f32 %v1846, %v1880
    %v1889 = vmul.f32 %v1848, %v1881
    %v1890 = vmul.f32 %v1850, %v1882
    %1891 = vrot.lane.b32.xlu0 %v1417, 96
    %v1892 = vpop.permute.xlu0 %1891
    %1893 = vrot.lane.b32.xlu0 %v1422, 96
    %v1894 = vpop.permute.xlu0 %1893
    %v1898 = vsel %vm636, %v1883, 0
    %v1901 = vsel %vm636, %v1884, 0
    %1903 = vmatprep.subr.mxu0 0.0
    %1904 = vmatpush1.msra.mxu0 0.0
    %1905 = vmatprep.subr.mxu0 0.0
    %1906 = vmatpush1.msra.mxu0 0.0
    %1907 = vmatprep.subr.mxu0 0.0
    %1908 = vmatpush1.msra.mxu0 0.0
    %1909 = vmatprep.subr.mxu0 0.0
    %1910 = vmatpush1.msra.mxu0 0.0
    %1911 = vmatprep.subr.mxu0 0.0
    %1912 = vmatpush1.msra.mxu0 0.0
    %1913 = vmatprep.subr.mxu0 0.0
    %1914 = vmatpush1.msra.mxu0 0.0
    %1915 = vmatprep.subr.mxu0 0.0
    %1916 = vmatpush1.msra.mxu0 0.0
    %1917 = vmatprep.subr.mxu0 0.0
    %1918 = vmatpush1.msra.mxu0 0.0
    %1919 = vmatprep.subr.mxu0 0.0
    %1920 = vmatpush1.msra.mxu0 0.0
    %1921 = vmatprep.subr.mxu0 0.0
    %1922 = vmatpush1.msra.mxu0 0.0
    %1923 = vmatprep.subr.mxu0 0.0
    %1924 = vmatpush1.msra.mxu0 0.0
    %1925 = vmatprep.subr.mxu0 0.0
    %1926 = vmatpush1.msra.mxu0 0.0
    %1927 = vmatprep.subr.mxu0 0.0
    %1928 = vmatpush1.msra.mxu0 0.0
    %1929 = vmatprep.subr.mxu0 0.0
    %1930 = vmatpush1.msra.mxu0 0.0
    %1931 = vmatprep.subr.mxu0 0.0
    %1932 = vmatpush1.msra.mxu0 %v1894
    %1933 = vmatprep.subr.mxu0 0.0
    %1934 = vmatpush1.msra.mxu0 %v1892
    %1935 = vmatprep.subr.mxu0 0.0
    %1936 = vmatpush2.msra.mxu0 0.0
    %1937 = vmatprep.subr.mxu0 0.0
    %1938 = vmatpush2.msra.mxu0 0.0
    %1939 = vmatprep.subr.mxu0 0.0
    %1940 = vmatpush2.msra.mxu0 0.0
    %1941 = vmatprep.subr.mxu0 0.0
    %1942 = vmatpush2.msra.mxu0 0.0
    %1943 = vmatprep.subr.mxu0 0.0
    %1944 = vmatpush2.msra.mxu0 0.0
    %1945 = vmatprep.subr.mxu0 0.0
    %1946 = vmatpush2.msra.mxu0 0.0
    %1947 = vmatprep.subr.mxu0 0.0
    %1948 = vmatpush2.msra.mxu0 0.0
    %1949 = vmatprep.subr.mxu0 0.0
    %1950 = vmatpush2.msra.mxu0 0.0
    %1951 = vmatprep.subr.mxu0 0.0
    %1952 = vmatpush2.msra.mxu0 0.0
    %1953 = vmatprep.subr.mxu0 0.0
    %1954 = vmatpush2.msra.mxu0 0.0
    %1955 = vmatprep.subr.mxu0 0.0
    %1956 = vmatpush2.msra.mxu0 0.0
    %1957 = vmatprep.subr.mxu0 0.0
    %1958 = vmatpush2.msra.mxu0 0.0
    %1959 = vmatprep.subr.mxu0 0.0
    %1960 = vmatpush2.msra.mxu0 0.0
    %1961 = vmatprep.subr.mxu0 0.0
    %1962 = vmatpush2.msra.mxu0 0.0
    %1963 = vmatprep.subr.mxu0 0.0
    %1964 = vmatpush2.msra.mxu0 0.0
    %1965 = vmatprep.subr.mxu0 0.0
    %1966 = vmatpush2.msra.mxu0 0.0
    %1967 = vmatprep.mubr.f32.mxu0 0.0
    %1968 = vmatmul.mubr.f32.gmra.mxu0 %v1898
    %v1969 = vpop.f32.mrf.mxu0
    %v1970 = vadd.f32 0.0, %v1969
    %v1971 = vpop.f32.mrf.mxu0
    %1972 = vmatprep.mubr.f32.mxu0 0.0
    %1973 = vmatmul.mubr.f32.gmra.mxu0 %v1901
    %v1974 = vpop.f32.mrf.mxu0
    %v1975 = vadd.f32 0.0, %v1974
    %v1976 = vpop.f32.mrf.mxu0
    %1977 = vdwg.mxu0
    %1978 = vrot.lane.b32.xlu0 %v1444, 96
    %v1979 = vpop.permute.xlu0 %1978
    %1980 = vrot.lane.b32.xlu0 %v1446, 96
    %v1981 = vpop.permute.xlu0 %1980
    %v1985 = vsel %vm636, %v1885, 0
    %v1988 = vsel %vm636, %v1886, 0
    %1990 = vmatprep.subr.mxu0 0.0
    %1991 = vmatpush1.msra.mxu0 0.0
    %1992 = vmatprep.subr.mxu0 0.0
    %1993 = vmatpush1.msra.mxu0 0.0
    %1994 = vmatprep.subr.mxu0 0.0
    %1995 = vmatpush1.msra.mxu0 0.0
    %1996 = vmatprep.subr.mxu0 0.0
    %1997 = vmatpush1.msra.mxu0 0.0
    %1998 = vmatprep.subr.mxu0 0.0
    %1999 = vmatpush1.msra.mxu0 0.0
    %2000 = vmatprep.subr.mxu0 0.0
    %2001 = vmatpush1.msra.mxu0 0.0
    %2002 = vmatprep.subr.mxu0 0.0
    %2003 = vmatpush1.msra.mxu0 0.0
    %2004 = vmatprep.subr.mxu0 0.0
    %2005 = vmatpush1.msra.mxu0 0.0
    %2006 = vmatprep.subr.mxu0 0.0
    %2007 = vmatpush1.msra.mxu0 0.0
    %2008 = vmatprep.subr.mxu0 0.0
    %2009 = vmatpush1.msra.mxu0 0.0
    %2010 = vmatprep.subr.mxu0 0.0
    %2011 = vmatpush1.msra.mxu0 0.0
    %2012 = vmatprep.subr.mxu0 0.0
    %2013 = vmatpush1.msra.mxu0 0.0
    %2014 = vmatprep.subr.mxu0 0.0
    %2015 = vmatpush1.msra.mxu0 0.0
    %2016 = vmatprep.subr.mxu0 0.0
    %2017 = vmatpush1.msra.mxu0 0.0
    %2018 = vmatprep.subr.mxu0 0.0
    %2019 = vmatpush1.msra.mxu0 %v1981
    %2020 = vmatprep.subr.mxu0 0.0
    %2021 = vmatpush1.msra.mxu0 %v1979
    %2022 = vmatprep.subr.mxu0 0.0
    %2023 = vmatpush2.msra.mxu0 0.0
    %2024 = vmatprep.subr.mxu0 0.0
    %2025 = vmatpush2.msra.mxu0 0.0
    %2026 = vmatprep.subr.mxu0 0.0
    %2027 = vmatpush2.msra.mxu0 0.0
    %2028 = vmatprep.subr.mxu0 0.0
    %2029 = vmatpush2.msra.mxu0 0.0
    %2030 = vmatprep.subr.mxu0 0.0
    %2031 = vmatpush2.msra.mxu0 0.0
    %2032 = vmatprep.subr.mxu0 0.0
    %2033 = vmatpush2.msra.mxu0 0.0
    %2034 = vmatprep.subr.mxu0 0.0
    %2035 = vmatpush2.msra.mxu0 0.0
    %2036 = vmatprep.subr.mxu0 0.0
    %2037 = vmatpush2.msra.mxu0 0.0
    %2038 = vmatprep.subr.mxu0 0.0
    %2039 = vmatpush2.msra.mxu0 0.0
    %2040 = vmatprep.subr.mxu0 0.0
    %2041 = vmatpush2.msra.mxu0 0.0
    %2042 = vmatprep.subr.mxu0 0.0
    %2043 = vmatpush2.msra.mxu0 0.0
    %2044 = vmatprep.subr.mxu0 0.0
    %2045 = vmatpush2.msra.mxu0 0.0
    %2046 = vmatprep.subr.mxu0 0.0
    %2047 = vmatpush2.msra.mxu0 0.0
    %2048 = vmatprep.subr.mxu0 0.0
    %2049 = vmatpush2.msra.mxu0 0.0
    %2050 = vmatprep.subr.mxu0 0.0
    %2051 = vmatpush2.msra.mxu0 0.0
    %2052 = vmatprep.subr.mxu0 0.0
    %2053 = vmatpush2.msra.mxu0 0.0
    %2054 = vmatprep.mubr.f32.mxu0 0.0
    %2055 = vmatmul.mubr.f32.gmra.mxu0 %v1985
    %v2056 = vpop.f32.mrf.mxu0
    %v2057 = vadd.f32 0.0, %v2056
    %v2058 = vpop.f32.mrf.mxu0
    %2059 = vmatprep.mubr.f32.mxu0 0.0
    %2060 = vmatmul.mubr.f32.gmra.mxu0 %v1988
    %v2061 = vpop.f32.mrf.mxu0
    %v2062 = vadd.f32 0.0, %v2061
    %v2063 = vpop.f32.mrf.mxu0
    %2064 = vdwg.mxu0
    %2065 = vrot.lane.b32.xlu0 %v1448, 96
    %v2066 = vpop.permute.xlu0 %2065
    %2067 = vrot.lane.b32.xlu0 %v1450, 96
    %v2068 = vpop.permute.xlu0 %2067
    %v2072 = vsel %vm636, %v1887, 0
    %v2075 = vsel %vm636, %v1888, 0
    %2077 = vmatprep.subr.mxu0 0.0
    %2078 = vmatpush1.msra.mxu0 0.0
    %2079 = vmatprep.subr.mxu0 0.0
    %2080 = vmatpush1.msra.mxu0 0.0
    %2081 = vmatprep.subr.mxu0 0.0
    %2082 = vmatpush1.msra.mxu0 0.0
    %2083 = vmatprep.subr.mxu0 0.0
    %2084 = vmatpush1.msra.mxu0 0.0
    %2085 = vmatprep.subr.mxu0 0.0
    %2086 = vmatpush1.msra.mxu0 0.0
    %2087 = vmatprep.subr.mxu0 0.0
    %2088 = vmatpush1.msra.mxu0 0.0
    %2089 = vmatprep.subr.mxu0 0.0
    %2090 = vmatpush1.msra.mxu0 0.0
    %2091 = vmatprep.subr.mxu0 0.0
    %2092 = vmatpush1.msra.mxu0 0.0
    %2093 = vmatprep.subr.mxu0 0.0
    %2094 = vmatpush1.msra.mxu0 0.0
    %2095 = vmatprep.subr.mxu0 0.0
    %2096 = vmatpush1.msra.mxu0 0.0
    %2097 = vmatprep.subr.mxu0 0.0
    %2098 = vmatpush1.msra.mxu0 0.0
    %2099 = vmatprep.subr.mxu0 0.0
    %2100 = vmatpush1.msra.mxu0 0.0
    %2101 = vmatprep.subr.mxu0 0.0
    %2102 = vmatpush1.msra.mxu0 0.0
    %2103 = vmatprep.subr.mxu0 0.0
    %2104 = vmatpush1.msra.mxu0 0.0
    %2105 = vmatprep.subr.mxu0 0.0
    %2106 = vmatpush1.msra.mxu0 %v2068
    %2107 = vmatprep.subr.mxu0 0.0
    %2108 = vmatpush1.msra.mxu0 %v2066
    %2109 = vmatprep.subr.mxu0 0.0
    %2110 = vmatpush2.msra.mxu0 0.0
    %2111 = vmatprep.subr.mxu0 0.0
    %2112 = vmatpush2.msra.mxu0 0.0
    %2113 = vmatprep.subr.mxu0 0.0
    %2114 = vmatpush2.msra.mxu0 0.0
    %2115 = vmatprep.subr.mxu0 0.0
    %2116 = vmatpush2.msra.mxu0 0.0
    %2117 = vmatprep.subr.mxu0 0.0
    %2118 = vmatpush2.msra.mxu0 0.0
    %2119 = vmatprep.subr.mxu0 0.0
    %2120 = vmatpush2.msra.mxu0 0.0
    %2121 = vmatprep.subr.mxu0 0.0
    %2122 = vmatpush2.msra.mxu0 0.0
    %2123 = vmatprep.subr.mxu0 0.0
    %2124 = vmatpush2.msra.mxu0 0.0
    %2125 = vmatprep.subr.mxu0 0.0
    %2126 = vmatpush2.msra.mxu0 0.0
    %2127 = vmatprep.subr.mxu0 0.0
    %2128 = vmatpush2.msra.mxu0 0.0
    %2129 = vmatprep.subr.mxu0 0.0
    %2130 = vmatpush2.msra.mxu0 0.0
    %2131 = vmatprep.subr.mxu0 0.0
    %2132 = vmatpush2.msra.mxu0 0.0
    %2133 = vmatprep.subr.mxu0 0.0
    %2134 = vmatpush2.msra.mxu0 0.0
    %2135 = vmatprep.subr.mxu0 0.0
    %2136 = vmatpush2.msra.mxu0 0.0
    %2137 = vmatprep.subr.mxu0 0.0
    %2138 = vmatpush2.msra.mxu0 0.0
    %2139 = vmatprep.subr.mxu0 0.0
    %2140 = vmatpush2.msra.mxu0 0.0
    %2141 = vmatprep.mubr.f32.mxu0 0.0
    %2142 = vmatmul.mubr.f32.gmra.mxu0 %v2072
    %v2143 = vpop.f32.mrf.mxu0
    %v2144 = vadd.f32 0.0, %v2143
    %v2145 = vpop.f32.mrf.mxu0
    %2146 = vmatprep.mubr.f32.mxu0 0.0
    %2147 = vmatmul.mubr.f32.gmra.mxu0 %v2075
    %v2148 = vpop.f32.mrf.mxu0
    %v2149 = vadd.f32 0.0, %v2148
    %v2150 = vpop.f32.mrf.mxu0
    %2151 = vdwg.mxu0
    %2152 = vrot.lane.b32.xlu0 %v1452, 96
    %v2153 = vpop.permute.xlu0 %2152
    %2154 = vrot.lane.b32.xlu0 %v1454, 96
    %v2155 = vpop.permute.xlu0 %2154
    %v2159 = vsel %vm636, %v1889, 0
    %v2162 = vsel %vm636, %v1890, 0
    %2164 = vmatprep.subr.mxu0 0.0
    %2165 = vmatpush1.msra.mxu0 0.0
    %2166 = vmatprep.subr.mxu0 0.0
    %2167 = vmatpush1.msra.mxu0 0.0
    %2168 = vmatprep.subr.mxu0 0.0
    %2169 = vmatpush1.msra.mxu0 0.0
    %2170 = vmatprep.subr.mxu0 0.0
    %2171 = vmatpush1.msra.mxu0 0.0
    %2172 = vmatprep.subr.mxu0 0.0
    %2173 = vmatpush1.msra.mxu0 0.0
    %2174 = vmatprep.subr.mxu0 0.0
    %2175 = vmatpush1.msra.mxu0 0.0
    %2176 = vmatprep.subr.mxu0 0.0
    %2177 = vmatpush1.msra.mxu0 0.0
    %2178 = vmatprep.subr.mxu0 0.0
    %2179 = vmatpush1.msra.mxu0 0.0
    %2180 = vmatprep.subr.mxu0 0.0
    %2181 = vmatpush1.msra.mxu0 0.0
    %2182 = vmatprep.subr.mxu0 0.0
    %2183 = vmatpush1.msra.mxu0 0.0
    %2184 = vmatprep.subr.mxu0 0.0
    %2185 = vmatpush1.msra.mxu0 0.0
    %2186 = vmatprep.subr.mxu0 0.0
    %2187 = vmatpush1.msra.mxu0 0.0
    %2188 = vmatprep.subr.mxu0 0.0
    %2189 = vmatpush1.msra.mxu0 0.0
    %2190 = vmatprep.subr.mxu0 0.0
    %2191 = vmatpush1.msra.mxu0 0.0
    %2192 = vmatprep.subr.mxu0 0.0
    %2193 = vmatpush1.msra.mxu0 %v2155
    %2194 = vmatprep.subr.mxu0 0.0
    %2195 = vmatpush1.msra.mxu0 %v2153
    %2196 = vmatprep.subr.mxu0 0.0
    %2197 = vmatpush2.msra.mxu0 0.0
    %2198 = vmatprep.subr.mxu0 0.0
    %2199 = vmatpush2.msra.mxu0 0.0
    %2200 = vmatprep.subr.mxu0 0.0
    %2201 = vmatpush2.msra.mxu0 0.0
    %2202 = vmatprep.subr.mxu0 0.0
    %2203 = vmatpush2.msra.mxu0 0.0
    %2204 = vmatprep.subr.mxu0 0.0
    %2205 = vmatpush2.msra.mxu0 0.0
    %2206 = vmatprep.subr.mxu0 0.0
    %2207 = vmatpush2.msra.mxu0 0.0
    %2208 = vmatprep.subr.mxu0 0.0
    %2209 = vmatpush2.msra.mxu0 0.0
    %2210 = vmatprep.subr.mxu0 0.0
    %2211 = vmatpush2.msra.mxu0 0.0
    %2212 = vmatprep.subr.mxu0 0.0
    %2213 = vmatpush2.msra.mxu0 0.0
    %2214 = vmatprep.subr.mxu0 0.0
    %2215 = vmatpush2.msra.mxu0 0.0
    %2216 = vmatprep.subr.mxu0 0.0
    %2217 = vmatpush2.msra.mxu0 0.0
    %2218 = vmatprep.subr.mxu0 0.0
    %2219 = vmatpush2.msra.mxu0 0.0
    %2220 = vmatprep.subr.mxu0 0.0
    %2221 = vmatpush2.msra.mxu0 0.0
    %2222 = vmatprep.subr.mxu0 0.0
    %2223 = vmatpush2.msra.mxu0 0.0
    %2224 = vmatprep.subr.mxu0 0.0
    %2225 = vmatpush2.msra.mxu0 0.0
    %2226 = vmatprep.subr.mxu0 0.0
    %2227 = vmatpush2.msra.mxu0 0.0
    %2228 = vmatprep.mubr.f32.mxu0 0.0
    %2229 = vmatmul.mubr.f32.gmra.mxu0 %v2159
    %v2230 = vpop.f32.mrf.mxu0
    %v2231 = vadd.f32 0.0, %v2230
    %v2232 = vpop.f32.mrf.mxu0
    %2233 = vmatprep.mubr.f32.mxu0 0.0
    %2234 = vmatmul.mubr.f32.gmra.mxu0 %v2162
    %v2235 = vpop.f32.mrf.mxu0
    %v2236 = vadd.f32 0.0, %v2235
    %v2237 = vpop.f32.mrf.mxu0
    %2238 = vdwg.mxu0
    %2241 = vrot.lane.b32.xlu0 %v2057, 8
    %v2242 = vpop.permute.xlu0 %2241
    %2243 = vrot.lane.b32.xlu0 %v2062, 8
    %v2244 = vpop.permute.xlu0 %2243
    %2249 = vrot.lane.b32.xlu0 %v2144, 16
    %v2250 = vpop.permute.xlu0 %2249
    %2251 = vrot.lane.b32.xlu0 %v2149, 16
    %v2252 = vpop.permute.xlu0 %2251
    %2257 = vrot.lane.b32.xlu0 %v2231, 24
    %v2258 = vpop.permute.xlu0 %2257
    %2259 = vrot.lane.b32.xlu0 %v2236, 24
    %v2260 = vpop.permute.xlu0 %2259
    %v2263 = vsel %vm275, %v1970, %v2242
    %v2264 = vsel %vm275, %v1975, %v2244
    %v2265 = vsel %vm636, %v2263, %v2250
    %v2266 = vsel %vm636, %v2264, %v2252
    %v2267 = vsel %vm1101, %v2265, %v2258
    %v2268 = vsel %vm1101, %v2266, %v2260
    %v2270 = vsel %vm115, %v2267, 0
    %v2273 = vsel %vm115, %v2268, 0
    %2275 = vmatprep.subr.mxu0 0.0
    %2276 = vmatpush1.msra.mxu0 0.0
    %2277 = vmatprep.subr.mxu0 0.0
    %2278 = vmatpush1.msra.mxu0 0.0
    %2279 = vmatprep.subr.mxu0 0.0
    %2280 = vmatpush1.msra.mxu0 0.0
    %2281 = vmatprep.subr.mxu0 0.0
    %2282 = vmatpush1.msra.mxu0 0.0
    %2283 = vmatprep.subr.mxu0 0.0
    %2284 = vmatpush1.msra.mxu0 0.0
    %2285 = vmatprep.subr.mxu0 0.0
    %2286 = vmatpush1.msra.mxu0 0.0
    %2287 = vmatprep.subr.mxu0 0.0
    %2288 = vmatpush1.msra.mxu0 0.0
    %2289 = vmatprep.subr.mxu0 0.0
    %2290 = vmatpush1.msra.mxu0 0.0
    %2291 = vmatprep.subr.mxu0 0.0
    %2292 = vmatpush1.msra.mxu0 0.0
    %2293 = vmatprep.subr.mxu0 0.0
    %2294 = vmatpush1.msra.mxu0 0.0
    %2295 = vmatprep.subr.mxu0 0.0
    %2296 = vmatpush1.msra.mxu0 0.0
    %2297 = vmatprep.subr.mxu0 0.0
    %2298 = vmatpush1.msra.mxu0 0.0
    %2299 = vmatprep.subr.mxu0 0.0
    %2300 = vmatpush1.msra.mxu0 %v103
    %2301 = vmatprep.subr.mxu0 0.0
    %2302 = vmatpush1.msra.mxu0 %v102
    %2303 = vmatprep.subr.mxu0 0.0
    %2304 = vmatpush1.msra.mxu0 %v101
    %2305 = vmatprep.subr.mxu0 0.0
    %2306 = vmatpush1.msra.mxu0 %v100
    %2307 = vmatprep.subr.mxu0 0.0
    %2308 = vmatpush2.msra.mxu0 0.0
    %2309 = vmatprep.subr.mxu0 0.0
    %2310 = vmatpush2.msra.mxu0 0.0
    %2311 = vmatprep.subr.mxu0 0.0
    %2312 = vmatpush2.msra.mxu0 0.0
    %2313 = vmatprep.subr.mxu0 0.0
    %2314 = vmatpush2.msra.mxu0 0.0
    %2315 = vmatprep.subr.mxu0 0.0
    %2316 = vmatpush2.msra.mxu0 0.0
    %2317 = vmatprep.subr.mxu0 0.0
    %2318 = vmatpush2.msra.mxu0 0.0
    %2319 = vmatprep.subr.mxu0 0.0
    %2320 = vmatpush2.msra.mxu0 0.0
    %2321 = vmatprep.subr.mxu0 0.0
    %2322 = vmatpush2.msra.mxu0 0.0
    %2323 = vmatprep.subr.mxu0 0.0
    %2324 = vmatpush2.msra.mxu0 0.0
    %2325 = vmatprep.subr.mxu0 0.0
    %2326 = vmatpush2.msra.mxu0 0.0
    %2327 = vmatprep.subr.mxu0 0.0
    %2328 = vmatpush2.msra.mxu0 0.0
    %2329 = vmatprep.subr.mxu0 0.0
    %2330 = vmatpush2.msra.mxu0 0.0
    %2331 = vmatprep.subr.mxu0 0.0
    %2332 = vmatpush2.msra.mxu0 0.0
    %2333 = vmatprep.subr.mxu0 0.0
    %2334 = vmatpush2.msra.mxu0 0.0
    %2335 = vmatprep.subr.mxu0 0.0
    %2336 = vmatpush2.msra.mxu0 0.0
    %2337 = vmatprep.subr.mxu0 0.0
    %2338 = vmatpush2.msra.mxu0 0.0
    %2339 = vmatprep.mubr.f32.mxu0 0.0
    %2340 = vmatmul.mubr.f32.gmra.mxu0 %v2270
    %v2341 = vpop.f32.mrf.mxu0
    %v2342 = vadd.f32 0.0, %v2341
    %v2343 = vpop.f32.mrf.mxu0
    %2344 = vmatprep.mubr.f32.mxu0 0.0
    %2345 = vmatmul.mubr.f32.gmra.mxu0 %v2273
    %v2346 = vpop.f32.mrf.mxu0
    %v2347 = vadd.f32 0.0, %v2346
    %v2348 = vpop.f32.mrf.mxu0
    %2349 = vdwg.mxu0
    %v2350 = vadd.f32 %v1191, %v2342
    %v2351 = vadd.f32 %v1192, %v2347
    %v2352 = vlaneseq
    %v2353 = vshrl.u32 %v2352, 7
    %v2354 = vsub.s32 1, %v2353
    %v2355 = vrot.slane %v112, %v2354
    %v2356 = vadd.f32 %v2350, %v2355
    %v2357 = vadd.f32 %v2351, %v2355
    %s2358 = sld [smem:[#allocation8 + $0x4]]
    %s2359 = sld [smem:[#allocation8 + $0x5]]
    %v2360 = vsel %vm115, %v2356, 0.0
    %2361 = vadd.xlane.f32.xlu0 %v2360
    %v2362 = vpop.xlane.xlu0 %2361
    %v2363 = vsel %vm115, %v2357, 0.0
    %2364 = vadd.xlane.f32.xlu0 %v2363
    %v2365 = vpop.xlane.xlu0 %2364
    %v2366 = vmul.f32 %v2362, %v122
    %v2367 = vmul.f32 %v2365, %v122
    %v2368 = vsub.f32 %v2356, %v2366
    %v2369 = vsub.f32 %v2357, %v2367
    %v2370 = vmul.f32 %v2368, %v2368
    %v2371 = vmul.f32 %v2369, %v2369
    %v2372 = vsel %vm115, %v2370, 0.0
    %2373 = vadd.xlane.f32.xlu0 %v2372
    %v2374 = vpop.xlane.xlu0 %2373
    %v2375 = vsel %vm115, %v2371, 0.0
    %2376 = vadd.xlane.f32.xlu0 %v2375
    %v2377 = vpop.xlane.xlu0 %2376
    %v2378 = vmul.f32 %v2374, 0.032258064
    %v2379 = vmul.f32 %v2377, 0.032258064
    %v2380 = vrsqrt.pop %v2378
    %v2381 = vmul.f32 %v2378, %v2380
    %vm2382 = vcmp.eq.f32.partialorder %v2378, inf
    %v2383 = vsel %vm2382, %v2378, %v2381
    %vm2384 = vcmp.eq.f32.partialorder %v2378, 0.0
    %v2385 = vand.u32 %v2378, 2147483648
    %v2386 = vsel %vm2384, %v2385, %v2383
    %v2387 = vrsqrt.pop %v2379
    %v2388 = vmul.f32 %v2379, %v2387
    %vm2389 = vcmp.eq.f32.partialorder %v2379, inf
    %v2390 = vsel %vm2389, %v2379, %v2388
    %vm2391 = vcmp.eq.f32.partialorder %v2379, 0.0
    %v2392 = vand.u32 %v2379, 2147483648
    %v2393 = vsel %vm2391, %v2392, %v2390
    %v2394 = vadd.f32 %v2386, 1e-06
    %v2395 = vadd.f32 %v2393, 1e-06
    %v2396 = vrcp.pop %v2394
    %v2397 = vrcp.pop %v2395
    %v2398 = vstv %s2358
    %v2399 = vmul.f32 %v2398, %v2368
    %v2400 = vmul.f32 %v2398, %v2369
    %v2401 = vmul.f32 %v2399, %v2396
    %v2402 = vmul.f32 %v2400, %v2397
    %v2403 = vstv %s2359
    %v2404 = vadd.f32 %v2401, %v2403
    %v2405 = vadd.f32 %v2402, %v2403
    %v2406 = vld [vmem:[%s12] sm:$0xff]
    %v2407 = vld [vmem:[%s12 + $0x8] sm:$0xff]
    %v2408 = vld [vmem:[%s12 + $0x10] sm:$0xff]
    %v2409 = vld [vmem:[%s12 + $0x18] sm:$0xff]
    %v2410 = vld [vmem:[%s13] sm:$0x1]
    %v2412 = vlaneseq
    %v2413 = vshrl.u32 %v2412, 7
    %v2414 = vsub.s32 0, %v2413
    %v2415 = vrot.slane %v2410, %v2414
    %v2418 = vsel %vm115, %v2404, 0
    %v2421 = vsel %vm115, %v2405, 0
    %2423 = vmatprep.subr.mxu0 0.0
    %2424 = vmatpush1.msra.mxu0 0.0
    %2425 = vmatprep.subr.mxu0 0.0
    %2426 = vmatpush1.msra.mxu0 0.0
    %2427 = vmatprep.subr.mxu0 0.0
    %2428 = vmatpush1.msra.mxu0 0.0
    %2429 = vmatprep.subr.mxu0 0.0
    %2430 = vmatpush1.msra.mxu0 0.0
    %2431 = vmatprep.subr.mxu0 0.0
    %2432 = vmatpush1.msra.mxu0 0.0
    %2433 = vmatprep.subr.mxu0 0.0
    %2434 = vmatpush1.msra.mxu0 0.0
    %2435 = vmatprep.subr.mxu0 0.0
    %2436 = vmatpush1.msra.mxu0 0.0
    %2437 = vmatprep.subr.mxu0 0.0
    %2438 = vmatpush1.msra.mxu0 0.0
    %2439 = vmatprep.subr.mxu0 0.0
    %2440 = vmatpush1.msra.mxu0 0.0
    %2441 = vmatprep.subr.mxu0 0.0
    %2442 = vmatpush1.msra.mxu0 0.0
    %2443 = vmatprep.subr.mxu0 0.0
    %2444 = vmatpush1.msra.mxu0 0.0
    %2445 = vmatprep.subr.mxu0 0.0
    %2446 = vmatpush1.msra.mxu0 0.0
    %2447 = vmatprep.subr.mxu0 0.0
    %2448 = vmatpush1.msra.mxu0 %v2409
    %2449 = vmatprep.subr.mxu0 0.0
    %2450 = vmatpush1.msra.mxu0 %v2408
    %2451 = vmatprep.subr.mxu0 0.0
    %2452 = vmatpush1.msra.mxu0 %v2407
    %2453 = vmatprep.subr.mxu0 0.0
    %2454 = vmatpush1.msra.mxu0 %v2406
    %2455 = vmatprep.subr.mxu0 0.0
    %2456 = vmatpush2.msra.mxu0 0.0
    %2457 = vmatprep.subr.mxu0 0.0
    %2458 = vmatpush2.msra.mxu0 0.0
    %2459 = vmatprep.subr.mxu0 0.0
    %2460 = vmatpush2.msra.mxu0 0.0
    %2461 = vmatprep.subr.mxu0 0.0
    %2462 = vmatpush2.msra.mxu0 0.0
    %2463 = vmatprep.subr.mxu0 0.0
    %2464 = vmatpush2.msra.mxu0 0.0
    %2465 = vmatprep.subr.mxu0 0.0
    %2466 = vmatpush2.msra.mxu0 0.0
    %2467 = vmatprep.subr.mxu0 0.0
    %2468 = vmatpush2.msra.mxu0 0.0
    %2469 = vmatprep.subr.mxu0 0.0
    %2470 = vmatpush2.msra.mxu0 0.0
    %2471 = vmatprep.subr.mxu0 0.0
    %2472 = vmatpush2.msra.mxu0 0.0
    %2473 = vmatprep.subr.mxu0 0.0
    %2474 = vmatpush2.msra.mxu0 0.0
    %2475 = vmatprep.subr.mxu0 0.0
    %2476 = vmatpush2.msra.mxu0 0.0
    %2477 = vmatprep.subr.mxu0 0.0
    %2478 = vmatpush2.msra.mxu0 0.0
    %2479 = vmatprep.subr.mxu0 0.0
    %2480 = vmatpush2.msra.mxu0 0.0
    %2481 = vmatprep.subr.mxu0 0.0
    %2482 = vmatpush2.msra.mxu0 0.0
    %2483 = vmatprep.subr.mxu0 0.0
    %2484 = vmatpush2.msra.mxu0 0.0
    %2485 = vmatprep.subr.mxu0 0.0
    %2486 = vmatpush2.msra.mxu0 0.0
    %2487 = vmatprep.mubr.f32.mxu0 0.0
    %2488 = vmatmul.mubr.f32.gmra.mxu0 %v2418
    %v2489 = vpop.f32.mrf.mxu0
    %v2490 = vadd.f32 %v2415, %v2489
    %v2491 = vpop.f32.mrf.mxu0
    %2492 = vmatprep.mubr.f32.mxu0 0.0
    %2493 = vmatmul.mubr.f32.gmra.mxu0 %v2421
    %v2494 = vpop.f32.mrf.mxu0
    %v2495 = vadd.f32 %v2415, %v2494
    %v2496 = vpop.f32.mrf.mxu0
    %2497 = vdwg.mxu0
    %v2498 = vmax.f32 %v2490, 0.0
    %v2499 = vmax.f32 %v2495, 0.0
    %v2500 = vlaneseq
    %v2501 = vshrl.u32 %v2500, 7
    %v2502 = vsub.s32 2, %v2501
    %v2503 = vrot.slane %v112, %v2502
    %vm2504 = vcmask 523264
    %v2506 = vsel %vm2504, %v2498, 0
    %v2509 = vsel %vm2504, %v2499, 0
    %2511 = vmatprep.subr.mxu0 0.0
    %2512 = vmatpush1.msra.mxu0 0.0
    %2513 = vmatprep.subr.mxu0 0.0
    %2514 = vmatpush1.msra.mxu0 0.0
    %2515 = vmatprep.subr.mxu0 0.0
    %2516 = vmatpush1.msra.mxu0 0.0
    %2517 = vmatprep.subr.mxu0 0.0
    %2518 = vmatpush1.msra.mxu0 0.0
    %2519 = vmatprep.subr.mxu0 0.0
    %2520 = vmatpush1.msra.mxu0 0.0
    %2521 = vmatprep.subr.mxu0 0.0
    %2522 = vmatpush1.msra.mxu0 0.0
    %2523 = vmatprep.subr.mxu0 0.0
    %2524 = vmatpush1.msra.mxu0 0.0
    %2525 = vmatprep.subr.mxu0 0.0
    %2526 = vmatpush1.msra.mxu0 0.0
    %2527 = vmatprep.subr.mxu0 0.0
    %2528 = vmatpush1.msra.mxu0 %v111
    %2529 = vmatprep.subr.mxu0 0.0
    %2530 = vmatpush1.msra.mxu0 %v110
    %2531 = vmatprep.subr.mxu0 0.0
    %2532 = vmatpush1.msra.mxu0 %v109
    %2533 = vmatprep.subr.mxu0 0.0
    %2534 = vmatpush1.msra.mxu0 %v108
    %2535 = vmatprep.subr.mxu0 0.0
    %2536 = vmatpush1.msra.mxu0 %v107
    %2537 = vmatprep.subr.mxu0 0.0
    %2538 = vmatpush1.msra.mxu0 %v106
    %2539 = vmatprep.subr.mxu0 0.0
    %2540 = vmatpush1.msra.mxu0 %v105
    %2541 = vmatprep.subr.mxu0 0.0
    %2542 = vmatpush1.msra.mxu0 %v104
    %2543 = vmatprep.subr.mxu0 0.0
    %2544 = vmatpush2.msra.mxu0 0.0
    %2545 = vmatprep.subr.mxu0 0.0
    %2546 = vmatpush2.msra.mxu0 0.0
    %2547 = vmatprep.subr.mxu0 0.0
    %2548 = vmatpush2.msra.mxu0 0.0
    %2549 = vmatprep.subr.mxu0 0.0
    %2550 = vmatpush2.msra.mxu0 0.0
    %2551 = vmatprep.subr.mxu0 0.0
    %2552 = vmatpush2.msra.mxu0 0.0
    %2553 = vmatprep.subr.mxu0 0.0
    %2554 = vmatpush2.msra.mxu0 0.0
    %2555 = vmatprep.subr.mxu0 0.0
    %2556 = vmatpush2.msra.mxu0 0.0
    %2557 = vmatprep.subr.mxu0 0.0
    %2558 = vmatpush2.msra.mxu0 0.0
    %2559 = vmatprep.subr.mxu0 0.0
    %2560 = vmatpush2.msra.mxu0 0.0
    %2561 = vmatprep.subr.mxu0 0.0
    %2562 = vmatpush2.msra.mxu0 0.0
    %2563 = vmatprep.subr.mxu0 0.0
    %2564 = vmatpush2.msra.mxu0 0.0
    %2565 = vmatprep.subr.mxu0 0.0
    %2566 = vmatpush2.msra.mxu0 0.0
    %2567 = vmatprep.subr.mxu0 0.0
    %2568 = vmatpush2.msra.mxu0 0.0
    %2569 = vmatprep.subr.mxu0 0.0
    %2570 = vmatpush2.msra.mxu0 0.0
    %2571 = vmatprep.subr.mxu0 0.0
    %2572 = vmatpush2.msra.mxu0 0.0
    %2573 = vmatprep.subr.mxu0 0.0
    %2574 = vmatpush2.msra.mxu0 0.0
    %2575 = vmatprep.mubr.f32.mxu0 0.0
    %2576 = vmatmul.mubr.f32.gmra.mxu0 %v2506
    %v2577 = vpop.f32.mrf.mxu0
    %v2578 = vadd.f32 %v2503, %v2577
    %v2579 = vpop.f32.mrf.mxu0
    %2580 = vmatprep.mubr.f32.mxu0 0.0
    %2581 = vmatmul.mubr.f32.gmra.mxu0 %v2509
    %v2582 = vpop.f32.mrf.mxu0
    %v2583 = vadd.f32 %v2503, %v2582
    %v2584 = vpop.f32.mrf.mxu0
    %2585 = vdwg.mxu0
    %v2586 = vadd.f32 %v2356, %v2578
    %v2587 = vadd.f32 %v2357, %v2583
    %2588 = vst.msk [vmem:[#allocation9] sm:$0xff] %vm115, %v2586
    %2589 = vst.msk [vmem:[#allocation9 + $0x8] sm:$0xff] %vm115, %v2587
    // Predicated region
    $region74: #{tpu_custom_call.1} parent=1 // pred_check
      _
    $region75: #{tpu_custom_call.1} parent=1 // pred_check_branch
      %2591 = sbr.rel (0) target = $region77
    $region76: #{tpu_custom_call.1} parent=1 // pred_region
      %s2593 = ssub.s32 256, 256
      %2594 = vsyncadd [#allocation4], %s2593
      %s2595 = sshll.u32 [#allocation9], 4
      %s2596 = int_to_ptr.vmem [resolvable:$true] %s2595
      %2601 = dma.vmem_to_hbm [thread:$0]  %s2596, 256, %s15, [#allocation4], 128, 128, 8
    $region77: #{tpu_custom_call.1} parent=1 // pred_fallthru
      _
    // Predicated region
    $region78: #{tpu_custom_call.1} parent=1 // pred_check
      _
    $region79: #{tpu_custom_call.1} parent=1 // pred_check_branch
      %2603 = sbr.rel (0) target = $region81
    $region80: #{tpu_custom_call.1} parent=1 // pred_region
      %2604 = dma.done [#allocation4], 256
    $region81: #{tpu_custom_call.1} parent=1 // pred_fallthru
      _
    %2605 = vsyncpa [#allocation3], 1
    %2606 = vsyncpa [#allocation7], 1
    %2607 = vsyncpa [#allocation4], 1
    %2608 = vsyncpa [#allocation5], 1

</llo_original>
